<compile_context>
chip_gen: v6e
topology: v6e:2x2x1
jax: 0.10.0
libtpu: 0.0.40
codegen_flags: <defaults>
</compile_context>

<pallas_src>
import math

import numpy as np
import jax
import jax.numpy as jnp
from jax.experimental import pallas as pl
from jax.experimental.pallas import tpu as pltpu


# ---------------------------------------------------------------------------
# Fused Pallas kernel: one grid step = BS batch samples.
# Activation layout inside the kernel: 2-D (rows = image height,
# lanes = width*channels with column index w*C + c).
# ---------------------------------------------------------------------------

def _lenetq_kernel(x_ref, a1_ref, b1_ref, pr1_ref, pc1_ref,
                   a2_ref, b2_ref, pr2_ref, pc2_ref,
                   w1_ref, fb1_ref, w2_ref, fb2_ref, w3_ref, fb3_ref,
                   out_ref):
    f32 = jnp.float32
    bs = out_ref.shape[0]                              # samples per grid step

    z_rows = []
    for s in range(bs):                                # static unroll
        x = x_ref[s]                                   # (32, 96) cols = w*3 + c

        # -- conv1 (5x5, 3->6) + bias + ReLU -> (28, 168), cols = ow*6 + oc --
        acc = jnp.dot(x[0:28, :], a1_ref[0], preferred_element_type=f32)
        for kh in range(1, 5):
            acc = acc + jnp.dot(x[kh:kh + 28, :], a1_ref[kh],
                                preferred_element_type=f32)
        h = jnp.maximum(acc + b1_ref[...], 0.0)        # (28, 168)

        # -- maxpool 2x2 -> (14, 84) ------------------------------------------
        r = jnp.maximum(jnp.dot(pr1_ref[0], h, preferred_element_type=f32),
                        jnp.dot(pr1_ref[1], h, preferred_element_type=f32))
        h = jnp.maximum(jnp.dot(r, pc1_ref[0], preferred_element_type=f32),
                        jnp.dot(r, pc1_ref[1], preferred_element_type=f32))

        # -- conv2 (5x5, 6->16) + bias + ReLU -> (10, 160), cols = ow*16 + oc -
        acc = jnp.dot(h[0:10, :], a2_ref[0], preferred_element_type=f32)
        for kh in range(1, 5):
            acc = acc + jnp.dot(h[kh:kh + 10, :], a2_ref[kh],
                                preferred_element_type=f32)
        h = jnp.maximum(acc + b2_ref[...], 0.0)        # (10, 160)

        # -- maxpool 2x2 -> (5, 80) --------------------------------------------
        r = jnp.maximum(jnp.dot(pr2_ref[0], h, preferred_element_type=f32),
                        jnp.dot(pr2_ref[1], h, preferred_element_type=f32))
        h = jnp.maximum(jnp.dot(r, pc2_ref[0], preferred_element_type=f32),
                        jnp.dot(r, pc2_ref[1], preferred_element_type=f32))

        # -- fc1 (400->120) + ReLU: contract over the 5 spatial rows ----------
        z = jnp.dot(h[0:1, :], w1_ref[0], preferred_element_type=f32)
        for i in range(1, 5):
            z = z + jnp.dot(h[i:i + 1, :], w1_ref[i],
                            preferred_element_type=f32)
        z_rows.append(jnp.maximum(z + fb1_ref[...], 0.0))   # (1, 120)

    z = jnp.concatenate(z_rows, axis=0) if bs > 1 else z_rows[0]   # (bs, 120)

    # ---- fc2 (120->84) + ReLU, batched over the block's samples ------------
    z = jnp.maximum(jnp.dot(z, w2_ref[...], preferred_element_type=f32)
                    + fb2_ref[...], 0.0)               # (bs, 84)

    # ---- fc3 (84->10), zero-padded to 128 lanes for a lane-dense store -----
    z = jnp.dot(z, w3_ref[...], preferred_element_type=f32) + fb3_ref[...]

    out_ref[...] = z                                   # (bs, 128)


# ---------------------------------------------------------------------------
# Host-side one-time weight re-layout (outside the jitted hot path).
# ---------------------------------------------------------------------------

def _banded_conv_matrix(w_oihw, in_w, out_w):
    """A[kh, w*IC + ic, ow*OC + oc] = W[oc, ic, kh, w-ow] for 0 <= w-ow < K."""
    oc_n, ic_n, kh_n, kw_n = w_oihw.shape
    A = np.zeros((kh_n, in_w * ic_n, out_w * oc_n), np.float32)
    for kh in range(kh_n):
        for kw in range(kw_n):
            blk = w_oihw[:, :, kh, kw].T               # (ic, oc)
            for ow in range(out_w):
                r0 = (ow + kw) * ic_n
                c0 = ow * oc_n
                A[kh, r0:r0 + ic_n, c0:c0 + oc_n] = blk
    return A


def _pool_select_matrices(h_in, w_in, c):
    """0/1 matrices selecting even/odd rows and even/odd (width) columns."""
    h_out, w_out = h_in // 2, w_in // 2
    pr = np.zeros((2, h_out, h_in), np.float32)
    pr[0, np.arange(h_out), 2 * np.arange(h_out)] = 1.0
    pr[1, np.arange(h_out), 2 * np.arange(h_out) + 1] = 1.0
    pc = np.zeros((2, w_in * c, w_out * c), np.float32)
    for j in range(w_out):
        for cc in range(c):
            pc[0, (2 * j) * c + cc, j * c + cc] = 1.0
            pc[1, (2 * j + 1) * c + cc, j * c + cc] = 1.0
    return pr, pc


def prepare_lenetq_params(params):
    w1 = np.asarray(params["conv1_w"], np.float32)     # (6, 3, 5, 5)
    b1 = np.asarray(params["conv1_b"], np.float32)
    w2 = np.asarray(params["conv2_w"], np.float32)     # (16, 6, 5, 5)
    b2 = np.asarray(params["conv2_b"], np.float32)
    f1w = np.asarray(params["fc1_w"], np.float32)      # (120, 400)
    f1b = np.asarray(params["fc1_b"], np.float32)
    f2w = np.asarray(params["fc2_w"], np.float32)      # (84, 120)
    f2b = np.asarray(params["fc2_b"], np.float32)
    f3w = np.asarray(params["fc3_w"], np.float32)      # (10, 84)
    f3b = np.asarray(params["fc3_b"], np.float32)

    A1 = _banded_conv_matrix(w1, in_w=32, out_w=28)    # (5, 96, 168)
    A2 = _banded_conv_matrix(w2, in_w=14, out_w=10)    # (5, 84, 160)
    b1row = np.tile(b1, 28)[None, :]                   # (1, 168)
    b2row = np.tile(b2, 10)[None, :]                   # (1, 160)

    Pr1, Pc1 = _pool_select_matrices(28, 28, 6)        # (2,14,28), (2,168,84)
    Pr2, Pc2 = _pool_select_matrices(10, 10, 16)       # (2,5,10),  (2,160,80)

    # fc1: permute input dim from PyTorch NCHW-flatten (c*25 + h*5 + w) to the
    # kernel's per-row (w*16 + c) layout; one (80,120) block per spatial row h.
    W1p = np.transpose(f1w.reshape(120, 16, 5, 5), (2, 3, 1, 0)).reshape(5, 80, 120)
    W2p = np.ascontiguousarray(f2w.T)                  # (120, 84)
    W3p = np.zeros((84, 128), np.float32)              # pad out dim to 128 lanes
    W3p[:, :10] = f3w.T
    b3row = np.zeros((1, 128), np.float32)
    b3row[0, :10] = f3b

    prepared = (A1, b1row, Pr1, Pc1, A2, b2row, Pr2, Pc2,
                W1p, f1b[None, :], W2p, f2b[None, :], W3p, b3row)
    return tuple(jnp.asarray(a) for a in prepared)


# ---------------------------------------------------------------------------
# Forward pass wrapper (single fused pallas_call, batch-blocked grid).
# ---------------------------------------------------------------------------

def lenetq_forward(prepared, x_nchw):
    """x_nchw: (B, 3, 32, 32) float32 -> logits (B, 10) float32."""
    B = x_nchw.shape[0]
    BS = B if B <= 8 else 8                           # samples per grid step
    Bp = ((B + BS - 1) // BS) * BS                    # padded batch

    # NCHW -> (B, H, W*C) with column index w*3 + c  (layout glue, ~24 KB).
    x2d = jnp.transpose(x_nchw, (0, 2, 3, 1)).reshape(B, 32, 96).astype(jnp.float32)
    if Bp != B:
        x2d = jnp.pad(x2d, ((0, Bp - B), (0, 0), (0, 0)))

    const_specs = [
        pl.BlockSpec((5, 96, 168), lambda b: (0, 0, 0)),   # A1
        pl.BlockSpec((1, 168), lambda b: (0, 0)),          # b1row
        pl.BlockSpec((2, 14, 28), lambda b: (0, 0, 0)),    # Pr1
        pl.BlockSpec((2, 168, 84), lambda b: (0, 0, 0)),   # Pc1
        pl.BlockSpec((5, 84, 160), lambda b: (0, 0, 0)),   # A2
        pl.BlockSpec((1, 160), lambda b: (0, 0)),          # b2row
        pl.BlockSpec((2, 5, 10), lambda b: (0, 0, 0)),     # Pr2
        pl.BlockSpec((2, 160, 80), lambda b: (0, 0, 0)),   # Pc2
        pl.BlockSpec((5, 80, 120), lambda b: (0, 0, 0)),   # W1p
        pl.BlockSpec((1, 120), lambda b: (0, 0)),          # fc1 bias
        pl.BlockSpec((120, 84), lambda b: (0, 0)),         # W2p
        pl.BlockSpec((1, 84), lambda b: (0, 0)),           # fc2 bias
        pl.BlockSpec((84, 128), lambda b: (0, 0)),         # W3p (padded)
        pl.BlockSpec((1, 128), lambda b: (0, 0)),          # fc3 bias (padded)
    ]

    out = pl.pallas_call(
        _lenetq_kernel,
        out_shape=jax.ShapeDtypeStruct((Bp, 128), jnp.float32),
        grid=(Bp // BS,),
        in_specs=[pl.BlockSpec((BS, 32, 96), lambda b: (b, 0, 0))] + const_specs,
        out_specs=pl.BlockSpec((BS, 128), lambda b: (b, 0)),
        compiler_params=pltpu.CompilerParams(
            dimension_semantics=("parallel",)),
    )(x2d, *prepared)

    return out[:B, :10]


# ---------------------------------------------------------------------------
# Deterministic parameter init (PyTorch-default-style uniform, synthetic).
# ---------------------------------------------------------------------------

def _uniform(key, shape, fan_in):
    bound = 1.0 / math.sqrt(fan_in)
    return jax.random.uniform(key, shape, jnp.float32, -bound, bound)


def init_lenetq_params(key):
    ks = jax.random.split(key, 10)
    p = {}
    p["conv1_w"] = _uniform(ks[0], (6, 3, 5, 5), 3 * 5 * 5)
    p["conv1_b"] = _uniform(ks[1], (6,), 3 * 5 * 5)
    p["conv2_w"] = _uniform(ks[2], (16, 6, 5, 5), 6 * 5 * 5)
    p["conv2_b"] = _uniform(ks[3], (16,), 6 * 5 * 5)
    p["fc1_w"] = _uniform(ks[4], (120, 400), 400)
    p["fc1_b"] = _uniform(ks[5], (120,), 400)
    p["fc2_w"] = _uniform(ks[6], (84, 120), 120)
    p["fc2_b"] = _uniform(ks[7], (84,), 120)
    p["fc3_w"] = _uniform(ks[8], (10, 84), 84)
    p["fc3_b"] = _uniform(ks[9], (10,), 84)
    return p


# ---------------------------------------------------------------------------
# Pure-JAX reference (for a numerical sanity check of the fused kernel).
# ---------------------------------------------------------------------------

def lenetq_reference(params, x_nchw):
    x = jnp.transpose(x_nchw, (0, 2, 3, 1))                          # NHWC

    def conv_relu(x, w_oihw, b):
        y = jax.lax.conv_general_dilated(
            x, jnp.transpose(w_oihw, (2, 3, 1, 0)), (1, 1), "VALID",
            dimension_numbers=("NHWC", "HWIO", "NHWC"))
        return jax.nn.relu(y + b)

    def pool(x):
        return jnp.maximum(
            jnp.maximum(x[:, 0::2, 0::2, :], x[:, 0::2, 1::2, :]),
            jnp.maximum(x[:, 1::2, 0::2, :], x[:, 1::2, 1::2, :]))

    h = pool(conv_relu(x, params["conv1_w"], params["conv1_b"]))     # (B,14,14,6)
    h = pool(conv_relu(h, params["conv2_w"], params["conv2_b"]))     # (B,5,5,16)
    B = h.shape[0]
    feat = jnp.transpose(h, (0, 3, 1, 2)).reshape(B, 400)            # NCHW flatten
    h = jax.nn.relu(feat @ params["fc1_w"].T + params["fc1_b"])
    h = jax.nn.relu(h @ params["fc2_w"].T + params["fc2_b"])
    return h @ params["fc3_w"].T + params["fc3_b"]


# ---------------------------------------------------------------------------
# Main
# ---------------------------------------------------------------------------

if __name__ == "__main__":
    key = jax.random.PRNGKey(0)
    k_params, k_x = jax.random.split(key)

    params = init_lenetq_params(k_params)
    prepared = prepare_lenetq_params(params)
    x = jax.random.normal(k_x, (2, 3, 32, 32), jnp.float32)

    logits = jax.jit(lenetq_forward)(prepared, x)
    logits = jax.block_until_ready(logits)

    assert logits.shape == (2, 10), logits.shape
    assert bool(jnp.all(jnp.isfinite(logits)))

    ref = jax.block_until_ready(jax.jit(lenetq_reference)(params, x))
    max_err = float(jnp.max(jnp.abs(logits - ref)))
    assert max_err < 1e-2, f"kernel deviates from reference: max_err={max_err}"

    print("KERNEL_OK")
</pallas_src>

<mosaic_0001>
module attributes {stable_mosaic.version = 11 : i64} {
  func.func @_lenetq_kernel(%arg0: i32, %arg1: memref<2x32x96xf32, #tpu.memory_space<vmem>>, %arg2: memref<5x96x168xf32, #tpu.memory_space<vmem>>, %arg3: memref<1x168xf32, #tpu.memory_space<vmem>>, %arg4: memref<2x14x28xf32, #tpu.memory_space<vmem>>, %arg5: memref<2x168x84xf32, #tpu.memory_space<vmem>>, %arg6: memref<5x84x160xf32, #tpu.memory_space<vmem>>, %arg7: memref<1x160xf32, #tpu.memory_space<vmem>>, %arg8: memref<2x5x10xf32, #tpu.memory_space<vmem>>, %arg9: memref<2x160x80xf32, #tpu.memory_space<vmem>>, %arg10: memref<5x80x120xf32, #tpu.memory_space<vmem>>, %arg11: memref<1x120xf32, #tpu.memory_space<vmem>>, %arg12: memref<120x84xf32, #tpu.memory_space<vmem>>, %arg13: memref<1x84xf32, #tpu.memory_space<vmem>>, %arg14: memref<84x128xf32, #tpu.memory_space<vmem>>, %arg15: memref<1x128xf32, #tpu.memory_space<vmem>>, %arg16: memref<2x128xf32, #tpu.memory_space<vmem>>) attributes {dimension_semantics = [#tpu.dimension_semantics<parallel>], iteration_bounds = array<i64: 1>, scalar_prefetch = 0 : i64, scratch_operands = 0 : i64, tpu.core_type = #tpu.core_type<tc>, window_params = [{transform_indices = @transform_0, window_bounds = array<i64: 2, 32, 96>}, {pipeline_mode = #tpu.pipeline_mode<synchronous>, transform_indices = @transform_1, window_bounds = array<i64: 5, 96, 168>}, {pipeline_mode = #tpu.pipeline_mode<synchronous>, transform_indices = @transform_2, window_bounds = array<i64: 1, 168>}, {pipeline_mode = #tpu.pipeline_mode<synchronous>, transform_indices = @transform_3, window_bounds = array<i64: 2, 14, 28>}, {pipeline_mode = #tpu.pipeline_mode<synchronous>, transform_indices = @transform_4, window_bounds = array<i64: 2, 168, 84>}, {pipeline_mode = #tpu.pipeline_mode<synchronous>, transform_indices = @transform_5, window_bounds = array<i64: 5, 84, 160>}, {pipeline_mode = #tpu.pipeline_mode<synchronous>, transform_indices = @transform_6, window_bounds = array<i64: 1, 160>}, {pipeline_mode = #tpu.pipeline_mode<synchronous>, transform_indices = @transform_7, window_bounds = array<i64: 2, 5, 10>}, {pipeline_mode = #tpu.pipeline_mode<synchronous>, transform_indices = @transform_8, window_bounds = array<i64: 2, 160, 80>}, {pipeline_mode = #tpu.pipeline_mode<synchronous>, transform_indices = @transform_9, window_bounds = array<i64: 5, 80, 120>}, {pipeline_mode = #tpu.pipeline_mode<synchronous>, transform_indices = @transform_10, window_bounds = array<i64: 1, 120>}, {pipeline_mode = #tpu.pipeline_mode<synchronous>, transform_indices = @transform_11, window_bounds = array<i64: 120, 84>}, {pipeline_mode = #tpu.pipeline_mode<synchronous>, transform_indices = @transform_12, window_bounds = array<i64: 1, 84>}, {pipeline_mode = #tpu.pipeline_mode<synchronous>, transform_indices = @transform_13, window_bounds = array<i64: 84, 128>}, {pipeline_mode = #tpu.pipeline_mode<synchronous>, transform_indices = @transform_14, window_bounds = array<i64: 1, 128>}, {transform_indices = @transform_15, window_bounds = array<i64: 2, 128>}]} {
    %c0 = arith.constant 0 : index
    %c0_0 = arith.constant 0 : index
    %c0_1 = arith.constant 0 : index
    %0 = vector.load %arg1[%c0, %c0_0, %c0_1] : memref<2x32x96xf32, #tpu.memory_space<vmem>>, vector<1x32x96xf32>
    %1 = vector.shape_cast %0 : vector<1x32x96xf32> to vector<32x96xf32>
    %2 = vector.extract_strided_slice %1 {offsets = [0, 0], sizes = [28, 96], strides = [1, 1]} : vector<32x96xf32> to vector<28x96xf32>
    %c0_2 = arith.constant 0 : index
    %c0_3 = arith.constant 0 : index
    %c0_4 = arith.constant 0 : index
    %3 = vector.load %arg2[%c0_2, %c0_3, %c0_4] : memref<5x96x168xf32, #tpu.memory_space<vmem>>, vector<1x96x168xf32>
    %4 = vector.shape_cast %3 : vector<1x96x168xf32> to vector<96x168xf32>
    %cst = arith.constant dense<0.000000e+00> : vector<28x168xf32>
    %5 = tpu.matmul %2, %4, %cst {dimension_numbers = #tpu.dot_dimension_numbers<[1], [0], [0], [1], [0, 0, 1, 1], [], []>} : vector<28x96xf32>, vector<96x168xf32>, vector<28x168xf32> -> vector<28x168xf32>
    %6 = vector.extract_strided_slice %1 {offsets = [1, 0], sizes = [28, 96], strides = [1, 1]} : vector<32x96xf32> to vector<28x96xf32>
    %c1 = arith.constant 1 : index
    %c0_5 = arith.constant 0 : index
    %c0_6 = arith.constant 0 : index
    %7 = vector.load %arg2[%c1, %c0_5, %c0_6] : memref<5x96x168xf32, #tpu.memory_space<vmem>>, vector<1x96x168xf32>
    %8 = vector.shape_cast %7 : vector<1x96x168xf32> to vector<96x168xf32>
    %cst_7 = arith.constant dense<0.000000e+00> : vector<28x168xf32>
    %9 = tpu.matmul %6, %8, %cst_7 {dimension_numbers = #tpu.dot_dimension_numbers<[1], [0], [0], [1], [0, 0, 1, 1], [], []>} : vector<28x96xf32>, vector<96x168xf32>, vector<28x168xf32> -> vector<28x168xf32>
    %10 = arith.addf %5, %9 : vector<28x168xf32>
    %11 = vector.extract_strided_slice %1 {offsets = [2, 0], sizes = [28, 96], strides = [1, 1]} : vector<32x96xf32> to vector<28x96xf32>
    %c2 = arith.constant 2 : index
    %c0_8 = arith.constant 0 : index
    %c0_9 = arith.constant 0 : index
    %12 = vector.load %arg2[%c2, %c0_8, %c0_9] : memref<5x96x168xf32, #tpu.memory_space<vmem>>, vector<1x96x168xf32>
    %13 = vector.shape_cast %12 : vector<1x96x168xf32> to vector<96x168xf32>
    %cst_10 = arith.constant dense<0.000000e+00> : vector<28x168xf32>
    %14 = tpu.matmul %11, %13, %cst_10 {dimension_numbers = #tpu.dot_dimension_numbers<[1], [0], [0], [1], [0, 0, 1, 1], [], []>} : vector<28x96xf32>, vector<96x168xf32>, vector<28x168xf32> -> vector<28x168xf32>
    %15 = arith.addf %10, %14 : vector<28x168xf32>
    %16 = vector.extract_strided_slice %1 {offsets = [3, 0], sizes = [28, 96], strides = [1, 1]} : vector<32x96xf32> to vector<28x96xf32>
    %c3 = arith.constant 3 : index
    %c0_11 = arith.constant 0 : index
    %c0_12 = arith.constant 0 : index
    %17 = vector.load %arg2[%c3, %c0_11, %c0_12] : memref<5x96x168xf32, #tpu.memory_space<vmem>>, vector<1x96x168xf32>
    %18 = vector.shape_cast %17 : vector<1x96x168xf32> to vector<96x168xf32>
    %cst_13 = arith.constant dense<0.000000e+00> : vector<28x168xf32>
    %19 = tpu.matmul %16, %18, %cst_13 {dimension_numbers = #tpu.dot_dimension_numbers<[1], [0], [0], [1], [0, 0, 1, 1], [], []>} : vector<28x96xf32>, vector<96x168xf32>, vector<28x168xf32> -> vector<28x168xf32>
    %20 = arith.addf %15, %19 : vector<28x168xf32>
    %21 = vector.extract_strided_slice %1 {offsets = [4, 0], sizes = [28, 96], strides = [1, 1]} : vector<32x96xf32> to vector<28x96xf32>
    %c4 = arith.constant 4 : index
    %c0_14 = arith.constant 0 : index
    %c0_15 = arith.constant 0 : index
    %22 = vector.load %arg2[%c4, %c0_14, %c0_15] : memref<5x96x168xf32, #tpu.memory_space<vmem>>, vector<1x96x168xf32>
    %23 = vector.shape_cast %22 : vector<1x96x168xf32> to vector<96x168xf32>
    %cst_16 = arith.constant dense<0.000000e+00> : vector<28x168xf32>
    %24 = tpu.matmul %21, %23, %cst_16 {dimension_numbers = #tpu.dot_dimension_numbers<[1], [0], [0], [1], [0, 0, 1, 1], [], []>} : vector<28x96xf32>, vector<96x168xf32>, vector<28x168xf32> -> vector<28x168xf32>
    %25 = arith.addf %20, %24 : vector<28x168xf32>
    %c0_17 = arith.constant 0 : index
    %c0_18 = arith.constant 0 : index
    %26 = vector.load %arg3[%c0_17, %c0_18] : memref<1x168xf32, #tpu.memory_space<vmem>>, vector<1x168xf32>
    %27 = vector.broadcast %26 : vector<1x168xf32> to vector<28x168xf32>
    %28 = arith.addf %25, %27 : vector<28x168xf32>
    %cst_19 = arith.constant 0.000000e+00 : f32
    %29 = vector.broadcast %cst_19 : f32 to vector<28x168xf32>
    %30 = arith.maximumf %28, %29 : vector<28x168xf32>
    %c0_20 = arith.constant 0 : index
    %c0_21 = arith.constant 0 : index
    %c0_22 = arith.constant 0 : index
    %31 = vector.load %arg4[%c0_20, %c0_21, %c0_22] : memref<2x14x28xf32, #tpu.memory_space<vmem>>, vector<1x14x28xf32>
    %32 = vector.shape_cast %31 : vector<1x14x28xf32> to vector<14x28xf32>
    %cst_23 = arith.constant dense<0.000000e+00> : vector<14x168xf32>
    %33 = tpu.matmul %32, %30, %cst_23 {dimension_numbers = #tpu.dot_dimension_numbers<[1], [0], [0], [1], [0, 0, 1, 1], [], []>} : vector<14x28xf32>, vector<28x168xf32>, vector<14x168xf32> -> vector<14x168xf32>
    %c1_24 = arith.constant 1 : index
    %c0_25 = arith.constant 0 : index
    %c0_26 = arith.constant 0 : index
    %34 = vector.load %arg4[%c1_24, %c0_25, %c0_26] : memref<2x14x28xf32, #tpu.memory_space<vmem>>, vector<1x14x28xf32>
    %35 = vector.shape_cast %34 : vector<1x14x28xf32> to vector<14x28xf32>
    %cst_27 = arith.constant dense<0.000000e+00> : vector<14x168xf32>
    %36 = tpu.matmul %35, %30, %cst_27 {dimension_numbers = #tpu.dot_dimension_numbers<[1], [0], [0], [1], [0, 0, 1, 1], [], []>} : vector<14x28xf32>, vector<28x168xf32>, vector<14x168xf32> -> vector<14x168xf32>
    %37 = arith.maximumf %33, %36 : vector<14x168xf32>
    %c0_28 = arith.constant 0 : index
    %c0_29 = arith.constant 0 : index
    %c0_30 = arith.constant 0 : index
    %38 = vector.load %arg5[%c0_28, %c0_29, %c0_30] : memref<2x168x84xf32, #tpu.memory_space<vmem>>, vector<1x168x84xf32>
    %39 = vector.shape_cast %38 : vector<1x168x84xf32> to vector<168x84xf32>
    %cst_31 = arith.constant dense<0.000000e+00> : vector<14x84xf32>
    %40 = tpu.matmul %37, %39, %cst_31 {dimension_numbers = #tpu.dot_dimension_numbers<[1], [0], [0], [1], [0, 0, 1, 1], [], []>} : vector<14x168xf32>, vector<168x84xf32>, vector<14x84xf32> -> vector<14x84xf32>
    %c1_32 = arith.constant 1 : index
    %c0_33 = arith.constant 0 : index
    %c0_34 = arith.constant 0 : index
    %41 = vector.load %arg5[%c1_32, %c0_33, %c0_34] : memref<2x168x84xf32, #tpu.memory_space<vmem>>, vector<1x168x84xf32>
    %42 = vector.shape_cast %41 : vector<1x168x84xf32> to vector<168x84xf32>
    %cst_35 = arith.constant dense<0.000000e+00> : vector<14x84xf32>
    %43 = tpu.matmul %37, %42, %cst_35 {dimension_numbers = #tpu.dot_dimension_numbers<[1], [0], [0], [1], [0, 0, 1, 1], [], []>} : vector<14x168xf32>, vector<168x84xf32>, vector<14x84xf32> -> vector<14x84xf32>
    %44 = arith.maximumf %40, %43 : vector<14x84xf32>
    %45 = vector.extract_strided_slice %44 {offsets = [0, 0], sizes = [10, 84], strides = [1, 1]} : vector<14x84xf32> to vector<10x84xf32>
    %c0_36 = arith.constant 0 : index
    %c0_37 = arith.constant 0 : index
    %c0_38 = arith.constant 0 : index
    %46 = vector.load %arg6[%c0_36, %c0_37, %c0_38] : memref<5x84x160xf32, #tpu.memory_space<vmem>>, vector<1x84x160xf32>
    %47 = vector.shape_cast %46 : vector<1x84x160xf32> to vector<84x160xf32>
    %cst_39 = arith.constant dense<0.000000e+00> : vector<10x160xf32>
    %48 = tpu.matmul %45, %47, %cst_39 {dimension_numbers = #tpu.dot_dimension_numbers<[1], [0], [0], [1], [0, 0, 1, 1], [], []>} : vector<10x84xf32>, vector<84x160xf32>, vector<10x160xf32> -> vector<10x160xf32>
    %49 = vector.extract_strided_slice %44 {offsets = [1, 0], sizes = [10, 84], strides = [1, 1]} : vector<14x84xf32> to vector<10x84xf32>
    %c1_40 = arith.constant 1 : index
    %c0_41 = arith.constant 0 : index
    %c0_42 = arith.constant 0 : index
    %50 = vector.load %arg6[%c1_40, %c0_41, %c0_42] : memref<5x84x160xf32, #tpu.memory_space<vmem>>, vector<1x84x160xf32>
    %51 = vector.shape_cast %50 : vector<1x84x160xf32> to vector<84x160xf32>
    %cst_43 = arith.constant dense<0.000000e+00> : vector<10x160xf32>
    %52 = tpu.matmul %49, %51, %cst_43 {dimension_numbers = #tpu.dot_dimension_numbers<[1], [0], [0], [1], [0, 0, 1, 1], [], []>} : vector<10x84xf32>, vector<84x160xf32>, vector<10x160xf32> -> vector<10x160xf32>
    %53 = arith.addf %48, %52 : vector<10x160xf32>
    %54 = vector.extract_strided_slice %44 {offsets = [2, 0], sizes = [10, 84], strides = [1, 1]} : vector<14x84xf32> to vector<10x84xf32>
    %c2_44 = arith.constant 2 : index
    %c0_45 = arith.constant 0 : index
    %c0_46 = arith.constant 0 : index
    %55 = vector.load %arg6[%c2_44, %c0_45, %c0_46] : memref<5x84x160xf32, #tpu.memory_space<vmem>>, vector<1x84x160xf32>
    %56 = vector.shape_cast %55 : vector<1x84x160xf32> to vector<84x160xf32>
    %cst_47 = arith.constant dense<0.000000e+00> : vector<10x160xf32>
    %57 = tpu.matmul %54, %56, %cst_47 {dimension_numbers = #tpu.dot_dimension_numbers<[1], [0], [0], [1], [0, 0, 1, 1], [], []>} : vector<10x84xf32>, vector<84x160xf32>, vector<10x160xf32> -> vector<10x160xf32>
    %58 = arith.addf %53, %57 : vector<10x160xf32>
    %59 = vector.extract_strided_slice %44 {offsets = [3, 0], sizes = [10, 84], strides = [1, 1]} : vector<14x84xf32> to vector<10x84xf32>
    %c3_48 = arith.constant 3 : index
    %c0_49 = arith.constant 0 : index
    %c0_50 = arith.constant 0 : index
    %60 = vector.load %arg6[%c3_48, %c0_49, %c0_50] : memref<5x84x160xf32, #tpu.memory_space<vmem>>, vector<1x84x160xf32>
    %61 = vector.shape_cast %60 : vector<1x84x160xf32> to vector<84x160xf32>
    %cst_51 = arith.constant dense<0.000000e+00> : vector<10x160xf32>
    %62 = tpu.matmul %59, %61, %cst_51 {dimension_numbers = #tpu.dot_dimension_numbers<[1], [0], [0], [1], [0, 0, 1, 1], [], []>} : vector<10x84xf32>, vector<84x160xf32>, vector<10x160xf32> -> vector<10x160xf32>
    %63 = arith.addf %58, %62 : vector<10x160xf32>
    %64 = vector.extract_strided_slice %44 {offsets = [4, 0], sizes = [10, 84], strides = [1, 1]} : vector<14x84xf32> to vector<10x84xf32>
    %c4_52 = arith.constant 4 : index
    %c0_53 = arith.constant 0 : index
    %c0_54 = arith.constant 0 : index
    %65 = vector.load %arg6[%c4_52, %c0_53, %c0_54] : memref<5x84x160xf32, #tpu.memory_space<vmem>>, vector<1x84x160xf32>
    %66 = vector.shape_cast %65 : vector<1x84x160xf32> to vector<84x160xf32>
    %cst_55 = arith.constant dense<0.000000e+00> : vector<10x160xf32>
    %67 = tpu.matmul %64, %66, %cst_55 {dimension_numbers = #tpu.dot_dimension_numbers<[1], [0], [0], [1], [0, 0, 1, 1], [], []>} : vector<10x84xf32>, vector<84x160xf32>, vector<10x160xf32> -> vector<10x160xf32>
    %68 = arith.addf %63, %67 : vector<10x160xf32>
    %c0_56 = arith.constant 0 : index
    %c0_57 = arith.constant 0 : index
    %69 = vector.load %arg7[%c0_56, %c0_57] : memref<1x160xf32, #tpu.memory_space<vmem>>, vector<1x160xf32>
    %70 = vector.broadcast %69 : vector<1x160xf32> to vector<10x160xf32>
    %71 = arith.addf %68, %70 : vector<10x160xf32>
    %cst_58 = arith.constant 0.000000e+00 : f32
    %72 = vector.broadcast %cst_58 : f32 to vector<10x160xf32>
    %73 = arith.maximumf %71, %72 : vector<10x160xf32>
    %c0_59 = arith.constant 0 : index
    %c0_60 = arith.constant 0 : index
    %c0_61 = arith.constant 0 : index
    %74 = vector.load %arg8[%c0_59, %c0_60, %c0_61] : memref<2x5x10xf32, #tpu.memory_space<vmem>>, vector<1x5x10xf32>
    %75 = vector.shape_cast %74 : vector<1x5x10xf32> to vector<5x10xf32>
    %cst_62 = arith.constant dense<0.000000e+00> : vector<5x160xf32>
    %76 = tpu.matmul %75, %73, %cst_62 {dimension_numbers = #tpu.dot_dimension_numbers<[1], [0], [0], [1], [0, 0, 1, 1], [], []>} : vector<5x10xf32>, vector<10x160xf32>, vector<5x160xf32> -> vector<5x160xf32>
    %c1_63 = arith.constant 1 : index
    %c0_64 = arith.constant 0 : index
    %c0_65 = arith.constant 0 : index
    %77 = vector.load %arg8[%c1_63, %c0_64, %c0_65] : memref<2x5x10xf32, #tpu.memory_space<vmem>>, vector<1x5x10xf32>
    %78 = vector.shape_cast %77 : vector<1x5x10xf32> to vector<5x10xf32>
    %cst_66 = arith.constant dense<0.000000e+00> : vector<5x160xf32>
    %79 = tpu.matmul %78, %73, %cst_66 {dimension_numbers = #tpu.dot_dimension_numbers<[1], [0], [0], [1], [0, 0, 1, 1], [], []>} : vector<5x10xf32>, vector<10x160xf32>, vector<5x160xf32> -> vector<5x160xf32>
    %80 = arith.maximumf %76, %79 : vector<5x160xf32>
    %c0_67 = arith.constant 0 : index
    %c0_68 = arith.constant 0 : index
    %c0_69 = arith.constant 0 : index
    %81 = vector.load %arg9[%c0_67, %c0_68, %c0_69] : memref<2x160x80xf32, #tpu.memory_space<vmem>>, vector<1x160x80xf32>
    %82 = vector.shape_cast %81 : vector<1x160x80xf32> to vector<160x80xf32>
    %cst_70 = arith.constant dense<0.000000e+00> : vector<5x80xf32>
    %83 = tpu.matmul %80, %82, %cst_70 {dimension_numbers = #tpu.dot_dimension_numbers<[1], [0], [0], [1], [0, 0, 1, 1], [], []>} : vector<5x160xf32>, vector<160x80xf32>, vector<5x80xf32> -> vector<5x80xf32>
    %c1_71 = arith.constant 1 : index
    %c0_72 = arith.constant 0 : index
    %c0_73 = arith.constant 0 : index
    %84 = vector.load %arg9[%c1_71, %c0_72, %c0_73] : memref<2x160x80xf32, #tpu.memory_space<vmem>>, vector<1x160x80xf32>
    %85 = vector.shape_cast %84 : vector<1x160x80xf32> to vector<160x80xf32>
    %cst_74 = arith.constant dense<0.000000e+00> : vector<5x80xf32>
    %86 = tpu.matmul %80, %85, %cst_74 {dimension_numbers = #tpu.dot_dimension_numbers<[1], [0], [0], [1], [0, 0, 1, 1], [], []>} : vector<5x160xf32>, vector<160x80xf32>, vector<5x80xf32> -> vector<5x80xf32>
    %87 = arith.maximumf %83, %86 : vector<5x80xf32>
    %88 = vector.extract_strided_slice %87 {offsets = [0, 0], sizes = [1, 80], strides = [1, 1]} : vector<5x80xf32> to vector<1x80xf32>
    %c0_75 = arith.constant 0 : index
    %c0_76 = arith.constant 0 : index
    %c0_77 = arith.constant 0 : index
    %89 = vector.load %arg10[%c0_75, %c0_76, %c0_77] : memref<5x80x120xf32, #tpu.memory_space<vmem>>, vector<1x80x120xf32>
    %90 = vector.shape_cast %89 : vector<1x80x120xf32> to vector<80x120xf32>
    %cst_78 = arith.constant dense<0.000000e+00> : vector<1x120xf32>
    %91 = tpu.matmul %88, %90, %cst_78 {dimension_numbers = #tpu.dot_dimension_numbers<[1], [0], [0], [1], [0, 0, 1, 1], [], []>} : vector<1x80xf32>, vector<80x120xf32>, vector<1x120xf32> -> vector<1x120xf32>
    %92 = vector.extract_strided_slice %87 {offsets = [1, 0], sizes = [1, 80], strides = [1, 1]} : vector<5x80xf32> to vector<1x80xf32>
    %c1_79 = arith.constant 1 : index
    %c0_80 = arith.constant 0 : index
    %c0_81 = arith.constant 0 : index
    %93 = vector.load %arg10[%c1_79, %c0_80, %c0_81] : memref<5x80x120xf32, #tpu.memory_space<vmem>>, vector<1x80x120xf32>
    %94 = vector.shape_cast %93 : vector<1x80x120xf32> to vector<80x120xf32>
    %cst_82 = arith.constant dense<0.000000e+00> : vector<1x120xf32>
    %95 = tpu.matmul %92, %94, %cst_82 {dimension_numbers = #tpu.dot_dimension_numbers<[1], [0], [0], [1], [0, 0, 1, 1], [], []>} : vector<1x80xf32>, vector<80x120xf32>, vector<1x120xf32> -> vector<1x120xf32>
    %96 = arith.addf %91, %95 : vector<1x120xf32>
    %97 = vector.extract_strided_slice %87 {offsets = [2, 0], sizes = [1, 80], strides = [1, 1]} : vector<5x80xf32> to vector<1x80xf32>
    %c2_83 = arith.constant 2 : index
    %c0_84 = arith.constant 0 : index
    %c0_85 = arith.constant 0 : index
    %98 = vector.load %arg10[%c2_83, %c0_84, %c0_85] : memref<5x80x120xf32, #tpu.memory_space<vmem>>, vector<1x80x120xf32>
    %99 = vector.shape_cast %98 : vector<1x80x120xf32> to vector<80x120xf32>
    %cst_86 = arith.constant dense<0.000000e+00> : vector<1x120xf32>
    %100 = tpu.matmul %97, %99, %cst_86 {dimension_numbers = #tpu.dot_dimension_numbers<[1], [0], [0], [1], [0, 0, 1, 1], [], []>} : vector<1x80xf32>, vector<80x120xf32>, vector<1x120xf32> -> vector<1x120xf32>
    %101 = arith.addf %96, %100 : vector<1x120xf32>
    %102 = vector.extract_strided_slice %87 {offsets = [3, 0], sizes = [1, 80], strides = [1, 1]} : vector<5x80xf32> to vector<1x80xf32>
    %c3_87 = arith.constant 3 : index
    %c0_88 = arith.constant 0 : index
    %c0_89 = arith.constant 0 : index
    %103 = vector.load %arg10[%c3_87, %c0_88, %c0_89] : memref<5x80x120xf32, #tpu.memory_space<vmem>>, vector<1x80x120xf32>
    %104 = vector.shape_cast %103 : vector<1x80x120xf32> to vector<80x120xf32>
    %cst_90 = arith.constant dense<0.000000e+00> : vector<1x120xf32>
    %105 = tpu.matmul %102, %104, %cst_90 {dimension_numbers = #tpu.dot_dimension_numbers<[1], [0], [0], [1], [0, 0, 1, 1], [], []>} : vector<1x80xf32>, vector<80x120xf32>, vector<1x120xf32> -> vector<1x120xf32>
    %106 = arith.addf %101, %105 : vector<1x120xf32>
    %107 = vector.extract_strided_slice %87 {offsets = [4, 0], sizes = [1, 80], strides = [1, 1]} : vector<5x80xf32> to vector<1x80xf32>
    %c4_91 = arith.constant 4 : index
    %c0_92 = arith.constant 0 : index
    %c0_93 = arith.constant 0 : index
    %108 = vector.load %arg10[%c4_91, %c0_92, %c0_93] : memref<5x80x120xf32, #tpu.memory_space<vmem>>, vector<1x80x120xf32>
    %109 = vector.shape_cast %108 : vector<1x80x120xf32> to vector<80x120xf32>
    %cst_94 = arith.constant dense<0.000000e+00> : vector<1x120xf32>
    %110 = tpu.matmul %107, %109, %cst_94 {dimension_numbers = #tpu.dot_dimension_numbers<[1], [0], [0], [1], [0, 0, 1, 1], [], []>} : vector<1x80xf32>, vector<80x120xf32>, vector<1x120xf32> -> vector<1x120xf32>
    %111 = arith.addf %106, %110 : vector<1x120xf32>
    %c0_95 = arith.constant 0 : index
    %c0_96 = arith.constant 0 : index
    %112 = vector.load %arg11[%c0_95, %c0_96] : memref<1x120xf32, #tpu.memory_space<vmem>>, vector<1x120xf32>
    %113 = arith.addf %111, %112 : vector<1x120xf32>
    %cst_97 = arith.constant 0.000000e+00 : f32
    %114 = vector.broadcast %cst_97 : f32 to vector<1x120xf32>
    %115 = arith.maximumf %113, %114 : vector<1x120xf32>
    %c1_98 = arith.constant 1 : index
    %c0_99 = arith.constant 0 : index
    %c0_100 = arith.constant 0 : index
    %116 = vector.load %arg1[%c1_98, %c0_99, %c0_100] : memref<2x32x96xf32, #tpu.memory_space<vmem>>, vector<1x32x96xf32>
    %117 = vector.shape_cast %116 : vector<1x32x96xf32> to vector<32x96xf32>
    %118 = vector.extract_strided_slice %117 {offsets = [0, 0], sizes = [28, 96], strides = [1, 1]} : vector<32x96xf32> to vector<28x96xf32>
    %c0_101 = arith.constant 0 : index
    %c0_102 = arith.constant 0 : index
    %c0_103 = arith.constant 0 : index
    %119 = vector.load %arg2[%c0_101, %c0_102, %c0_103] : memref<5x96x168xf32, #tpu.memory_space<vmem>>, vector<1x96x168xf32>
    %120 = vector.shape_cast %119 : vector<1x96x168xf32> to vector<96x168xf32>
    %cst_104 = arith.constant dense<0.000000e+00> : vector<28x168xf32>
    %121 = tpu.matmul %118, %120, %cst_104 {dimension_numbers = #tpu.dot_dimension_numbers<[1], [0], [0], [1], [0, 0, 1, 1], [], []>} : vector<28x96xf32>, vector<96x168xf32>, vector<28x168xf32> -> vector<28x168xf32>
    %122 = vector.extract_strided_slice %117 {offsets = [1, 0], sizes = [28, 96], strides = [1, 1]} : vector<32x96xf32> to vector<28x96xf32>
    %c1_105 = arith.constant 1 : index
    %c0_106 = arith.constant 0 : index
    %c0_107 = arith.constant 0 : index
    %123 = vector.load %arg2[%c1_105, %c0_106, %c0_107] : memref<5x96x168xf32, #tpu.memory_space<vmem>>, vector<1x96x168xf32>
    %124 = vector.shape_cast %123 : vector<1x96x168xf32> to vector<96x168xf32>
    %cst_108 = arith.constant dense<0.000000e+00> : vector<28x168xf32>
    %125 = tpu.matmul %122, %124, %cst_108 {dimension_numbers = #tpu.dot_dimension_numbers<[1], [0], [0], [1], [0, 0, 1, 1], [], []>} : vector<28x96xf32>, vector<96x168xf32>, vector<28x168xf32> -> vector<28x168xf32>
    %126 = arith.addf %121, %125 : vector<28x168xf32>
    %127 = vector.extract_strided_slice %117 {offsets = [2, 0], sizes = [28, 96], strides = [1, 1]} : vector<32x96xf32> to vector<28x96xf32>
    %c2_109 = arith.constant 2 : index
    %c0_110 = arith.constant 0 : index
    %c0_111 = arith.constant 0 : index
    %128 = vector.load %arg2[%c2_109, %c0_110, %c0_111] : memref<5x96x168xf32, #tpu.memory_space<vmem>>, vector<1x96x168xf32>
    %129 = vector.shape_cast %128 : vector<1x96x168xf32> to vector<96x168xf32>
    %cst_112 = arith.constant dense<0.000000e+00> : vector<28x168xf32>
    %130 = tpu.matmul %127, %129, %cst_112 {dimension_numbers = #tpu.dot_dimension_numbers<[1], [0], [0], [1], [0, 0, 1, 1], [], []>} : vector<28x96xf32>, vector<96x168xf32>, vector<28x168xf32> -> vector<28x168xf32>
    %131 = arith.addf %126, %130 : vector<28x168xf32>
    %132 = vector.extract_strided_slice %117 {offsets = [3, 0], sizes = [28, 96], strides = [1, 1]} : vector<32x96xf32> to vector<28x96xf32>
    %c3_113 = arith.constant 3 : index
    %c0_114 = arith.constant 0 : index
    %c0_115 = arith.constant 0 : index
    %133 = vector.load %arg2[%c3_113, %c0_114, %c0_115] : memref<5x96x168xf32, #tpu.memory_space<vmem>>, vector<1x96x168xf32>
    %134 = vector.shape_cast %133 : vector<1x96x168xf32> to vector<96x168xf32>
    %cst_116 = arith.constant dense<0.000000e+00> : vector<28x168xf32>
    %135 = tpu.matmul %132, %134, %cst_116 {dimension_numbers = #tpu.dot_dimension_numbers<[1], [0], [0], [1], [0, 0, 1, 1], [], []>} : vector<28x96xf32>, vector<96x168xf32>, vector<28x168xf32> -> vector<28x168xf32>
    %136 = arith.addf %131, %135 : vector<28x168xf32>
    %137 = vector.extract_strided_slice %117 {offsets = [4, 0], sizes = [28, 96], strides = [1, 1]} : vector<32x96xf32> to vector<28x96xf32>
    %c4_117 = arith.constant 4 : index
    %c0_118 = arith.constant 0 : index
    %c0_119 = arith.constant 0 : index
    %138 = vector.load %arg2[%c4_117, %c0_118, %c0_119] : memref<5x96x168xf32, #tpu.memory_space<vmem>>, vector<1x96x168xf32>
    %139 = vector.shape_cast %138 : vector<1x96x168xf32> to vector<96x168xf32>
    %cst_120 = arith.constant dense<0.000000e+00> : vector<28x168xf32>
    %140 = tpu.matmul %137, %139, %cst_120 {dimension_numbers = #tpu.dot_dimension_numbers<[1], [0], [0], [1], [0, 0, 1, 1], [], []>} : vector<28x96xf32>, vector<96x168xf32>, vector<28x168xf32> -> vector<28x168xf32>
    %141 = arith.addf %136, %140 : vector<28x168xf32>
    %c0_121 = arith.constant 0 : index
    %c0_122 = arith.constant 0 : index
    %142 = vector.load %arg3[%c0_121, %c0_122] : memref<1x168xf32, #tpu.memory_space<vmem>>, vector<1x168xf32>
    %143 = vector.broadcast %142 : vector<1x168xf32> to vector<28x168xf32>
    %144 = arith.addf %141, %143 : vector<28x168xf32>
    %cst_123 = arith.constant 0.000000e+00 : f32
    %145 = vector.broadcast %cst_123 : f32 to vector<28x168xf32>
    %146 = arith.maximumf %144, %145 : vector<28x168xf32>
    %c0_124 = arith.constant 0 : index
    %c0_125 = arith.constant 0 : index
    %c0_126 = arith.constant 0 : index
    %147 = vector.load %arg4[%c0_124, %c0_125, %c0_126] : memref<2x14x28xf32, #tpu.memory_space<vmem>>, vector<1x14x28xf32>
    %148 = vector.shape_cast %147 : vector<1x14x28xf32> to vector<14x28xf32>
    %cst_127 = arith.constant dense<0.000000e+00> : vector<14x168xf32>
    %149 = tpu.matmul %148, %146, %cst_127 {dimension_numbers = #tpu.dot_dimension_numbers<[1], [0], [0], [1], [0, 0, 1, 1], [], []>} : vector<14x28xf32>, vector<28x168xf32>, vector<14x168xf32> -> vector<14x168xf32>
    %c1_128 = arith.constant 1 : index
    %c0_129 = arith.constant 0 : index
    %c0_130 = arith.constant 0 : index
    %150 = vector.load %arg4[%c1_128, %c0_129, %c0_130] : memref<2x14x28xf32, #tpu.memory_space<vmem>>, vector<1x14x28xf32>
    %151 = vector.shape_cast %150 : vector<1x14x28xf32> to vector<14x28xf32>
    %cst_131 = arith.constant dense<0.000000e+00> : vector<14x168xf32>
    %152 = tpu.matmul %151, %146, %cst_131 {dimension_numbers = #tpu.dot_dimension_numbers<[1], [0], [0], [1], [0, 0, 1, 1], [], []>} : vector<14x28xf32>, vector<28x168xf32>, vector<14x168xf32> -> vector<14x168xf32>
    %153 = arith.maximumf %149, %152 : vector<14x168xf32>
    %c0_132 = arith.constant 0 : index
    %c0_133 = arith.constant 0 : index
    %c0_134 = arith.constant 0 : index
    %154 = vector.load %arg5[%c0_132, %c0_133, %c0_134] : memref<2x168x84xf32, #tpu.memory_space<vmem>>, vector<1x168x84xf32>
    %155 = vector.shape_cast %154 : vector<1x168x84xf32> to vector<168x84xf32>
    %cst_135 = arith.constant dense<0.000000e+00> : vector<14x84xf32>
    %156 = tpu.matmul %153, %155, %cst_135 {dimension_numbers = #tpu.dot_dimension_numbers<[1], [0], [0], [1], [0, 0, 1, 1], [], []>} : vector<14x168xf32>, vector<168x84xf32>, vector<14x84xf32> -> vector<14x84xf32>
    %c1_136 = arith.constant 1 : index
    %c0_137 = arith.constant 0 : index
    %c0_138 = arith.constant 0 : index
    %157 = vector.load %arg5[%c1_136, %c0_137, %c0_138] : memref<2x168x84xf32, #tpu.memory_space<vmem>>, vector<1x168x84xf32>
    %158 = vector.shape_cast %157 : vector<1x168x84xf32> to vector<168x84xf32>
    %cst_139 = arith.constant dense<0.000000e+00> : vector<14x84xf32>
    %159 = tpu.matmul %153, %158, %cst_139 {dimension_numbers = #tpu.dot_dimension_numbers<[1], [0], [0], [1], [0, 0, 1, 1], [], []>} : vector<14x168xf32>, vector<168x84xf32>, vector<14x84xf32> -> vector<14x84xf32>
    %160 = arith.maximumf %156, %159 : vector<14x84xf32>
    %161 = vector.extract_strided_slice %160 {offsets = [0, 0], sizes = [10, 84], strides = [1, 1]} : vector<14x84xf32> to vector<10x84xf32>
    %c0_140 = arith.constant 0 : index
    %c0_141 = arith.constant 0 : index
    %c0_142 = arith.constant 0 : index
    %162 = vector.load %arg6[%c0_140, %c0_141, %c0_142] : memref<5x84x160xf32, #tpu.memory_space<vmem>>, vector<1x84x160xf32>
    %163 = vector.shape_cast %162 : vector<1x84x160xf32> to vector<84x160xf32>
    %cst_143 = arith.constant dense<0.000000e+00> : vector<10x160xf32>
    %164 = tpu.matmul %161, %163, %cst_143 {dimension_numbers = #tpu.dot_dimension_numbers<[1], [0], [0], [1], [0, 0, 1, 1], [], []>} : vector<10x84xf32>, vector<84x160xf32>, vector<10x160xf32> -> vector<10x160xf32>
    %165 = vector.extract_strided_slice %160 {offsets = [1, 0], sizes = [10, 84], strides = [1, 1]} : vector<14x84xf32> to vector<10x84xf32>
    %c1_144 = arith.constant 1 : index
    %c0_145 = arith.constant 0 : index
    %c0_146 = arith.constant 0 : index
    %166 = vector.load %arg6[%c1_144, %c0_145, %c0_146] : memref<5x84x160xf32, #tpu.memory_space<vmem>>, vector<1x84x160xf32>
    %167 = vector.shape_cast %166 : vector<1x84x160xf32> to vector<84x160xf32>
    %cst_147 = arith.constant dense<0.000000e+00> : vector<10x160xf32>
    %168 = tpu.matmul %165, %167, %cst_147 {dimension_numbers = #tpu.dot_dimension_numbers<[1], [0], [0], [1], [0, 0, 1, 1], [], []>} : vector<10x84xf32>, vector<84x160xf32>, vector<10x160xf32> -> vector<10x160xf32>
    %169 = arith.addf %164, %168 : vector<10x160xf32>
    %170 = vector.extract_strided_slice %160 {offsets = [2, 0], sizes = [10, 84], strides = [1, 1]} : vector<14x84xf32> to vector<10x84xf32>
    %c2_148 = arith.constant 2 : index
    %c0_149 = arith.constant 0 : index
    %c0_150 = arith.constant 0 : index
    %171 = vector.load %arg6[%c2_148, %c0_149, %c0_150] : memref<5x84x160xf32, #tpu.memory_space<vmem>>, vector<1x84x160xf32>
    %172 = vector.shape_cast %171 : vector<1x84x160xf32> to vector<84x160xf32>
    %cst_151 = arith.constant dense<0.000000e+00> : vector<10x160xf32>
    %173 = tpu.matmul %170, %172, %cst_151 {dimension_numbers = #tpu.dot_dimension_numbers<[1], [0], [0], [1], [0, 0, 1, 1], [], []>} : vector<10x84xf32>, vector<84x160xf32>, vector<10x160xf32> -> vector<10x160xf32>
    %174 = arith.addf %169, %173 : vector<10x160xf32>
    %175 = vector.extract_strided_slice %160 {offsets = [3, 0], sizes = [10, 84], strides = [1, 1]} : vector<14x84xf32> to vector<10x84xf32>
    %c3_152 = arith.constant 3 : index
    %c0_153 = arith.constant 0 : index
    %c0_154 = arith.constant 0 : index
    %176 = vector.load %arg6[%c3_152, %c0_153, %c0_154] : memref<5x84x160xf32, #tpu.memory_space<vmem>>, vector<1x84x160xf32>
    %177 = vector.shape_cast %176 : vector<1x84x160xf32> to vector<84x160xf32>
    %cst_155 = arith.constant dense<0.000000e+00> : vector<10x160xf32>
    %178 = tpu.matmul %175, %177, %cst_155 {dimension_numbers = #tpu.dot_dimension_numbers<[1], [0], [0], [1], [0, 0, 1, 1], [], []>} : vector<10x84xf32>, vector<84x160xf32>, vector<10x160xf32> -> vector<10x160xf32>
    %179 = arith.addf %174, %178 : vector<10x160xf32>
    %180 = vector.extract_strided_slice %160 {offsets = [4, 0], sizes = [10, 84], strides = [1, 1]} : vector<14x84xf32> to vector<10x84xf32>
    %c4_156 = arith.constant 4 : index
    %c0_157 = arith.constant 0 : index
    %c0_158 = arith.constant 0 : index
    %181 = vector.load %arg6[%c4_156, %c0_157, %c0_158] : memref<5x84x160xf32, #tpu.memory_space<vmem>>, vector<1x84x160xf32>
    %182 = vector.shape_cast %181 : vector<1x84x160xf32> to vector<84x160xf32>
    %cst_159 = arith.constant dense<0.000000e+00> : vector<10x160xf32>
    %183 = tpu.matmul %180, %182, %cst_159 {dimension_numbers = #tpu.dot_dimension_numbers<[1], [0], [0], [1], [0, 0, 1, 1], [], []>} : vector<10x84xf32>, vector<84x160xf32>, vector<10x160xf32> -> vector<10x160xf32>
    %184 = arith.addf %179, %183 : vector<10x160xf32>
    %c0_160 = arith.constant 0 : index
    %c0_161 = arith.constant 0 : index
    %185 = vector.load %arg7[%c0_160, %c0_161] : memref<1x160xf32, #tpu.memory_space<vmem>>, vector<1x160xf32>
    %186 = vector.broadcast %185 : vector<1x160xf32> to vector<10x160xf32>
    %187 = arith.addf %184, %186 : vector<10x160xf32>
    %cst_162 = arith.constant 0.000000e+00 : f32
    %188 = vector.broadcast %cst_162 : f32 to vector<10x160xf32>
    %189 = arith.maximumf %187, %188 : vector<10x160xf32>
    %c0_163 = arith.constant 0 : index
    %c0_164 = arith.constant 0 : index
    %c0_165 = arith.constant 0 : index
    %190 = vector.load %arg8[%c0_163, %c0_164, %c0_165] : memref<2x5x10xf32, #tpu.memory_space<vmem>>, vector<1x5x10xf32>
    %191 = vector.shape_cast %190 : vector<1x5x10xf32> to vector<5x10xf32>
    %cst_166 = arith.constant dense<0.000000e+00> : vector<5x160xf32>
    %192 = tpu.matmul %191, %189, %cst_166 {dimension_numbers = #tpu.dot_dimension_numbers<[1], [0], [0], [1], [0, 0, 1, 1], [], []>} : vector<5x10xf32>, vector<10x160xf32>, vector<5x160xf32> -> vector<5x160xf32>
    %c1_167 = arith.constant 1 : index
    %c0_168 = arith.constant 0 : index
    %c0_169 = arith.constant 0 : index
    %193 = vector.load %arg8[%c1_167, %c0_168, %c0_169] : memref<2x5x10xf32, #tpu.memory_space<vmem>>, vector<1x5x10xf32>
    %194 = vector.shape_cast %193 : vector<1x5x10xf32> to vector<5x10xf32>
    %cst_170 = arith.constant dense<0.000000e+00> : vector<5x160xf32>
    %195 = tpu.matmul %194, %189, %cst_170 {dimension_numbers = #tpu.dot_dimension_numbers<[1], [0], [0], [1], [0, 0, 1, 1], [], []>} : vector<5x10xf32>, vector<10x160xf32>, vector<5x160xf32> -> vector<5x160xf32>
    %196 = arith.maximumf %192, %195 : vector<5x160xf32>
    %c0_171 = arith.constant 0 : index
    %c0_172 = arith.constant 0 : index
    %c0_173 = arith.constant 0 : index
    %197 = vector.load %arg9[%c0_171, %c0_172, %c0_173] : memref<2x160x80xf32, #tpu.memory_space<vmem>>, vector<1x160x80xf32>
    %198 = vector.shape_cast %197 : vector<1x160x80xf32> to vector<160x80xf32>
    %cst_174 = arith.constant dense<0.000000e+00> : vector<5x80xf32>
    %199 = tpu.matmul %196, %198, %cst_174 {dimension_numbers = #tpu.dot_dimension_numbers<[1], [0], [0], [1], [0, 0, 1, 1], [], []>} : vector<5x160xf32>, vector<160x80xf32>, vector<5x80xf32> -> vector<5x80xf32>
    %c1_175 = arith.constant 1 : index
    %c0_176 = arith.constant 0 : index
    %c0_177 = arith.constant 0 : index
    %200 = vector.load %arg9[%c1_175, %c0_176, %c0_177] : memref<2x160x80xf32, #tpu.memory_space<vmem>>, vector<1x160x80xf32>
    %201 = vector.shape_cast %200 : vector<1x160x80xf32> to vector<160x80xf32>
    %cst_178 = arith.constant dense<0.000000e+00> : vector<5x80xf32>
    %202 = tpu.matmul %196, %201, %cst_178 {dimension_numbers = #tpu.dot_dimension_numbers<[1], [0], [0], [1], [0, 0, 1, 1], [], []>} : vector<5x160xf32>, vector<160x80xf32>, vector<5x80xf32> -> vector<5x80xf32>
    %203 = arith.maximumf %199, %202 : vector<5x80xf32>
    %204 = vector.extract_strided_slice %203 {offsets = [0, 0], sizes = [1, 80], strides = [1, 1]} : vector<5x80xf32> to vector<1x80xf32>
    %c0_179 = arith.constant 0 : index
    %c0_180 = arith.constant 0 : index
    %c0_181 = arith.constant 0 : index
    %205 = vector.load %arg10[%c0_179, %c0_180, %c0_181] : memref<5x80x120xf32, #tpu.memory_space<vmem>>, vector<1x80x120xf32>
    %206 = vector.shape_cast %205 : vector<1x80x120xf32> to vector<80x120xf32>
    %cst_182 = arith.constant dense<0.000000e+00> : vector<1x120xf32>
    %207 = tpu.matmul %204, %206, %cst_182 {dimension_numbers = #tpu.dot_dimension_numbers<[1], [0], [0], [1], [0, 0, 1, 1], [], []>} : vector<1x80xf32>, vector<80x120xf32>, vector<1x120xf32> -> vector<1x120xf32>
    %208 = vector.extract_strided_slice %203 {offsets = [1, 0], sizes = [1, 80], strides = [1, 1]} : vector<5x80xf32> to vector<1x80xf32>
    %c1_183 = arith.constant 1 : index
    %c0_184 = arith.constant 0 : index
    %c0_185 = arith.constant 0 : index
    %209 = vector.load %arg10[%c1_183, %c0_184, %c0_185] : memref<5x80x120xf32, #tpu.memory_space<vmem>>, vector<1x80x120xf32>
    %210 = vector.shape_cast %209 : vector<1x80x120xf32> to vector<80x120xf32>
    %cst_186 = arith.constant dense<0.000000e+00> : vector<1x120xf32>
    %211 = tpu.matmul %208, %210, %cst_186 {dimension_numbers = #tpu.dot_dimension_numbers<[1], [0], [0], [1], [0, 0, 1, 1], [], []>} : vector<1x80xf32>, vector<80x120xf32>, vector<1x120xf32> -> vector<1x120xf32>
    %212 = arith.addf %207, %211 : vector<1x120xf32>
    %213 = vector.extract_strided_slice %203 {offsets = [2, 0], sizes = [1, 80], strides = [1, 1]} : vector<5x80xf32> to vector<1x80xf32>
    %c2_187 = arith.constant 2 : index
    %c0_188 = arith.constant 0 : index
    %c0_189 = arith.constant 0 : index
    %214 = vector.load %arg10[%c2_187, %c0_188, %c0_189] : memref<5x80x120xf32, #tpu.memory_space<vmem>>, vector<1x80x120xf32>
    %215 = vector.shape_cast %214 : vector<1x80x120xf32> to vector<80x120xf32>
    %cst_190 = arith.constant dense<0.000000e+00> : vector<1x120xf32>
    %216 = tpu.matmul %213, %215, %cst_190 {dimension_numbers = #tpu.dot_dimension_numbers<[1], [0], [0], [1], [0, 0, 1, 1], [], []>} : vector<1x80xf32>, vector<80x120xf32>, vector<1x120xf32> -> vector<1x120xf32>
    %217 = arith.addf %212, %216 : vector<1x120xf32>
    %218 = vector.extract_strided_slice %203 {offsets = [3, 0], sizes = [1, 80], strides = [1, 1]} : vector<5x80xf32> to vector<1x80xf32>
    %c3_191 = arith.constant 3 : index
    %c0_192 = arith.constant 0 : index
    %c0_193 = arith.constant 0 : index
    %219 = vector.load %arg10[%c3_191, %c0_192, %c0_193] : memref<5x80x120xf32, #tpu.memory_space<vmem>>, vector<1x80x120xf32>
    %220 = vector.shape_cast %219 : vector<1x80x120xf32> to vector<80x120xf32>
    %cst_194 = arith.constant dense<0.000000e+00> : vector<1x120xf32>
    %221 = tpu.matmul %218, %220, %cst_194 {dimension_numbers = #tpu.dot_dimension_numbers<[1], [0], [0], [1], [0, 0, 1, 1], [], []>} : vector<1x80xf32>, vector<80x120xf32>, vector<1x120xf32> -> vector<1x120xf32>
    %222 = arith.addf %217, %221 : vector<1x120xf32>
    %223 = vector.extract_strided_slice %203 {offsets = [4, 0], sizes = [1, 80], strides = [1, 1]} : vector<5x80xf32> to vector<1x80xf32>
    %c4_195 = arith.constant 4 : index
    %c0_196 = arith.constant 0 : index
    %c0_197 = arith.constant 0 : index
    %224 = vector.load %arg10[%c4_195, %c0_196, %c0_197] : memref<5x80x120xf32, #tpu.memory_space<vmem>>, vector<1x80x120xf32>
    %225 = vector.shape_cast %224 : vector<1x80x120xf32> to vector<80x120xf32>
    %cst_198 = arith.constant dense<0.000000e+00> : vector<1x120xf32>
    %226 = tpu.matmul %223, %225, %cst_198 {dimension_numbers = #tpu.dot_dimension_numbers<[1], [0], [0], [1], [0, 0, 1, 1], [], []>} : vector<1x80xf32>, vector<80x120xf32>, vector<1x120xf32> -> vector<1x120xf32>
    %227 = arith.addf %222, %226 : vector<1x120xf32>
    %c0_199 = arith.constant 0 : index
    %c0_200 = arith.constant 0 : index
    %228 = vector.load %arg11[%c0_199, %c0_200] : memref<1x120xf32, #tpu.memory_space<vmem>>, vector<1x120xf32>
    %229 = arith.addf %227, %228 : vector<1x120xf32>
    %cst_201 = arith.constant 0.000000e+00 : f32
    %230 = vector.broadcast %cst_201 : f32 to vector<1x120xf32>
    %231 = arith.maximumf %229, %230 : vector<1x120xf32>
    %232 = tpu.concatenate %115, %231 in 0 : vector<1x120xf32>, vector<1x120xf32> -> vector<2x120xf32>
    %c0_202 = arith.constant 0 : index
    %c0_203 = arith.constant 0 : index
    %233 = vector.load %arg12[%c0_202, %c0_203] : memref<120x84xf32, #tpu.memory_space<vmem>>, vector<120x84xf32>
    %cst_204 = arith.constant dense<0.000000e+00> : vector<2x84xf32>
    %234 = tpu.matmul %232, %233, %cst_204 {dimension_numbers = #tpu.dot_dimension_numbers<[1], [0], [0], [1], [0, 0, 1, 1], [], []>} : vector<2x120xf32>, vector<120x84xf32>, vector<2x84xf32> -> vector<2x84xf32>
    %c0_205 = arith.constant 0 : index
    %c0_206 = arith.constant 0 : index
    %235 = vector.load %arg13[%c0_205, %c0_206] : memref<1x84xf32, #tpu.memory_space<vmem>>, vector<1x84xf32>
    %236 = vector.broadcast %235 : vector<1x84xf32> to vector<2x84xf32>
    %237 = arith.addf %234, %236 : vector<2x84xf32>
    %cst_207 = arith.constant 0.000000e+00 : f32
    %238 = vector.broadcast %cst_207 : f32 to vector<2x84xf32>
    %239 = arith.maximumf %237, %238 : vector<2x84xf32>
    %c0_208 = arith.constant 0 : index
    %c0_209 = arith.constant 0 : index
    %240 = vector.load %arg14[%c0_208, %c0_209] : memref<84x128xf32, #tpu.memory_space<vmem>>, vector<84x128xf32>
    %cst_210 = arith.constant dense<0.000000e+00> : vector<2x128xf32>
    %241 = tpu.matmul %239, %240, %cst_210 {dimension_numbers = #tpu.dot_dimension_numbers<[1], [0], [0], [1], [0, 0, 1, 1], [], []>} : vector<2x84xf32>, vector<84x128xf32>, vector<2x128xf32> -> vector<2x128xf32>
    %c0_211 = arith.constant 0 : index
    %c0_212 = arith.constant 0 : index
    %242 = vector.load %arg15[%c0_211, %c0_212] : memref<1x128xf32, #tpu.memory_space<vmem>>, vector<1x128xf32>
    %243 = vector.broadcast %242 : vector<1x128xf32> to vector<2x128xf32>
    %244 = arith.addf %241, %243 : vector<2x128xf32>
    %c0_213 = arith.constant 0 : index
    %c0_214 = arith.constant 0 : index
    %245 = vector.load %arg16[%c0_213, %c0_214] : memref<2x128xf32, #tpu.memory_space<vmem>>, vector<2x128xf32>
    tpu.vector_store %arg16[%c0_213, %c0_214], %244 {strides = array<i32>} : memref<2x128xf32, #tpu.memory_space<vmem>>, vector<2x128xf32>,
    return
  }
  func.func @transform_0(%arg0: i32) -> (i32, i32, i32) {
    %c0_i32 = arith.constant 0 : i32
    %c0_i32_0 = arith.constant 0 : i32
    %c0_i32_1 = arith.constant 0 : i32
    return %arg0, %c0_i32, %c0_i32_0 : i32, i32, i32
  }
  func.func @transform_1(%arg0: i32) -> (i32, i32, i32) {
    %c0_i32 = arith.constant 0 : i32
    %c0_i32_0 = arith.constant 0 : i32
    %c0_i32_1 = arith.constant 0 : i32
    %c0_i32_2 = arith.constant 0 : i32
    return %c0_i32, %c0_i32_0, %c0_i32_1 : i32, i32, i32
  }
  func.func @transform_2(%arg0: i32) -> (i32, i32) {
    %c0_i32 = arith.constant 0 : i32
    %c0_i32_0 = arith.constant 0 : i32
    %c0_i32_1 = arith.constant 0 : i32
    return %c0_i32, %c0_i32_0 : i32, i32
  }
  func.func @transform_3(%arg0: i32) -> (i32, i32, i32) {
    %c0_i32 = arith.constant 0 : i32
    %c0_i32_0 = arith.constant 0 : i32
    %c0_i32_1 = arith.constant 0 : i32
    %c0_i32_2 = arith.constant 0 : i32
    return %c0_i32, %c0_i32_0, %c0_i32_1 : i32, i32, i32
  }
  func.func @transform_4(%arg0: i32) -> (i32, i32, i32) {
    %c0_i32 = arith.constant 0 : i32
    %c0_i32_0 = arith.constant 0 : i32
    %c0_i32_1 = arith.constant 0 : i32
    %c0_i32_2 = arith.constant 0 : i32
    return %c0_i32, %c0_i32_0, %c0_i32_1 : i32, i32, i32
  }
  func.func @transform_5(%arg0: i32) -> (i32, i32, i32) {
    %c0_i32 = arith.constant 0 : i32
    %c0_i32_0 = arith.constant 0 : i32
    %c0_i32_1 = arith.constant 0 : i32
    %c0_i32_2 = arith.constant 0 : i32
    return %c0_i32, %c0_i32_0, %c0_i32_1 : i32, i32, i32
  }
  func.func @transform_6(%arg0: i32) -> (i32, i32) {
    %c0_i32 = arith.constant 0 : i32
    %c0_i32_0 = arith.constant 0 : i32
    %c0_i32_1 = arith.constant 0 : i32
    return %c0_i32, %c0_i32_0 : i32, i32
  }
  func.func @transform_7(%arg0: i32) -> (i32, i32, i32) {
    %c0_i32 = arith.constant 0 : i32
    %c0_i32_0 = arith.constant 0 : i32
    %c0_i32_1 = arith.constant 0 : i32
    %c0_i32_2 = arith.constant 0 : i32
    return %c0_i32, %c0_i32_0, %c0_i32_1 : i32, i32, i32
  }
  func.func @transform_8(%arg0: i32) -> (i32, i32, i32) {
    %c0_i32 = arith.constant 0 : i32
    %c0_i32_0 = arith.constant 0 : i32
    %c0_i32_1 = arith.constant 0 : i32
    %c0_i32_2 = arith.constant 0 : i32
    return %c0_i32, %c0_i32_0, %c0_i32_1 : i32, i32, i32
  }
  func.func @transform_9(%arg0: i32) -> (i32, i32, i32) {
    %c0_i32 = arith.constant 0 : i32
    %c0_i32_0 = arith.constant 0 : i32
    %c0_i32_1 = arith.constant 0 : i32
    %c0_i32_2 = arith.constant 0 : i32
    return %c0_i32, %c0_i32_0, %c0_i32_1 : i32, i32, i32
  }
  func.func @transform_10(%arg0: i32) -> (i32, i32) {
    %c0_i32 = arith.constant 0 : i32
    %c0_i32_0 = arith.constant 0 : i32
    %c0_i32_1 = arith.constant 0 : i32
    return %c0_i32, %c0_i32_0 : i32, i32
  }
  func.func @transform_11(%arg0: i32) -> (i32, i32) {
    %c0_i32 = arith.constant 0 : i32
    %c0_i32_0 = arith.constant 0 : i32
    %c0_i32_1 = arith.constant 0 : i32
    return %c0_i32, %c0_i32_0 : i32, i32
  }
  func.func @transform_12(%arg0: i32) -> (i32, i32) {
    %c0_i32 = arith.constant 0 : i32
    %c0_i32_0 = arith.constant 0 : i32
    %c0_i32_1 = arith.constant 0 : i32
    return %c0_i32, %c0_i32_0 : i32, i32
  }
  func.func @transform_13(%arg0: i32) -> (i32, i32) {
    %c0_i32 = arith.constant 0 : i32
    %c0_i32_0 = arith.constant 0 : i32
    %c0_i32_1 = arith.constant 0 : i32
    return %c0_i32, %c0_i32_0 : i32, i32
  }
  func.func @transform_14(%arg0: i32) -> (i32, i32) {
    %c0_i32 = arith.constant 0 : i32
    %c0_i32_0 = arith.constant 0 : i32
    %c0_i32_1 = arith.constant 0 : i32
    return %c0_i32, %c0_i32_0 : i32, i32
  }
  func.func @transform_15(%arg0: i32) -> (i32, i32) {
    %c0_i32 = arith.constant 0 : i32
    %c0_i32_0 = arith.constant 0 : i32
    return %arg0, %c0_i32 : i32, i32
  }
}

</mosaic_0001>

<llo_original>
// kernel: lenetq_forward.1
$region0: #{lenetq_forward.1}
  #allocation0 [shape = 'u32[]', space=smem, size = 0x4, offset = 0x4, fixed_abs, tag = 'smem constant byte address 0x4 - core index']
  #allocation1 [shape = 'u32[144,128]{1,0:T(1,128)}', space=vmem, size = 0x12000, scoped, tag = 'internal scratch']
  %s0 = inlined_call_operand.vmem [shape: f32[2,32,96], index: 0, kind: input, shape index: {}]
  %s1 = inlined_call_operand.vmem [shape: f32[5,96,168], index: 1, kind: input, shape index: {}]
  %s2 = inlined_call_operand.vmem [shape: f32[1,168], index: 2, kind: input, shape index: {}]
  %s3 = inlined_call_operand.vmem [shape: f32[2,14,28], index: 3, kind: input, shape index: {}]
  %s4 = inlined_call_operand.vmem [shape: f32[2,168,84], index: 4, kind: input, shape index: {}]
  %s5 = inlined_call_operand.vmem [shape: f32[5,84,160], index: 5, kind: input, shape index: {}]
  %s6 = inlined_call_operand.vmem [shape: f32[1,160], index: 6, kind: input, shape index: {}]
  %s7 = inlined_call_operand.vmem [shape: f32[2,5,10], index: 7, kind: input, shape index: {}]
  %s8 = inlined_call_operand.vmem [shape: f32[2,160,80], index: 8, kind: input, shape index: {}]
  %s9 = inlined_call_operand.vmem [shape: f32[5,80,120], index: 9, kind: input, shape index: {}]
  %s10 = inlined_call_operand.vmem [shape: f32[1,120], index: 10, kind: input, shape index: {}]
  %s11 = inlined_call_operand.vmem [shape: f32[120,84], index: 11, kind: input, shape index: {}]
  %s12 = inlined_call_operand.vmem [shape: f32[1,84], index: 12, kind: input, shape index: {}]
  %s13 = inlined_call_operand.vmem [shape: f32[84,128], index: 13, kind: input, shape index: {}]
  %s14 = inlined_call_operand.vmem [shape: f32[1,128], index: 14, kind: input, shape index: {}]
  %s15 = inlined_call_operand.hbm [shape: f32[2,128], index: 15, kind: output, shape index: {}]
  %s16 = sld [smem:[#allocation0]]
  $region70: #{lenetq_forward.1} parent=0
    _
  %s18 = ssub.s32 1, %s16
  %s19 = scalar_select 0, %s18, %s16
  $region1: #{lenetq_forward.1} parent=0
    #allocation2 [shape = 'u8[1024]{0}', space=vmem, size = 0x400, scoped, tag = 'output window, operand 0, single buffered']
    #allocation3 [shape = 's32[1]{0}', space=sflag, size = 0x4, scoped, tag = 'scoped memory for lenetq_forward.1']
    %20 = vsyncpa [#allocation3], 0
    // Predicated region
    $region2: #{lenetq_forward.1} parent=1 // pred_check
      _
    $region3: #{lenetq_forward.1} parent=1 // pred_check_branch
      %22 = sbr.rel (0) target = $region5
    $region4: #{lenetq_forward.1} parent=1 // pred_region
      _
    $region5: #{lenetq_forward.1} parent=1 // pred_fallthru
      _
    // Predicated region
    $region6: #{lenetq_forward.1} parent=1 // pred_check
      _
    $region7: #{lenetq_forward.1} parent=1 // pred_check_branch
      %24 = sbr.rel (0) target = $region9
    $region8: #{lenetq_forward.1} parent=1 // pred_region
      _
    $region9: #{lenetq_forward.1} parent=1 // pred_fallthru
      _
    // Predicated region
    $region10: #{lenetq_forward.1} parent=1 // pred_check
      _
    $region11: #{lenetq_forward.1} parent=1 // pred_check_branch
      %26 = sbr.rel (0) target = $region13
    $region12: #{lenetq_forward.1} parent=1 // pred_region
      _
    $region13: #{lenetq_forward.1} parent=1 // pred_fallthru
      _
    // Predicated region
    $region14: #{lenetq_forward.1} parent=1 // pred_check
      _
    $region15: #{lenetq_forward.1} parent=1 // pred_check_branch
      %28 = sbr.rel (0) target = $region17
    $region16: #{lenetq_forward.1} parent=1 // pred_region
      _
    $region17: #{lenetq_forward.1} parent=1 // pred_fallthru
      _
    // Predicated region
    $region18: #{lenetq_forward.1} parent=1 // pred_check
      _
    $region19: #{lenetq_forward.1} parent=1 // pred_check_branch
      %30 = sbr.rel (0) target = $region21
    $region20: #{lenetq_forward.1} parent=1 // pred_region
      _
    $region21: #{lenetq_forward.1} parent=1 // pred_fallthru
      _
    // Predicated region
    $region22: #{lenetq_forward.1} parent=1 // pred_check
      _
    $region23: #{lenetq_forward.1} parent=1 // pred_check_branch
      %32 = sbr.rel (0) target = $region25
    $region24: #{lenetq_forward.1} parent=1 // pred_region
      _
    $region25: #{lenetq_forward.1} parent=1 // pred_fallthru
      _
    // Predicated region
    $region26: #{lenetq_forward.1} parent=1 // pred_check
      _
    $region27: #{lenetq_forward.1} parent=1 // pred_check_branch
      %34 = sbr.rel (0) target = $region29
    $region28: #{lenetq_forward.1} parent=1 // pred_region
      _
    $region29: #{lenetq_forward.1} parent=1 // pred_fallthru
      _
    // Predicated region
    $region30: #{lenetq_forward.1} parent=1 // pred_check
      _
    $region31: #{lenetq_forward.1} parent=1 // pred_check_branch
      %36 = sbr.rel (0) target = $region33
    $region32: #{lenetq_forward.1} parent=1 // pred_region
      _
    $region33: #{lenetq_forward.1} parent=1 // pred_fallthru
      _
    // Predicated region
    $region34: #{lenetq_forward.1} parent=1 // pred_check
      _
    $region35: #{lenetq_forward.1} parent=1 // pred_check_branch
      %38 = sbr.rel (0) target = $region37
    $region36: #{lenetq_forward.1} parent=1 // pred_region
      _
    $region37: #{lenetq_forward.1} parent=1 // pred_fallthru
      _
    // Predicated region
    $region38: #{lenetq_forward.1} parent=1 // pred_check
      _
    $region39: #{lenetq_forward.1} parent=1 // pred_check_branch
      %40 = sbr.rel (0) target = $region41
    $region40: #{lenetq_forward.1} parent=1 // pred_region
      _
    $region41: #{lenetq_forward.1} parent=1 // pred_fallthru
      _
    // Predicated region
    $region42: #{lenetq_forward.1} parent=1 // pred_check
      _
    $region43: #{lenetq_forward.1} parent=1 // pred_check_branch
      %42 = sbr.rel (0) target = $region45
    $region44: #{lenetq_forward.1} parent=1 // pred_region
      _
    $region45: #{lenetq_forward.1} parent=1 // pred_fallthru
      _
    // Predicated region
    $region46: #{lenetq_forward.1} parent=1 // pred_check
      _
    $region47: #{lenetq_forward.1} parent=1 // pred_check_branch
      %44 = sbr.rel (0) target = $region49
    $region48: #{lenetq_forward.1} parent=1 // pred_region
      _
    $region49: #{lenetq_forward.1} parent=1 // pred_fallthru
      _
    // Predicated region
    $region50: #{lenetq_forward.1} parent=1 // pred_check
      _
    $region51: #{lenetq_forward.1} parent=1 // pred_check_branch
      %46 = sbr.rel (0) target = $region53
    $region52: #{lenetq_forward.1} parent=1 // pred_region
      _
    $region53: #{lenetq_forward.1} parent=1 // pred_fallthru
      _
    // Predicated region
    $region54: #{lenetq_forward.1} parent=1 // pred_check
      _
    $region55: #{lenetq_forward.1} parent=1 // pred_check_branch
      %48 = sbr.rel (0) target = $region57
    $region56: #{lenetq_forward.1} parent=1 // pred_region
      _
    $region57: #{lenetq_forward.1} parent=1 // pred_fallthru
      _
    // Predicated region
    $region58: #{lenetq_forward.1} parent=1 // pred_check
      _
    $region59: #{lenetq_forward.1} parent=1 // pred_check_branch
      %50 = sbr.rel (0) target = $region61
    $region60: #{lenetq_forward.1} parent=1 // pred_region
      _
    $region61: #{lenetq_forward.1} parent=1 // pred_fallthru
      _
    %v51 = vld [vmem:[%s0] sm:$0xff]
    %v52 = vld [vmem:[%s0 + $0x8] sm:$0xff]
    %v53 = vld [vmem:[%s0 + $0x10] sm:$0xff]
    %v54 = vld [vmem:[%s0 + $0x18] sm:$0xff]
    %v55 = vld [vmem:[%s1] sm:$0xff]
    %v56 = vld [vmem:[%s1 + $0x8] sm:$0xff]
    %v57 = vld [vmem:[%s1 + $0x10] sm:$0xff]
    %v58 = vld [vmem:[%s1 + $0x18] sm:$0xff]
    %v59 = vld [vmem:[%s1 + $0x20] sm:$0xff]
    %v60 = vld [vmem:[%s1 + $0x28] sm:$0xff]
    %v61 = vld [vmem:[%s1 + $0x30] sm:$0xff]
    %v62 = vld [vmem:[%s1 + $0x38] sm:$0xff]
    %v63 = vld [vmem:[%s1 + $0x40] sm:$0xff]
    %v64 = vld [vmem:[%s1 + $0x48] sm:$0xff]
    %v65 = vld [vmem:[%s1 + $0x50] sm:$0xff]
    %v66 = vld [vmem:[%s1 + $0x58] sm:$0xff]
    %v67 = vld [vmem:[%s1 + $0x60] sm:$0xff]
    %v68 = vld [vmem:[%s1 + $0x68] sm:$0xff]
    %v69 = vld [vmem:[%s1 + $0x70] sm:$0xff]
    %v70 = vld [vmem:[%s1 + $0x78] sm:$0xff]
    %v71 = vld [vmem:[%s1 + $0x80] sm:$0xff]
    %v72 = vld [vmem:[%s1 + $0x88] sm:$0xff]
    %v73 = vld [vmem:[%s1 + $0x90] sm:$0xff]
    %v74 = vld [vmem:[%s1 + $0x98] sm:$0xff]
    %v75 = vld [vmem:[%s1 + $0xa0] sm:$0xff]
    %v76 = vld [vmem:[%s1 + $0xa8] sm:$0xff]
    %v77 = vld [vmem:[%s1 + $0xb0] sm:$0xff]
    %v78 = vld [vmem:[%s1 + $0xb8] sm:$0xff]
    %s79 = scalar_lea.vmem %s1, 192
    %v80 = vld [vmem:[%s79] sm:$0xff]
    %v81 = vld [vmem:[%s79 + $0x8] sm:$0xff]
    %v82 = vld [vmem:[%s79 + $0x10] sm:$0xff]
    %v83 = vld [vmem:[%s79 + $0x18] sm:$0xff]
    %v84 = vld [vmem:[%s79 + $0x20] sm:$0xff]
    %v85 = vld [vmem:[%s79 + $0x28] sm:$0xff]
    %v86 = vld [vmem:[%s79 + $0x30] sm:$0xff]
    %v87 = vld [vmem:[%s79 + $0x38] sm:$0xff]
    %v88 = vld [vmem:[%s79 + $0x40] sm:$0xff]
    %v89 = vld [vmem:[%s79 + $0x48] sm:$0xff]
    %v90 = vld [vmem:[%s79 + $0x50] sm:$0xff]
    %v91 = vld [vmem:[%s79 + $0x58] sm:$0xff]
    %v92 = vld [vmem:[%s79 + $0x60] sm:$0xff]
    %v93 = vld [vmem:[%s79 + $0x68] sm:$0xff]
    %v94 = vld [vmem:[%s79 + $0x70] sm:$0xff]
    %v95 = vld [vmem:[%s79 + $0x78] sm:$0xff]
    %v96 = vld [vmem:[%s79 + $0x80] sm:$0xff]
    %v97 = vld [vmem:[%s79 + $0x88] sm:$0xff]
    %v98 = vld [vmem:[%s79 + $0x90] sm:$0xff]
    %v99 = vld [vmem:[%s79 + $0x98] sm:$0xff]
    %v100 = vld [vmem:[%s79 + $0xa0] sm:$0xff]
    %v101 = vld [vmem:[%s79 + $0xa8] sm:$0xff]
    %v102 = vld [vmem:[%s79 + $0xb0] sm:$0xff]
    %v103 = vld [vmem:[%s79 + $0xb8] sm:$0xff]
    %vm108 = vcmask 1046528
    %v109 = vrot.slane %v51, 1
    %v110 = vrot.slane %v52, 1
    %v111 = vsel %vm108, %v109, %v110
    %v112 = vrot.slane %v53, 1
    %v113 = vsel %vm108, %v110, %v112
    %v114 = vrot.slane %v54, 1
    %v115 = vsel %vm108, %v112, %v114
    %vm116 = vcmask 785408
    %v117 = vsel %vm116, %v111, 0
    %v119 = vsel %vm116, %v113, 0
    %v121 = vsel %vm116, %v115, 0
    %v123 = vsel %vm116, %v114, 0
    %125 = vmatprep.subr.mxu0 0.0
    %126 = vmatpush1.msra.mxu0 0.0
    %127 = vmatprep.subr.mxu0 0.0
    %128 = vmatpush1.msra.mxu0 0.0
    %129 = vmatprep.subr.mxu0 0.0
    %130 = vmatpush1.msra.mxu0 0.0
    %131 = vmatprep.subr.mxu0 0.0
    %132 = vmatpush1.msra.mxu0 0.0
    %133 = vmatprep.subr.mxu0 %v103
    %134 = vmatpush1.msra.mxu0 %v102
    %135 = vmatprep.subr.mxu0 %v101
    %136 = vmatpush1.msra.mxu0 %v100
    %137 = vmatprep.subr.mxu0 %v99
    %138 = vmatpush1.msra.mxu0 %v98
    %139 = vmatprep.subr.mxu0 %v97
    %140 = vmatpush1.msra.mxu0 %v96
    %141 = vmatprep.subr.mxu0 %v95
    %142 = vmatpush1.msra.mxu0 %v94
    %143 = vmatprep.subr.mxu0 %v93
    %144 = vmatpush1.msra.mxu0 %v92
    %145 = vmatprep.subr.mxu0 %v91
    %146 = vmatpush1.msra.mxu0 %v90
    %147 = vmatprep.subr.mxu0 %v89
    %148 = vmatpush1.msra.mxu0 %v88
    %149 = vmatprep.subr.mxu0 %v87
    %150 = vmatpush1.msra.mxu0 %v86
    %151 = vmatprep.subr.mxu0 %v85
    %152 = vmatpush1.msra.mxu0 %v84
    %153 = vmatprep.subr.mxu0 %v83
    %154 = vmatpush1.msra.mxu0 %v82
    %155 = vmatprep.subr.mxu0 %v81
    %156 = vmatpush1.msra.mxu0 %v80
    %157 = vmatprep.subr.mxu0 0.0
    %158 = vmatpush2.msra.mxu0 0.0
    %159 = vmatprep.subr.mxu0 0.0
    %160 = vmatpush2.msra.mxu0 0.0
    %161 = vmatprep.subr.mxu0 0.0
    %162 = vmatpush2.msra.mxu0 0.0
    %163 = vmatprep.subr.mxu0 0.0
    %164 = vmatpush2.msra.mxu0 0.0
    %165 = vmatprep.subr.mxu0 0.0
    %166 = vmatpush2.msra.mxu0 0.0
    %167 = vmatprep.subr.mxu0 0.0
    %168 = vmatpush2.msra.mxu0 0.0
    %169 = vmatprep.subr.mxu0 0.0
    %170 = vmatpush2.msra.mxu0 0.0
    %171 = vmatprep.subr.mxu0 0.0
    %172 = vmatpush2.msra.mxu0 0.0
    %173 = vmatprep.subr.mxu0 0.0
    %174 = vmatpush2.msra.mxu0 0.0
    %175 = vmatprep.subr.mxu0 0.0
    %176 = vmatpush2.msra.mxu0 0.0
    %177 = vmatprep.subr.mxu0 0.0
    %178 = vmatpush2.msra.mxu0 0.0
    %179 = vmatprep.subr.mxu0 0.0
    %180 = vmatpush2.msra.mxu0 0.0
    %181 = vmatprep.subr.mxu0 0.0
    %182 = vmatpush2.msra.mxu0 0.0
    %183 = vmatprep.subr.mxu0 0.0
    %184 = vmatpush2.msra.mxu0 0.0
    %185 = vmatprep.subr.mxu0 0.0
    %186 = vmatpush2.msra.mxu0 0.0
    %187 = vmatprep.subr.mxu0 0.0
    %188 = vmatpush2.msra.mxu0 0.0
    %189 = vmatprep.mubr.f32.mxu0 0.0
    %190 = vmatmul.mubr.f32.gmra.mxu0 %v117
    %v191 = vpop.f32.mrf.mxu0
    %v192 = vadd.f32 0.0, %v191
    %v193 = vpop.f32.mrf.mxu0
    %v194 = vadd.f32 0.0, %v193
    %195 = vmatprep.mubr.f32.mxu0 0.0
    %196 = vmatmul.mubr.f32.gmra.mxu0 %v119
    %v197 = vpop.f32.mrf.mxu0
    %v198 = vadd.f32 0.0, %v197
    %v199 = vpop.f32.mrf.mxu0
    %v200 = vadd.f32 0.0, %v199
    %201 = vmatprep.mubr.f32.mxu0 0.0
    %202 = vmatmul.mubr.f32.gmra.mxu0 %v121
    %v203 = vpop.f32.mrf.mxu0
    %v204 = vadd.f32 0.0, %v203
    %v205 = vpop.f32.mrf.mxu0
    %v206 = vadd.f32 0.0, %v205
    %207 = vmatprep.mubr.f32.mxu0 0.0
    %208 = vmatmul.mubr.f32.gmra.mxu0 %v123
    %v209 = vpop.f32.mrf.mxu0
    %v210 = vadd.f32 0.0, %v209
    %v211 = vpop.f32.mrf.mxu0
    %v212 = vadd.f32 0.0, %v211
    %213 = vdwg.mxu0
    %v214 = vsel %vm116, %v51, 0
    %v216 = vsel %vm116, %v52, 0
    %v218 = vsel %vm116, %v53, 0
    %v220 = vsel %vm116, %v54, 0
    %222 = vmatprep.subr.mxu0 0.0
    %223 = vmatpush1.msra.mxu0 0.0
    %224 = vmatprep.subr.mxu0 0.0
    %225 = vmatpush1.msra.mxu0 0.0
    %226 = vmatprep.subr.mxu0 0.0
    %227 = vmatpush1.msra.mxu0 0.0
    %228 = vmatprep.subr.mxu0 0.0
    %229 = vmatpush1.msra.mxu0 0.0
    %230 = vmatprep.subr.mxu0 %v78
    %231 = vmatpush1.msra.mxu0 %v77
    %232 = vmatprep.subr.mxu0 %v76
    %233 = vmatpush1.msra.mxu0 %v75
    %234 = vmatprep.subr.mxu0 %v74
    %235 = vmatpush1.msra.mxu0 %v73
    %236 = vmatprep.subr.mxu0 %v72
    %237 = vmatpush1.msra.mxu0 %v71
    %238 = vmatprep.subr.mxu0 %v70
    %239 = vmatpush1.msra.mxu0 %v69
    %240 = vmatprep.subr.mxu0 %v68
    %241 = vmatpush1.msra.mxu0 %v67
    %242 = vmatprep.subr.mxu0 %v66
    %243 = vmatpush1.msra.mxu0 %v65
    %244 = vmatprep.subr.mxu0 %v64
    %245 = vmatpush1.msra.mxu0 %v63
    %246 = vmatprep.subr.mxu0 %v62
    %247 = vmatpush1.msra.mxu0 %v61
    %248 = vmatprep.subr.mxu0 %v60
    %249 = vmatpush1.msra.mxu0 %v59
    %250 = vmatprep.subr.mxu0 %v58
    %251 = vmatpush1.msra.mxu0 %v57
    %252 = vmatprep.subr.mxu0 %v56
    %253 = vmatpush1.msra.mxu0 %v55
    %254 = vmatprep.subr.mxu0 0.0
    %255 = vmatpush2.msra.mxu0 0.0
    %256 = vmatprep.subr.mxu0 0.0
    %257 = vmatpush2.msra.mxu0 0.0
    %258 = vmatprep.subr.mxu0 0.0
    %259 = vmatpush2.msra.mxu0 0.0
    %260 = vmatprep.subr.mxu0 0.0
    %261 = vmatpush2.msra.mxu0 0.0
    %262 = vmatprep.subr.mxu0 0.0
    %263 = vmatpush2.msra.mxu0 0.0
    %264 = vmatprep.subr.mxu0 0.0
    %265 = vmatpush2.msra.mxu0 0.0
    %266 = vmatprep.subr.mxu0 0.0
    %267 = vmatpush2.msra.mxu0 0.0
    %268 = vmatprep.subr.mxu0 0.0
    %269 = vmatpush2.msra.mxu0 0.0
    %270 = vmatprep.subr.mxu0 0.0
    %271 = vmatpush2.msra.mxu0 0.0
    %272 = vmatprep.subr.mxu0 0.0
    %273 = vmatpush2.msra.mxu0 0.0
    %274 = vmatprep.subr.mxu0 0.0
    %275 = vmatpush2.msra.mxu0 0.0
    %276 = vmatprep.subr.mxu0 0.0
    %277 = vmatpush2.msra.mxu0 0.0
    %278 = vmatprep.subr.mxu0 0.0
    %279 = vmatpush2.msra.mxu0 0.0
    %280 = vmatprep.subr.mxu0 0.0
    %281 = vmatpush2.msra.mxu0 0.0
    %282 = vmatprep.subr.mxu0 0.0
    %283 = vmatpush2.msra.mxu0 0.0
    %284 = vmatprep.subr.mxu0 0.0
    %285 = vmatpush2.msra.mxu0 0.0
    %286 = vmatprep.mubr.f32.mxu0 0.0
    %287 = vmatmul.mubr.f32.gmra.mxu0 %v214
    %v288 = vpop.f32.mrf.mxu0
    %v289 = vadd.f32 %v192, %v288
    %v290 = vpop.f32.mrf.mxu0
    %v291 = vadd.f32 %v194, %v290
    %292 = vmatprep.mubr.f32.mxu0 0.0
    %293 = vmatmul.mubr.f32.gmra.mxu0 %v216
    %v294 = vpop.f32.mrf.mxu0
    %v295 = vadd.f32 %v198, %v294
    %v296 = vpop.f32.mrf.mxu0
    %v297 = vadd.f32 %v200, %v296
    %298 = vmatprep.mubr.f32.mxu0 0.0
    %299 = vmatmul.mubr.f32.gmra.mxu0 %v218
    %v300 = vpop.f32.mrf.mxu0
    %v301 = vadd.f32 %v204, %v300
    %v302 = vpop.f32.mrf.mxu0
    %v303 = vadd.f32 %v206, %v302
    %304 = vmatprep.mubr.f32.mxu0 0.0
    %305 = vmatmul.mubr.f32.gmra.mxu0 %v220
    %v306 = vpop.f32.mrf.mxu0
    %v307 = vadd.f32 %v210, %v306
    %v308 = vpop.f32.mrf.mxu0
    %v309 = vadd.f32 %v212, %v308
    %310 = vdwg.mxu0
    %s311 = scalar_lea.vmem %s1, 384
    %v312 = vld [vmem:[%s311] sm:$0xff]
    %v313 = vld [vmem:[%s311 + $0x8] sm:$0xff]
    %v314 = vld [vmem:[%s311 + $0x10] sm:$0xff]
    %v315 = vld [vmem:[%s311 + $0x18] sm:$0xff]
    %v316 = vld [vmem:[%s311 + $0x20] sm:$0xff]
    %v317 = vld [vmem:[%s311 + $0x28] sm:$0xff]
    %v318 = vld [vmem:[%s311 + $0x30] sm:$0xff]
    %v319 = vld [vmem:[%s311 + $0x38] sm:$0xff]
    %v320 = vld [vmem:[%s311 + $0x40] sm:$0xff]
    %v321 = vld [vmem:[%s311 + $0x48] sm:$0xff]
    %v322 = vld [vmem:[%s311 + $0x50] sm:$0xff]
    %v323 = vld [vmem:[%s311 + $0x58] sm:$0xff]
    %v324 = vld [vmem:[%s311 + $0x60] sm:$0xff]
    %v325 = vld [vmem:[%s311 + $0x68] sm:$0xff]
    %v326 = vld [vmem:[%s311 + $0x70] sm:$0xff]
    %v327 = vld [vmem:[%s311 + $0x78] sm:$0xff]
    %v328 = vld [vmem:[%s311 + $0x80] sm:$0xff]
    %v329 = vld [vmem:[%s311 + $0x88] sm:$0xff]
    %v330 = vld [vmem:[%s311 + $0x90] sm:$0xff]
    %v331 = vld [vmem:[%s311 + $0x98] sm:$0xff]
    %v332 = vld [vmem:[%s311 + $0xa0] sm:$0xff]
    %v333 = vld [vmem:[%s311 + $0xa8] sm:$0xff]
    %v334 = vld [vmem:[%s311 + $0xb0] sm:$0xff]
    %v335 = vld [vmem:[%s311 + $0xb8] sm:$0xff]
    %vm336 = vcmask 1045504
    %v337 = vrot.slane %v51, 2
    %v338 = vrot.slane %v52, 2
    %v339 = vsel %vm336, %v337, %v338
    %v340 = vrot.slane %v53, 2
    %v341 = vsel %vm336, %v338, %v340
    %v342 = vrot.slane %v54, 2
    %v343 = vsel %vm336, %v340, %v342
    %v344 = vsel %vm116, %v339, 0
    %v346 = vsel %vm116, %v341, 0
    %v348 = vsel %vm116, %v343, 0
    %v350 = vsel %vm116, %v342, 0
    %352 = vmatprep.subr.mxu0 0.0
    %353 = vmatpush1.msra.mxu0 0.0
    %354 = vmatprep.subr.mxu0 0.0
    %355 = vmatpush1.msra.mxu0 0.0
    %356 = vmatprep.subr.mxu0 0.0
    %357 = vmatpush1.msra.mxu0 0.0
    %358 = vmatprep.subr.mxu0 0.0
    %359 = vmatpush1.msra.mxu0 0.0
    %360 = vmatprep.subr.mxu0 %v335
    %361 = vmatpush1.msra.mxu0 %v334
    %362 = vmatprep.subr.mxu0 %v333
    %363 = vmatpush1.msra.mxu0 %v332
    %364 = vmatprep.subr.mxu0 %v331
    %365 = vmatpush1.msra.mxu0 %v330
    %366 = vmatprep.subr.mxu0 %v329
    %367 = vmatpush1.msra.mxu0 %v328
    %368 = vmatprep.subr.mxu0 %v327
    %369 = vmatpush1.msra.mxu0 %v326
    %370 = vmatprep.subr.mxu0 %v325
    %371 = vmatpush1.msra.mxu0 %v324
    %372 = vmatprep.subr.mxu0 %v323
    %373 = vmatpush1.msra.mxu0 %v322
    %374 = vmatprep.subr.mxu0 %v321
    %375 = vmatpush1.msra.mxu0 %v320
    %376 = vmatprep.subr.mxu0 %v319
    %377 = vmatpush1.msra.mxu0 %v318
    %378 = vmatprep.subr.mxu0 %v317
    %379 = vmatpush1.msra.mxu0 %v316
    %380 = vmatprep.subr.mxu0 %v315
    %381 = vmatpush1.msra.mxu0 %v314
    %382 = vmatprep.subr.mxu0 %v313
    %383 = vmatpush1.msra.mxu0 %v312
    %384 = vmatprep.subr.mxu0 0.0
    %385 = vmatpush2.msra.mxu0 0.0
    %386 = vmatprep.subr.mxu0 0.0
    %387 = vmatpush2.msra.mxu0 0.0
    %388 = vmatprep.subr.mxu0 0.0
    %389 = vmatpush2.msra.mxu0 0.0
    %390 = vmatprep.subr.mxu0 0.0
    %391 = vmatpush2.msra.mxu0 0.0
    %392 = vmatprep.subr.mxu0 0.0
    %393 = vmatpush2.msra.mxu0 0.0
    %394 = vmatprep.subr.mxu0 0.0
    %395 = vmatpush2.msra.mxu0 0.0
    %396 = vmatprep.subr.mxu0 0.0
    %397 = vmatpush2.msra.mxu0 0.0
    %398 = vmatprep.subr.mxu0 0.0
    %399 = vmatpush2.msra.mxu0 0.0
    %400 = vmatprep.subr.mxu0 0.0
    %401 = vmatpush2.msra.mxu0 0.0
    %402 = vmatprep.subr.mxu0 0.0
    %403 = vmatpush2.msra.mxu0 0.0
    %404 = vmatprep.subr.mxu0 0.0
    %405 = vmatpush2.msra.mxu0 0.0
    %406 = vmatprep.subr.mxu0 0.0
    %407 = vmatpush2.msra.mxu0 0.0
    %408 = vmatprep.subr.mxu0 0.0
    %409 = vmatpush2.msra.mxu0 0.0
    %410 = vmatprep.subr.mxu0 0.0
    %411 = vmatpush2.msra.mxu0 0.0
    %412 = vmatprep.subr.mxu0 0.0
    %413 = vmatpush2.msra.mxu0 0.0
    %414 = vmatprep.subr.mxu0 0.0
    %415 = vmatpush2.msra.mxu0 0.0
    %416 = vmatprep.mubr.f32.mxu0 0.0
    %417 = vmatmul.mubr.f32.gmra.mxu0 %v344
    %v418 = vpop.f32.mrf.mxu0
    %v419 = vadd.f32 0.0, %v418
    %v420 = vpop.f32.mrf.mxu0
    %v421 = vadd.f32 0.0, %v420
    %422 = vmatprep.mubr.f32.mxu0 0.0
    %423 = vmatmul.mubr.f32.gmra.mxu0 %v346
    %v424 = vpop.f32.mrf.mxu0
    %v425 = vadd.f32 0.0, %v424
    %v426 = vpop.f32.mrf.mxu0
    %v427 = vadd.f32 0.0, %v426
    %428 = vmatprep.mubr.f32.mxu0 0.0
    %429 = vmatmul.mubr.f32.gmra.mxu0 %v348
    %v430 = vpop.f32.mrf.mxu0
    %v431 = vadd.f32 0.0, %v430
    %v432 = vpop.f32.mrf.mxu0
    %v433 = vadd.f32 0.0, %v432
    %434 = vmatprep.mubr.f32.mxu0 0.0
    %435 = vmatmul.mubr.f32.gmra.mxu0 %v350
    %v436 = vpop.f32.mrf.mxu0
    %v437 = vadd.f32 0.0, %v436
    %v438 = vpop.f32.mrf.mxu0
    %v439 = vadd.f32 0.0, %v438
    %440 = vdwg.mxu0
    %v441 = vadd.f32 %v289, %v419
    %v442 = vadd.f32 %v291, %v421
    %v443 = vadd.f32 %v295, %v425
    %v444 = vadd.f32 %v297, %v427
    %v445 = vadd.f32 %v301, %v431
    %v446 = vadd.f32 %v303, %v433
    %v447 = vadd.f32 %v307, %v437
    %v448 = vadd.f32 %v309, %v439
    %s449 = scalar_lea.vmem %s1, 576
    %v450 = vld [vmem:[%s449] sm:$0xff]
    %v451 = vld [vmem:[%s449 + $0x8] sm:$0xff]
    %v452 = vld [vmem:[%s449 + $0x10] sm:$0xff]
    %v453 = vld [vmem:[%s449 + $0x18] sm:$0xff]
    %v454 = vld [vmem:[%s449 + $0x20] sm:$0xff]
    %v455 = vld [vmem:[%s449 + $0x28] sm:$0xff]
    %v456 = vld [vmem:[%s449 + $0x30] sm:$0xff]
    %v457 = vld [vmem:[%s449 + $0x38] sm:$0xff]
    %v458 = vld [vmem:[%s449 + $0x40] sm:$0xff]
    %v459 = vld [vmem:[%s449 + $0x48] sm:$0xff]
    %v460 = vld [vmem:[%s449 + $0x50] sm:$0xff]
    %v461 = vld [vmem:[%s449 + $0x58] sm:$0xff]
    %v462 = vld [vmem:[%s449 + $0x60] sm:$0xff]
    %v463 = vld [vmem:[%s449 + $0x68] sm:$0xff]
    %v464 = vld [vmem:[%s449 + $0x70] sm:$0xff]
    %v465 = vld [vmem:[%s449 + $0x78] sm:$0xff]
    %v466 = vld [vmem:[%s449 + $0x80] sm:$0xff]
    %v467 = vld [vmem:[%s449 + $0x88] sm:$0xff]
    %v468 = vld [vmem:[%s449 + $0x90] sm:$0xff]
    %v469 = vld [vmem:[%s449 + $0x98] sm:$0xff]
    %v470 = vld [vmem:[%s449 + $0xa0] sm:$0xff]
    %v471 = vld [vmem:[%s449 + $0xa8] sm:$0xff]
    %v472 = vld [vmem:[%s449 + $0xb0] sm:$0xff]
    %v473 = vld [vmem:[%s449 + $0xb8] sm:$0xff]
    %vm474 = vcmask 1044480
    %v475 = vrot.slane %v51, 3
    %v476 = vrot.slane %v52, 3
    %v477 = vsel %vm474, %v475, %v476
    %v478 = vrot.slane %v53, 3
    %v479 = vsel %vm474, %v476, %v478
    %v480 = vrot.slane %v54, 3
    %v481 = vsel %vm474, %v478, %v480
    %v482 = vsel %vm116, %v477, 0
    %v484 = vsel %vm116, %v479, 0
    %v486 = vsel %vm116, %v481, 0
    %v488 = vsel %vm116, %v480, 0
    %490 = vmatprep.subr.mxu0 0.0
    %491 = vmatpush1.msra.mxu0 0.0
    %492 = vmatprep.subr.mxu0 0.0
    %493 = vmatpush1.msra.mxu0 0.0
    %494 = vmatprep.subr.mxu0 0.0
    %495 = vmatpush1.msra.mxu0 0.0
    %496 = vmatprep.subr.mxu0 0.0
    %497 = vmatpush1.msra.mxu0 0.0
    %498 = vmatprep.subr.mxu0 %v473
    %499 = vmatpush1.msra.mxu0 %v472
    %500 = vmatprep.subr.mxu0 %v471
    %501 = vmatpush1.msra.mxu0 %v470
    %502 = vmatprep.subr.mxu0 %v469
    %503 = vmatpush1.msra.mxu0 %v468
    %504 = vmatprep.subr.mxu0 %v467
    %505 = vmatpush1.msra.mxu0 %v466
    %506 = vmatprep.subr.mxu0 %v465
    %507 = vmatpush1.msra.mxu0 %v464
    %508 = vmatprep.subr.mxu0 %v463
    %509 = vmatpush1.msra.mxu0 %v462
    %510 = vmatprep.subr.mxu0 %v461
    %511 = vmatpush1.msra.mxu0 %v460
    %512 = vmatprep.subr.mxu0 %v459
    %513 = vmatpush1.msra.mxu0 %v458
    %514 = vmatprep.subr.mxu0 %v457
    %515 = vmatpush1.msra.mxu0 %v456
    %516 = vmatprep.subr.mxu0 %v455
    %517 = vmatpush1.msra.mxu0 %v454
    %518 = vmatprep.subr.mxu0 %v453
    %519 = vmatpush1.msra.mxu0 %v452
    %520 = vmatprep.subr.mxu0 %v451
    %521 = vmatpush1.msra.mxu0 %v450
    %522 = vmatprep.subr.mxu0 0.0
    %523 = vmatpush2.msra.mxu0 0.0
    %524 = vmatprep.subr.mxu0 0.0
    %525 = vmatpush2.msra.mxu0 0.0
    %526 = vmatprep.subr.mxu0 0.0
    %527 = vmatpush2.msra.mxu0 0.0
    %528 = vmatprep.subr.mxu0 0.0
    %529 = vmatpush2.msra.mxu0 0.0
    %530 = vmatprep.subr.mxu0 0.0
    %531 = vmatpush2.msra.mxu0 0.0
    %532 = vmatprep.subr.mxu0 0.0
    %533 = vmatpush2.msra.mxu0 0.0
    %534 = vmatprep.subr.mxu0 0.0
    %535 = vmatpush2.msra.mxu0 0.0
    %536 = vmatprep.subr.mxu0 0.0
    %537 = vmatpush2.msra.mxu0 0.0
    %538 = vmatprep.subr.mxu0 0.0
    %539 = vmatpush2.msra.mxu0 0.0
    %540 = vmatprep.subr.mxu0 0.0
    %541 = vmatpush2.msra.mxu0 0.0
    %542 = vmatprep.subr.mxu0 0.0
    %543 = vmatpush2.msra.mxu0 0.0
    %544 = vmatprep.subr.mxu0 0.0
    %545 = vmatpush2.msra.mxu0 0.0
    %546 = vmatprep.subr.mxu0 0.0
    %547 = vmatpush2.msra.mxu0 0.0
    %548 = vmatprep.subr.mxu0 0.0
    %549 = vmatpush2.msra.mxu0 0.0
    %550 = vmatprep.subr.mxu0 0.0
    %551 = vmatpush2.msra.mxu0 0.0
    %552 = vmatprep.subr.mxu0 0.0
    %553 = vmatpush2.msra.mxu0 0.0
    %554 = vmatprep.mubr.f32.mxu0 0.0
    %555 = vmatmul.mubr.f32.gmra.mxu0 %v482
    %v556 = vpop.f32.mrf.mxu0
    %v557 = vadd.f32 0.0, %v556
    %v558 = vpop.f32.mrf.mxu0
    %v559 = vadd.f32 0.0, %v558
    %560 = vmatprep.mubr.f32.mxu0 0.0
    %561 = vmatmul.mubr.f32.gmra.mxu0 %v484
    %v562 = vpop.f32.mrf.mxu0
    %v563 = vadd.f32 0.0, %v562
    %v564 = vpop.f32.mrf.mxu0
    %v565 = vadd.f32 0.0, %v564
    %566 = vmatprep.mubr.f32.mxu0 0.0
    %567 = vmatmul.mubr.f32.gmra.mxu0 %v486
    %v568 = vpop.f32.mrf.mxu0
    %v569 = vadd.f32 0.0, %v568
    %v570 = vpop.f32.mrf.mxu0
    %v571 = vadd.f32 0.0, %v570
    %572 = vmatprep.mubr.f32.mxu0 0.0
    %573 = vmatmul.mubr.f32.gmra.mxu0 %v488
    %v574 = vpop.f32.mrf.mxu0
    %v575 = vadd.f32 0.0, %v574
    %v576 = vpop.f32.mrf.mxu0
    %v577 = vadd.f32 0.0, %v576
    %578 = vdwg.mxu0
    %v579 = vadd.f32 %v441, %v557
    %v580 = vadd.f32 %v442, %v559
    %v581 = vadd.f32 %v443, %v563
    %v582 = vadd.f32 %v444, %v565
    %v583 = vadd.f32 %v445, %v569
    %v584 = vadd.f32 %v446, %v571
    %v585 = vadd.f32 %v447, %v575
    %v586 = vadd.f32 %v448, %v577
    %s587 = scalar_lea.vmem %s1, 768
    %v588 = vld [vmem:[%s587] sm:$0xff]
    %v589 = vld [vmem:[%s587 + $0x8] sm:$0xff]
    %v590 = vld [vmem:[%s587 + $0x10] sm:$0xff]
    %v591 = vld [vmem:[%s587 + $0x18] sm:$0xff]
    %v592 = vld [vmem:[%s587 + $0x20] sm:$0xff]
    %v593 = vld [vmem:[%s587 + $0x28] sm:$0xff]
    %v594 = vld [vmem:[%s587 + $0x30] sm:$0xff]
    %v595 = vld [vmem:[%s587 + $0x38] sm:$0xff]
    %v596 = vld [vmem:[%s587 + $0x40] sm:$0xff]
    %v597 = vld [vmem:[%s587 + $0x48] sm:$0xff]
    %v598 = vld [vmem:[%s587 + $0x50] sm:$0xff]
    %v599 = vld [vmem:[%s587 + $0x58] sm:$0xff]
    %v600 = vld [vmem:[%s587 + $0x60] sm:$0xff]
    %v601 = vld [vmem:[%s587 + $0x68] sm:$0xff]
    %v602 = vld [vmem:[%s587 + $0x70] sm:$0xff]
    %v603 = vld [vmem:[%s587 + $0x78] sm:$0xff]
    %v604 = vld [vmem:[%s587 + $0x80] sm:$0xff]
    %v605 = vld [vmem:[%s587 + $0x88] sm:$0xff]
    %v606 = vld [vmem:[%s587 + $0x90] sm:$0xff]
    %v607 = vld [vmem:[%s587 + $0x98] sm:$0xff]
    %v608 = vld [vmem:[%s587 + $0xa0] sm:$0xff]
    %v609 = vld [vmem:[%s587 + $0xa8] sm:$0xff]
    %v610 = vld [vmem:[%s587 + $0xb0] sm:$0xff]
    %v611 = vld [vmem:[%s587 + $0xb8] sm:$0xff]
    %vm612 = vcmask 1043456
    %v613 = vrot.slane %v51, 4
    %v614 = vrot.slane %v52, 4
    %v615 = vsel %vm612, %v613, %v614
    %v616 = vrot.slane %v53, 4
    %v617 = vsel %vm612, %v614, %v616
    %v618 = vrot.slane %v54, 4
    %v619 = vsel %vm612, %v616, %v618
    %v620 = vsel %vm116, %v615, 0
    %v622 = vsel %vm116, %v617, 0
    %v624 = vsel %vm116, %v619, 0
    %v626 = vsel %vm116, %v618, 0
    %628 = vmatprep.subr.mxu0 0.0
    %629 = vmatpush1.msra.mxu0 0.0
    %630 = vmatprep.subr.mxu0 0.0
    %631 = vmatpush1.msra.mxu0 0.0
    %632 = vmatprep.subr.mxu0 0.0
    %633 = vmatpush1.msra.mxu0 0.0
    %634 = vmatprep.subr.mxu0 0.0
    %635 = vmatpush1.msra.mxu0 0.0
    %636 = vmatprep.subr.mxu0 %v611
    %637 = vmatpush1.msra.mxu0 %v610
    %638 = vmatprep.subr.mxu0 %v609
    %639 = vmatpush1.msra.mxu0 %v608
    %640 = vmatprep.subr.mxu0 %v607
    %641 = vmatpush1.msra.mxu0 %v606
    %642 = vmatprep.subr.mxu0 %v605
    %643 = vmatpush1.msra.mxu0 %v604
    %644 = vmatprep.subr.mxu0 %v603
    %645 = vmatpush1.msra.mxu0 %v602
    %646 = vmatprep.subr.mxu0 %v601
    %647 = vmatpush1.msra.mxu0 %v600
    %648 = vmatprep.subr.mxu0 %v599
    %649 = vmatpush1.msra.mxu0 %v598
    %650 = vmatprep.subr.mxu0 %v597
    %651 = vmatpush1.msra.mxu0 %v596
    %652 = vmatprep.subr.mxu0 %v595
    %653 = vmatpush1.msra.mxu0 %v594
    %654 = vmatprep.subr.mxu0 %v593
    %655 = vmatpush1.msra.mxu0 %v592
    %656 = vmatprep.subr.mxu0 %v591
    %657 = vmatpush1.msra.mxu0 %v590
    %658 = vmatprep.subr.mxu0 %v589
    %659 = vmatpush1.msra.mxu0 %v588
    %660 = vmatprep.subr.mxu0 0.0
    %661 = vmatpush2.msra.mxu0 0.0
    %662 = vmatprep.subr.mxu0 0.0
    %663 = vmatpush2.msra.mxu0 0.0
    %664 = vmatprep.subr.mxu0 0.0
    %665 = vmatpush2.msra.mxu0 0.0
    %666 = vmatprep.subr.mxu0 0.0
    %667 = vmatpush2.msra.mxu0 0.0
    %668 = vmatprep.subr.mxu0 0.0
    %669 = vmatpush2.msra.mxu0 0.0
    %670 = vmatprep.subr.mxu0 0.0
    %671 = vmatpush2.msra.mxu0 0.0
    %672 = vmatprep.subr.mxu0 0.0
    %673 = vmatpush2.msra.mxu0 0.0
    %674 = vmatprep.subr.mxu0 0.0
    %675 = vmatpush2.msra.mxu0 0.0
    %676 = vmatprep.subr.mxu0 0.0
    %677 = vmatpush2.msra.mxu0 0.0
    %678 = vmatprep.subr.mxu0 0.0
    %679 = vmatpush2.msra.mxu0 0.0
    %680 = vmatprep.subr.mxu0 0.0
    %681 = vmatpush2.msra.mxu0 0.0
    %682 = vmatprep.subr.mxu0 0.0
    %683 = vmatpush2.msra.mxu0 0.0
    %684 = vmatprep.subr.mxu0 0.0
    %685 = vmatpush2.msra.mxu0 0.0
    %686 = vmatprep.subr.mxu0 0.0
    %687 = vmatpush2.msra.mxu0 0.0
    %688 = vmatprep.subr.mxu0 0.0
    %689 = vmatpush2.msra.mxu0 0.0
    %690 = vmatprep.subr.mxu0 0.0
    %691 = vmatpush2.msra.mxu0 0.0
    %692 = vmatprep.mubr.f32.mxu0 0.0
    %693 = vmatmul.mubr.f32.gmra.mxu0 %v620
    %v694 = vpop.f32.mrf.mxu0
    %v695 = vadd.f32 0.0, %v694
    %v696 = vpop.f32.mrf.mxu0
    %v697 = vadd.f32 0.0, %v696
    %698 = vmatprep.mubr.f32.mxu0 0.0
    %699 = vmatmul.mubr.f32.gmra.mxu0 %v622
    %v700 = vpop.f32.mrf.mxu0
    %v701 = vadd.f32 0.0, %v700
    %v702 = vpop.f32.mrf.mxu0
    %v703 = vadd.f32 0.0, %v702
    %704 = vmatprep.mubr.f32.mxu0 0.0
    %705 = vmatmul.mubr.f32.gmra.mxu0 %v624
    %v706 = vpop.f32.mrf.mxu0
    %v707 = vadd.f32 0.0, %v706
    %v708 = vpop.f32.mrf.mxu0
    %v709 = vadd.f32 0.0, %v708
    %710 = vmatprep.mubr.f32.mxu0 0.0
    %711 = vmatmul.mubr.f32.gmra.mxu0 %v626
    %v712 = vpop.f32.mrf.mxu0
    %v713 = vadd.f32 0.0, %v712
    %v714 = vpop.f32.mrf.mxu0
    %v715 = vadd.f32 0.0, %v714
    %716 = vdwg.mxu0
    %v717 = vadd.f32 %v579, %v695
    %v718 = vadd.f32 %v580, %v697
    %v719 = vadd.f32 %v581, %v701
    %v720 = vadd.f32 %v582, %v703
    %v721 = vadd.f32 %v583, %v707
    %v722 = vadd.f32 %v584, %v709
    %v723 = vadd.f32 %v585, %v713
    %v724 = vadd.f32 %v586, %v715
    %v725 = vld [vmem:[%s2] sm:$0x3]
    %v727 = vlaneseq
    %v728 = vshrl.u32 %v727, 7
    %v729 = vsub.s32 0, %v728
    %v730 = vrot.slane %v725, %v729
    %v731 = vlaneseq
    %v732 = vshrl.u32 %v731, 7
    %v733 = vsub.s32 1, %v732
    %v734 = vrot.slane %v725, %v733
    %v737 = vadd.f32 %v717, %v730
    %v738 = vadd.f32 %v718, %v734
    %v739 = vadd.f32 %v719, %v730
    %v740 = vadd.f32 %v720, %v734
    %v741 = vadd.f32 %v721, %v730
    %v742 = vadd.f32 %v722, %v734
    %v743 = vadd.f32 %v723, %v730
    %v744 = vadd.f32 %v724, %v734
    %v745 = vmax.f32 %v737, 0.0
    %v746 = vmax.f32 %v738, 0.0
    %v747 = vmax.f32 %v739, 0.0
    %v748 = vmax.f32 %v740, 0.0
    %v749 = vmax.f32 %v741, 0.0
    %v750 = vmax.f32 %v742, 0.0
    %v751 = vmax.f32 %v743, 0.0
    %v752 = vmax.f32 %v744, 0.0
    %v753 = vld [vmem:[%s3] sm:$0xff]
    %v754 = vld [vmem:[%s3 + $0x8] sm:$0x3f]
    %vm755 = vcmask 228352
    %v757 = vsel %vm755, %v753, 0
    %v760 = vsel %vm755, %v754, 0
    %v763 = vsel %vm612, %v751, 0
    %v766 = vsel %vm612, %v752, 0
    %768 = vmatprep.subr.mxu0 0.0
    %769 = vmatpush1.msra.mxu0 0.0
    %770 = vmatprep.subr.mxu0 0.0
    %771 = vmatpush1.msra.mxu0 0.0
    %772 = vmatprep.subr.mxu0 0.0
    %773 = vmatpush1.msra.mxu0 0.0
    %774 = vmatprep.subr.mxu0 0.0
    %775 = vmatpush1.msra.mxu0 0.0
    %776 = vmatprep.subr.mxu0 0.0
    %777 = vmatpush1.msra.mxu0 0.0
    %778 = vmatprep.subr.mxu0 0.0
    %779 = vmatpush1.msra.mxu0 0.0
    %780 = vmatprep.subr.mxu0 0.0
    %781 = vmatpush1.msra.mxu0 0.0
    %782 = vmatprep.subr.mxu0 0.0
    %783 = vmatpush1.msra.mxu0 0.0
    %784 = vmatprep.subr.mxu0 0.0
    %785 = vmatpush1.msra.mxu0 0.0
    %786 = vmatprep.subr.mxu0 0.0
    %787 = vmatpush1.msra.mxu0 0.0
    %788 = vmatprep.subr.mxu0 0.0
    %789 = vmatpush1.msra.mxu0 0.0
    %790 = vmatprep.subr.mxu0 0.0
    %791 = vmatpush1.msra.mxu0 0.0
    %792 = vmatprep.subr.mxu0 %v766
    %793 = vmatpush1.msra.mxu0 %v763
    %794 = vmatprep.subr.mxu0 %v750
    %795 = vmatpush1.msra.mxu0 %v749
    %796 = vmatprep.subr.mxu0 %v748
    %797 = vmatpush1.msra.mxu0 %v747
    %798 = vmatprep.subr.mxu0 %v746
    %799 = vmatpush1.msra.mxu0 %v745
    %800 = vmatprep.subr.mxu0 0.0
    %801 = vmatpush2.msra.mxu0 0.0
    %802 = vmatprep.subr.mxu0 0.0
    %803 = vmatpush2.msra.mxu0 0.0
    %804 = vmatprep.subr.mxu0 0.0
    %805 = vmatpush2.msra.mxu0 0.0
    %806 = vmatprep.subr.mxu0 0.0
    %807 = vmatpush2.msra.mxu0 0.0
    %808 = vmatprep.subr.mxu0 0.0
    %809 = vmatpush2.msra.mxu0 0.0
    %810 = vmatprep.subr.mxu0 0.0
    %811 = vmatpush2.msra.mxu0 0.0
    %812 = vmatprep.subr.mxu0 0.0
    %813 = vmatpush2.msra.mxu0 0.0
    %814 = vmatprep.subr.mxu0 0.0
    %815 = vmatpush2.msra.mxu0 0.0
    %816 = vmatprep.subr.mxu0 0.0
    %817 = vmatpush2.msra.mxu0 0.0
    %818 = vmatprep.subr.mxu0 0.0
    %819 = vmatpush2.msra.mxu0 0.0
    %820 = vmatprep.subr.mxu0 0.0
    %821 = vmatpush2.msra.mxu0 0.0
    %822 = vmatprep.subr.mxu0 0.0
    %823 = vmatpush2.msra.mxu0 0.0
    %824 = vmatprep.subr.mxu0 0.0
    %825 = vmatpush2.msra.mxu0 0.0
    %826 = vmatprep.subr.mxu0 0.0
    %827 = vmatpush2.msra.mxu0 0.0
    %828 = vmatprep.subr.mxu0 0.0
    %829 = vmatpush2.msra.mxu0 0.0
    %830 = vmatprep.subr.mxu0 0.0
    %831 = vmatpush2.msra.mxu0 0.0
    %832 = vmatprep.mubr.f32.mxu0 0.0
    %833 = vmatmul.mubr.f32.gmra.mxu0 %v757
    %v834 = vpop.f32.mrf.mxu0
    %v835 = vadd.f32 0.0, %v834
    %v836 = vpop.f32.mrf.mxu0
    %v837 = vadd.f32 0.0, %v836
    %838 = vmatprep.mubr.f32.mxu0 0.0
    %839 = vmatmul.mubr.f32.gmra.mxu0 %v760
    %v840 = vpop.f32.mrf.mxu0
    %v841 = vadd.f32 0.0, %v840
    %v842 = vpop.f32.mrf.mxu0
    %v843 = vadd.f32 0.0, %v842
    %844 = vdwg.mxu0
    %s845 = scalar_lea.vmem %s3, 16
    %v846 = vld [vmem:[%s845] sm:$0xff]
    %v847 = vld [vmem:[%s845 + $0x8] sm:$0x3f]
    %v849 = vsel %vm755, %v846, 0
    %v852 = vsel %vm755, %v847, 0
    %854 = vmatprep.subr.mxu0 0.0
    %855 = vmatpush1.msra.mxu0 0.0
    %856 = vmatprep.subr.mxu0 0.0
    %857 = vmatpush1.msra.mxu0 0.0
    %858 = vmatprep.subr.mxu0 0.0
    %859 = vmatpush1.msra.mxu0 0.0
    %860 = vmatprep.subr.mxu0 0.0
    %861 = vmatpush1.msra.mxu0 0.0
    %862 = vmatprep.subr.mxu0 0.0
    %863 = vmatpush1.msra.mxu0 0.0
    %864 = vmatprep.subr.mxu0 0.0
    %865 = vmatpush1.msra.mxu0 0.0
    %866 = vmatprep.subr.mxu0 0.0
    %867 = vmatpush1.msra.mxu0 0.0
    %868 = vmatprep.subr.mxu0 0.0
    %869 = vmatpush1.msra.mxu0 0.0
    %870 = vmatprep.subr.mxu0 0.0
    %871 = vmatpush1.msra.mxu0 0.0
    %872 = vmatprep.subr.mxu0 0.0
    %873 = vmatpush1.msra.mxu0 0.0
    %874 = vmatprep.subr.mxu0 0.0
    %875 = vmatpush1.msra.mxu0 0.0
    %876 = vmatprep.subr.mxu0 0.0
    %877 = vmatpush1.msra.mxu0 0.0
    %878 = vmatprep.subr.mxu0 %v766
    %879 = vmatpush1.msra.mxu0 %v763
    %880 = vmatprep.subr.mxu0 %v750
    %881 = vmatpush1.msra.mxu0 %v749
    %882 = vmatprep.subr.mxu0 %v748
    %883 = vmatpush1.msra.mxu0 %v747
    %884 = vmatprep.subr.mxu0 %v746
    %885 = vmatpush1.msra.mxu0 %v745
    %886 = vmatprep.subr.mxu0 0.0
    %887 = vmatpush2.msra.mxu0 0.0
    %888 = vmatprep.subr.mxu0 0.0
    %889 = vmatpush2.msra.mxu0 0.0
    %890 = vmatprep.subr.mxu0 0.0
    %891 = vmatpush2.msra.mxu0 0.0
    %892 = vmatprep.subr.mxu0 0.0
    %893 = vmatpush2.msra.mxu0 0.0
    %894 = vmatprep.subr.mxu0 0.0
    %895 = vmatpush2.msra.mxu0 0.0
    %896 = vmatprep.subr.mxu0 0.0
    %897 = vmatpush2.msra.mxu0 0.0
    %898 = vmatprep.subr.mxu0 0.0
    %899 = vmatpush2.msra.mxu0 0.0
    %900 = vmatprep.subr.mxu0 0.0
    %901 = vmatpush2.msra.mxu0 0.0
    %902 = vmatprep.subr.mxu0 0.0
    %903 = vmatpush2.msra.mxu0 0.0
    %904 = vmatprep.subr.mxu0 0.0
    %905 = vmatpush2.msra.mxu0 0.0
    %906 = vmatprep.subr.mxu0 0.0
    %907 = vmatpush2.msra.mxu0 0.0
    %908 = vmatprep.subr.mxu0 0.0
    %909 = vmatpush2.msra.mxu0 0.0
    %910 = vmatprep.subr.mxu0 0.0
    %911 = vmatpush2.msra.mxu0 0.0
    %912 = vmatprep.subr.mxu0 0.0
    %913 = vmatpush2.msra.mxu0 0.0
    %914 = vmatprep.subr.mxu0 0.0
    %915 = vmatpush2.msra.mxu0 0.0
    %916 = vmatprep.subr.mxu0 0.0
    %917 = vmatpush2.msra.mxu0 0.0
    %918 = vmatprep.mubr.f32.mxu0 0.0
    %919 = vmatmul.mubr.f32.gmra.mxu0 %v849
    %v920 = vpop.f32.mrf.mxu0
    %v921 = vadd.f32 0.0, %v920
    %v922 = vpop.f32.mrf.mxu0
    %v923 = vadd.f32 0.0, %v922
    %924 = vmatprep.mubr.f32.mxu0 0.0
    %925 = vmatmul.mubr.f32.gmra.mxu0 %v852
    %v926 = vpop.f32.mrf.mxu0
    %v927 = vadd.f32 0.0, %v926
    %v928 = vpop.f32.mrf.mxu0
    %v929 = vadd.f32 0.0, %v928
    %930 = vdwg.mxu0
    %v931 = vmax.f32 %v835, %v921
    %v932 = vmax.f32 %v837, %v923
    %v933 = vmax.f32 %v841, %v927
    %v934 = vmax.f32 %v843, %v929
    %v935 = vld [vmem:[%s4] sm:$0xff]
    %v936 = vld [vmem:[%s4 + $0x8] sm:$0xff]
    %v937 = vld [vmem:[%s4 + $0x10] sm:$0xff]
    %v938 = vld [vmem:[%s4 + $0x18] sm:$0xff]
    %v939 = vld [vmem:[%s4 + $0x20] sm:$0xff]
    %v940 = vld [vmem:[%s4 + $0x28] sm:$0xff]
    %v941 = vld [vmem:[%s4 + $0x30] sm:$0xff]
    %v942 = vld [vmem:[%s4 + $0x38] sm:$0xff]
    %v943 = vld [vmem:[%s4 + $0x40] sm:$0xff]
    %v944 = vld [vmem:[%s4 + $0x48] sm:$0xff]
    %v945 = vld [vmem:[%s4 + $0x50] sm:$0xff]
    %v946 = vld [vmem:[%s4 + $0x58] sm:$0xff]
    %v947 = vld [vmem:[%s4 + $0x60] sm:$0xff]
    %v948 = vld [vmem:[%s4 + $0x68] sm:$0xff]
    %v949 = vld [vmem:[%s4 + $0x70] sm:$0xff]
    %v950 = vld [vmem:[%s4 + $0x78] sm:$0xff]
    %v951 = vld [vmem:[%s4 + $0x80] sm:$0xff]
    %v952 = vld [vmem:[%s4 + $0x88] sm:$0xff]
    %v953 = vld [vmem:[%s4 + $0x90] sm:$0xff]
    %v954 = vld [vmem:[%s4 + $0x98] sm:$0xff]
    %v955 = vld [vmem:[%s4 + $0xa0] sm:$0xff]
    %vm956 = vcmask 326656
    %v958 = vsel %vm956, %v932, 0
    %v961 = vsel %vm956, %v934, 0
    %963 = vmatprep.subr.mxu0 0.0
    %964 = vmatpush1.msra.mxu0 %v950
    %965 = vmatprep.subr.mxu0 0.0
    %966 = vmatpush1.msra.mxu0 %v949
    %967 = vmatprep.subr.mxu0 0.0
    %968 = vmatpush1.msra.mxu0 %v948
    %969 = vmatprep.subr.mxu0 0.0
    %970 = vmatpush1.msra.mxu0 %v947
    %971 = vmatprep.subr.mxu0 0.0
    %972 = vmatpush1.msra.mxu0 %v946
    %973 = vmatprep.subr.mxu0 0.0
    %974 = vmatpush1.msra.mxu0 %v945
    %975 = vmatprep.subr.mxu0 0.0
    %976 = vmatpush1.msra.mxu0 %v944
    %977 = vmatprep.subr.mxu0 0.0
    %978 = vmatpush1.msra.mxu0 %v943
    %979 = vmatprep.subr.mxu0 0.0
    %980 = vmatpush1.msra.mxu0 %v942
    %981 = vmatprep.subr.mxu0 0.0
    %982 = vmatpush1.msra.mxu0 %v941
    %983 = vmatprep.subr.mxu0 0.0
    %984 = vmatpush1.msra.mxu0 %v940
    %985 = vmatprep.subr.mxu0 0.0
    %986 = vmatpush1.msra.mxu0 %v939
    %987 = vmatprep.subr.mxu0 0.0
    %988 = vmatpush1.msra.mxu0 %v938
    %989 = vmatprep.subr.mxu0 0.0
    %990 = vmatpush1.msra.mxu0 %v937
    %991 = vmatprep.subr.mxu0 0.0
    %992 = vmatpush1.msra.mxu0 %v936
    %993 = vmatprep.subr.mxu0 0.0
    %994 = vmatpush1.msra.mxu0 %v935
    %995 = vmatprep.subr.mxu0 0.0
    %996 = vmatpush2.msra.mxu0 0.0
    %997 = vmatprep.subr.mxu0 0.0
    %998 = vmatpush2.msra.mxu0 0.0
    %999 = vmatprep.subr.mxu0 0.0
    %1000 = vmatpush2.msra.mxu0 0.0
    %1001 = vmatprep.subr.mxu0 0.0
    %1002 = vmatpush2.msra.mxu0 0.0
    %1003 = vmatprep.subr.mxu0 0.0
    %1004 = vmatpush2.msra.mxu0 0.0
    %1005 = vmatprep.subr.mxu0 0.0
    %1006 = vmatpush2.msra.mxu0 0.0
    %1007 = vmatprep.subr.mxu0 0.0
    %1008 = vmatpush2.msra.mxu0 0.0
    %1009 = vmatprep.subr.mxu0 0.0
    %1010 = vmatpush2.msra.mxu0 0.0
    %1011 = vmatprep.subr.mxu0 0.0
    %1012 = vmatpush2.msra.mxu0 0.0
    %1013 = vmatprep.subr.mxu0 0.0
    %1014 = vmatpush2.msra.mxu0 0.0
    %1015 = vmatprep.subr.mxu0 0.0
    %1016 = vmatpush2.msra.mxu0 0.0
    %1017 = vmatprep.subr.mxu0 0.0
    %1018 = vmatpush2.msra.mxu0 %v955
    %1019 = vmatprep.subr.mxu0 0.0
    %1020 = vmatpush2.msra.mxu0 %v954
    %1021 = vmatprep.subr.mxu0 0.0
    %1022 = vmatpush2.msra.mxu0 %v953
    %1023 = vmatprep.subr.mxu0 0.0
    %1024 = vmatpush2.msra.mxu0 %v952
    %1025 = vmatprep.subr.mxu0 0.0
    %1026 = vmatpush2.msra.mxu0 %v951
    %1027 = vmatprep.mubr.f32.mxu0 %v958
    %1028 = vmatmul.mubr.f32.gmra.mxu0 %v931
    %v1029 = vpop.f32.mrf.mxu0
    %v1030 = vadd.f32 0.0, %v1029
    %v1031 = vpop.f32.mrf.mxu0
    %1032 = vmatprep.mubr.f32.mxu0 %v961
    %1033 = vmatmul.mubr.f32.gmra.mxu0 %v933
    %v1034 = vpop.f32.mrf.mxu0
    %v1035 = vadd.f32 0.0, %v1034
    %v1036 = vpop.f32.mrf.mxu0
    %1037 = vdwg.mxu0
    %s1038 = scalar_lea.vmem %s4, 168
    %v1039 = vld [vmem:[%s1038] sm:$0xff]
    %v1040 = vld [vmem:[%s1038 + $0x8] sm:$0xff]
    %v1041 = vld [vmem:[%s1038 + $0x10] sm:$0xff]
    %v1042 = vld [vmem:[%s1038 + $0x18] sm:$0xff]
    %v1043 = vld [vmem:[%s1038 + $0x20] sm:$0xff]
    %v1044 = vld [vmem:[%s1038 + $0x28] sm:$0xff]
    %v1045 = vld [vmem:[%s1038 + $0x30] sm:$0xff]
    %v1046 = vld [vmem:[%s1038 + $0x38] sm:$0xff]
    %v1047 = vld [vmem:[%s1038 + $0x40] sm:$0xff]
    %v1048 = vld [vmem:[%s1038 + $0x48] sm:$0xff]
    %v1049 = vld [vmem:[%s1038 + $0x50] sm:$0xff]
    %v1050 = vld [vmem:[%s1038 + $0x58] sm:$0xff]
    %v1051 = vld [vmem:[%s1038 + $0x60] sm:$0xff]
    %v1052 = vld [vmem:[%s1038 + $0x68] sm:$0xff]
    %v1053 = vld [vmem:[%s1038 + $0x70] sm:$0xff]
    %v1054 = vld [vmem:[%s1038 + $0x78] sm:$0xff]
    %v1055 = vld [vmem:[%s1038 + $0x80] sm:$0xff]
    %v1056 = vld [vmem:[%s1038 + $0x88] sm:$0xff]
    %v1057 = vld [vmem:[%s1038 + $0x90] sm:$0xff]
    %v1058 = vld [vmem:[%s1038 + $0x98] sm:$0xff]
    %v1059 = vld [vmem:[%s1038 + $0xa0] sm:$0xff]
    %1060 = vmatprep.subr.mxu0 0.0
    %1061 = vmatpush1.msra.mxu0 %v1054
    %1062 = vmatprep.subr.mxu0 0.0
    %1063 = vmatpush1.msra.mxu0 %v1053
    %1064 = vmatprep.subr.mxu0 0.0
    %1065 = vmatpush1.msra.mxu0 %v1052
    %1066 = vmatprep.subr.mxu0 0.0
    %1067 = vmatpush1.msra.mxu0 %v1051
    %1068 = vmatprep.subr.mxu0 0.0
    %1069 = vmatpush1.msra.mxu0 %v1050
    %1070 = vmatprep.subr.mxu0 0.0
    %1071 = vmatpush1.msra.mxu0 %v1049
    %1072 = vmatprep.subr.mxu0 0.0
    %1073 = vmatpush1.msra.mxu0 %v1048
    %1074 = vmatprep.subr.mxu0 0.0
    %1075 = vmatpush1.msra.mxu0 %v1047
    %1076 = vmatprep.subr.mxu0 0.0
    %1077 = vmatpush1.msra.mxu0 %v1046
    %1078 = vmatprep.subr.mxu0 0.0
    %1079 = vmatpush1.msra.mxu0 %v1045
    %1080 = vmatprep.subr.mxu0 0.0
    %1081 = vmatpush1.msra.mxu0 %v1044
    %1082 = vmatprep.subr.mxu0 0.0
    %1083 = vmatpush1.msra.mxu0 %v1043
    %1084 = vmatprep.subr.mxu0 0.0
    %1085 = vmatpush1.msra.mxu0 %v1042
    %1086 = vmatprep.subr.mxu0 0.0
    %1087 = vmatpush1.msra.mxu0 %v1041
    %1088 = vmatprep.subr.mxu0 0.0
    %1089 = vmatpush1.msra.mxu0 %v1040
    %1090 = vmatprep.subr.mxu0 0.0
    %1091 = vmatpush1.msra.mxu0 %v1039
    %1092 = vmatprep.subr.mxu0 0.0
    %1093 = vmatpush2.msra.mxu0 0.0
    %1094 = vmatprep.subr.mxu0 0.0
    %1095 = vmatpush2.msra.mxu0 0.0
    %1096 = vmatprep.subr.mxu0 0.0
    %1097 = vmatpush2.msra.mxu0 0.0
    %1098 = vmatprep.subr.mxu0 0.0
    %1099 = vmatpush2.msra.mxu0 0.0
    %1100 = vmatprep.subr.mxu0 0.0
    %1101 = vmatpush2.msra.mxu0 0.0
    %1102 = vmatprep.subr.mxu0 0.0
    %1103 = vmatpush2.msra.mxu0 0.0
    %1104 = vmatprep.subr.mxu0 0.0
    %1105 = vmatpush2.msra.mxu0 0.0
    %1106 = vmatprep.subr.mxu0 0.0
    %1107 = vmatpush2.msra.mxu0 0.0
    %1108 = vmatprep.subr.mxu0 0.0
    %1109 = vmatpush2.msra.mxu0 0.0
    %1110 = vmatprep.subr.mxu0 0.0
    %1111 = vmatpush2.msra.mxu0 0.0
    %1112 = vmatprep.subr.mxu0 0.0
    %1113 = vmatpush2.msra.mxu0 0.0
    %1114 = vmatprep.subr.mxu0 0.0
    %1115 = vmatpush2.msra.mxu0 %v1059
    %1116 = vmatprep.subr.mxu0 0.0
    %1117 = vmatpush2.msra.mxu0 %v1058
    %1118 = vmatprep.subr.mxu0 0.0
    %1119 = vmatpush2.msra.mxu0 %v1057
    %1120 = vmatprep.subr.mxu0 0.0
    %1121 = vmatpush2.msra.mxu0 %v1056
    %1122 = vmatprep.subr.mxu0 0.0
    %1123 = vmatpush2.msra.mxu0 %v1055
    %1124 = vmatprep.mubr.f32.mxu0 %v958
    %1125 = vmatmul.mubr.f32.gmra.mxu0 %v931
    %v1126 = vpop.f32.mrf.mxu0
    %v1127 = vadd.f32 0.0, %v1126
    %v1128 = vpop.f32.mrf.mxu0
    %1129 = vmatprep.mubr.f32.mxu0 %v961
    %1130 = vmatmul.mubr.f32.gmra.mxu0 %v933
    %v1131 = vpop.f32.mrf.mxu0
    %v1132 = vadd.f32 0.0, %v1131
    %v1133 = vpop.f32.mrf.mxu0
    %1134 = vdwg.mxu0
    %v1135 = vmax.f32 %v1030, %v1127
    %v1136 = vmax.f32 %v1035, %v1132
    %v1137 = vld [vmem:[%s5] sm:$0xff]
    %v1138 = vld [vmem:[%s5 + $0x8] sm:$0xff]
    %v1139 = vld [vmem:[%s5 + $0x10] sm:$0xff]
    %v1140 = vld [vmem:[%s5 + $0x18] sm:$0xff]
    %v1141 = vld [vmem:[%s5 + $0x20] sm:$0xff]
    %v1142 = vld [vmem:[%s5 + $0x28] sm:$0xff]
    %v1143 = vld [vmem:[%s5 + $0x30] sm:$0xff]
    %v1144 = vld [vmem:[%s5 + $0x38] sm:$0xff]
    %v1145 = vld [vmem:[%s5 + $0x40] sm:$0xff]
    %v1146 = vld [vmem:[%s5 + $0x48] sm:$0xff]
    %v1147 = vld [vmem:[%s5 + $0x50] sm:$0xff]
    %v1148 = vld [vmem:[%s5 + $0x58] sm:$0xff]
    %v1149 = vld [vmem:[%s5 + $0x60] sm:$0xff]
    %v1150 = vld [vmem:[%s5 + $0x68] sm:$0xff]
    %v1151 = vld [vmem:[%s5 + $0x70] sm:$0xff]
    %v1152 = vld [vmem:[%s5 + $0x78] sm:$0xff]
    %v1153 = vld [vmem:[%s5 + $0x80] sm:$0xff]
    %v1154 = vld [vmem:[%s5 + $0x88] sm:$0xff]
    %v1155 = vld [vmem:[%s5 + $0x90] sm:$0xff]
    %v1156 = vld [vmem:[%s5 + $0x98] sm:$0xff]
    %v1157 = vld [vmem:[%s5 + $0xa0] sm:$0xf]
    %v1158 = vld [vmem:[%s5 + $0xa8] sm:$0xf]
    %s1159 = scalar_lea.vmem %s5, 176
    %v1160 = vld [vmem:[%s1159] sm:$0xff]
    %v1161 = vld [vmem:[%s1159 + $0x8] sm:$0xff]
    %v1162 = vld [vmem:[%s1159 + $0x10] sm:$0xff]
    %v1163 = vld [vmem:[%s1159 + $0x18] sm:$0xff]
    %v1164 = vld [vmem:[%s1159 + $0x20] sm:$0xff]
    %v1165 = vld [vmem:[%s1159 + $0x28] sm:$0xff]
    %v1166 = vld [vmem:[%s1159 + $0x30] sm:$0xff]
    %v1167 = vld [vmem:[%s1159 + $0x38] sm:$0xff]
    %v1168 = vld [vmem:[%s1159 + $0x40] sm:$0xff]
    %v1169 = vld [vmem:[%s1159 + $0x48] sm:$0xff]
    %v1170 = vld [vmem:[%s1159 + $0x50] sm:$0xff]
    %v1171 = vld [vmem:[%s1159 + $0x58] sm:$0xff]
    %v1172 = vld [vmem:[%s1159 + $0x60] sm:$0xff]
    %v1173 = vld [vmem:[%s1159 + $0x68] sm:$0xff]
    %v1174 = vld [vmem:[%s1159 + $0x70] sm:$0xff]
    %v1175 = vld [vmem:[%s1159 + $0x78] sm:$0xff]
    %v1176 = vld [vmem:[%s1159 + $0x80] sm:$0xff]
    %v1177 = vld [vmem:[%s1159 + $0x88] sm:$0xff]
    %v1178 = vld [vmem:[%s1159 + $0x90] sm:$0xff]
    %v1179 = vld [vmem:[%s1159 + $0x98] sm:$0xff]
    %v1180 = vld [vmem:[%s1159 + $0xa0] sm:$0xf]
    %v1181 = vld [vmem:[%s1159 + $0xa8] sm:$0xf]
    %v1184 = vrot.slane %v1135, 1
    %v1185 = vrot.slane %v1136, 1
    %v1186 = vsel %vm108, %v1184, %v1185
    %vm1187 = vcmask 687104
    %v1188 = vsel %vm1187, %v1186, 0
    %v1190 = vsel %vm1187, %v1185, 0
    %v1193 = vsel %vm612, %v1180, 0
    %v1196 = vsel %vm612, %v1181, 0
    %1198 = vmatprep.subr.mxu0 0.0
    %1199 = vmatpush1.msra.mxu0 0.0
    %1200 = vmatprep.subr.mxu0 0.0
    %1201 = vmatpush1.msra.mxu0 0.0
    %1202 = vmatprep.subr.mxu0 0.0
    %1203 = vmatpush1.msra.mxu0 0.0
    %1204 = vmatprep.subr.mxu0 0.0
    %1205 = vmatpush1.msra.mxu0 0.0
    %1206 = vmatprep.subr.mxu0 0.0
    %1207 = vmatpush1.msra.mxu0 0.0
    %1208 = vmatprep.subr.mxu0 %v1196
    %1209 = vmatpush1.msra.mxu0 %v1193
    %1210 = vmatprep.subr.mxu0 %v1179
    %1211 = vmatpush1.msra.mxu0 %v1178
    %1212 = vmatprep.subr.mxu0 %v1177
    %1213 = vmatpush1.msra.mxu0 %v1176
    %1214 = vmatprep.subr.mxu0 %v1175
    %1215 = vmatpush1.msra.mxu0 %v1174
    %1216 = vmatprep.subr.mxu0 %v1173
    %1217 = vmatpush1.msra.mxu0 %v1172
    %1218 = vmatprep.subr.mxu0 %v1171
    %1219 = vmatpush1.msra.mxu0 %v1170
    %1220 = vmatprep.subr.mxu0 %v1169
    %1221 = vmatpush1.msra.mxu0 %v1168
    %1222 = vmatprep.subr.mxu0 %v1167
    %1223 = vmatpush1.msra.mxu0 %v1166
    %1224 = vmatprep.subr.mxu0 %v1165
    %1225 = vmatpush1.msra.mxu0 %v1164
    %1226 = vmatprep.subr.mxu0 %v1163
    %1227 = vmatpush1.msra.mxu0 %v1162
    %1228 = vmatprep.subr.mxu0 %v1161
    %1229 = vmatpush1.msra.mxu0 %v1160
    %1230 = vmatprep.subr.mxu0 0.0
    %1231 = vmatpush2.msra.mxu0 0.0
    %1232 = vmatprep.subr.mxu0 0.0
    %1233 = vmatpush2.msra.mxu0 0.0
    %1234 = vmatprep.subr.mxu0 0.0
    %1235 = vmatpush2.msra.mxu0 0.0
    %1236 = vmatprep.subr.mxu0 0.0
    %1237 = vmatpush2.msra.mxu0 0.0
    %1238 = vmatprep.subr.mxu0 0.0
    %1239 = vmatpush2.msra.mxu0 0.0
    %1240 = vmatprep.subr.mxu0 0.0
    %1241 = vmatpush2.msra.mxu0 0.0
    %1242 = vmatprep.subr.mxu0 0.0
    %1243 = vmatpush2.msra.mxu0 0.0
    %1244 = vmatprep.subr.mxu0 0.0
    %1245 = vmatpush2.msra.mxu0 0.0
    %1246 = vmatprep.subr.mxu0 0.0
    %1247 = vmatpush2.msra.mxu0 0.0
    %1248 = vmatprep.subr.mxu0 0.0
    %1249 = vmatpush2.msra.mxu0 0.0
    %1250 = vmatprep.subr.mxu0 0.0
    %1251 = vmatpush2.msra.mxu0 0.0
    %1252 = vmatprep.subr.mxu0 0.0
    %1253 = vmatpush2.msra.mxu0 0.0
    %1254 = vmatprep.subr.mxu0 0.0
    %1255 = vmatpush2.msra.mxu0 0.0
    %1256 = vmatprep.subr.mxu0 0.0
    %1257 = vmatpush2.msra.mxu0 0.0
    %1258 = vmatprep.subr.mxu0 0.0
    %1259 = vmatpush2.msra.mxu0 0.0
    %1260 = vmatprep.subr.mxu0 0.0
    %1261 = vmatpush2.msra.mxu0 0.0
    %1262 = vmatprep.mubr.f32.mxu0 0.0
    %1263 = vmatmul.mubr.f32.gmra.mxu0 %v1188
    %v1264 = vpop.f32.mrf.mxu0
    %v1265 = vadd.f32 0.0, %v1264
    %v1266 = vpop.f32.mrf.mxu0
    %v1267 = vadd.f32 0.0, %v1266
    %1268 = vmatprep.mubr.f32.mxu0 0.0
    %1269 = vmatmul.mubr.f32.gmra.mxu0 %v1190
    %v1270 = vpop.f32.mrf.mxu0
    %v1271 = vadd.f32 0.0, %v1270
    %v1272 = vpop.f32.mrf.mxu0
    %v1273 = vadd.f32 0.0, %v1272
    %1274 = vdwg.mxu0
    %v1275 = vsel %vm1187, %v1135, 0
    %v1277 = vsel %vm1187, %v1136, 0
    %v1280 = vsel %vm612, %v1157, 0
    %v1283 = vsel %vm612, %v1158, 0
    %1285 = vmatprep.subr.mxu0 0.0
    %1286 = vmatpush1.msra.mxu0 0.0
    %1287 = vmatprep.subr.mxu0 0.0
    %1288 = vmatpush1.msra.mxu0 0.0
    %1289 = vmatprep.subr.mxu0 0.0
    %1290 = vmatpush1.msra.mxu0 0.0
    %1291 = vmatprep.subr.mxu0 0.0
    %1292 = vmatpush1.msra.mxu0 0.0
    %1293 = vmatprep.subr.mxu0 0.0
    %1294 = vmatpush1.msra.mxu0 0.0
    %1295 = vmatprep.subr.mxu0 %v1283
    %1296 = vmatpush1.msra.mxu0 %v1280
    %1297 = vmatprep.subr.mxu0 %v1156
    %1298 = vmatpush1.msra.mxu0 %v1155
    %1299 = vmatprep.subr.mxu0 %v1154
    %1300 = vmatpush1.msra.mxu0 %v1153
    %1301 = vmatprep.subr.mxu0 %v1152
    %1302 = vmatpush1.msra.mxu0 %v1151
    %1303 = vmatprep.subr.mxu0 %v1150
    %1304 = vmatpush1.msra.mxu0 %v1149
    %1305 = vmatprep.subr.mxu0 %v1148
    %1306 = vmatpush1.msra.mxu0 %v1147
    %1307 = vmatprep.subr.mxu0 %v1146
    %1308 = vmatpush1.msra.mxu0 %v1145
    %1309 = vmatprep.subr.mxu0 %v1144
    %1310 = vmatpush1.msra.mxu0 %v1143
    %1311 = vmatprep.subr.mxu0 %v1142
    %1312 = vmatpush1.msra.mxu0 %v1141
    %1313 = vmatprep.subr.mxu0 %v1140
    %1314 = vmatpush1.msra.mxu0 %v1139
    %1315 = vmatprep.subr.mxu0 %v1138
    %1316 = vmatpush1.msra.mxu0 %v1137
    %1317 = vmatprep.subr.mxu0 0.0
    %1318 = vmatpush2.msra.mxu0 0.0
    %1319 = vmatprep.subr.mxu0 0.0
    %1320 = vmatpush2.msra.mxu0 0.0
    %1321 = vmatprep.subr.mxu0 0.0
    %1322 = vmatpush2.msra.mxu0 0.0
    %1323 = vmatprep.subr.mxu0 0.0
    %1324 = vmatpush2.msra.mxu0 0.0
    %1325 = vmatprep.subr.mxu0 0.0
    %1326 = vmatpush2.msra.mxu0 0.0
    %1327 = vmatprep.subr.mxu0 0.0
    %1328 = vmatpush2.msra.mxu0 0.0
    %1329 = vmatprep.subr.mxu0 0.0
    %1330 = vmatpush2.msra.mxu0 0.0
    %1331 = vmatprep.subr.mxu0 0.0
    %1332 = vmatpush2.msra.mxu0 0.0
    %1333 = vmatprep.subr.mxu0 0.0
    %1334 = vmatpush2.msra.mxu0 0.0
    %1335 = vmatprep.subr.mxu0 0.0
    %1336 = vmatpush2.msra.mxu0 0.0
    %1337 = vmatprep.subr.mxu0 0.0
    %1338 = vmatpush2.msra.mxu0 0.0
    %1339 = vmatprep.subr.mxu0 0.0
    %1340 = vmatpush2.msra.mxu0 0.0
    %1341 = vmatprep.subr.mxu0 0.0
    %1342 = vmatpush2.msra.mxu0 0.0
    %1343 = vmatprep.subr.mxu0 0.0
    %1344 = vmatpush2.msra.mxu0 0.0
    %1345 = vmatprep.subr.mxu0 0.0
    %1346 = vmatpush2.msra.mxu0 0.0
    %1347 = vmatprep.subr.mxu0 0.0
    %1348 = vmatpush2.msra.mxu0 0.0
    %1349 = vmatprep.mubr.f32.mxu0 0.0
    %1350 = vmatmul.mubr.f32.gmra.mxu0 %v1275
    %v1351 = vpop.f32.mrf.mxu0
    %v1352 = vadd.f32 %v1265, %v1351
    %v1353 = vpop.f32.mrf.mxu0
    %v1354 = vadd.f32 %v1267, %v1353
    %1355 = vmatprep.mubr.f32.mxu0 0.0
    %1356 = vmatmul.mubr.f32.gmra.mxu0 %v1277
    %v1357 = vpop.f32.mrf.mxu0
    %v1358 = vadd.f32 %v1271, %v1357
    %v1359 = vpop.f32.mrf.mxu0
    %v1360 = vadd.f32 %v1273, %v1359
    %1361 = vdwg.mxu0
    %s1362 = scalar_lea.vmem %s5, 352
    %v1363 = vld [vmem:[%s1362] sm:$0xff]
    %v1364 = vld [vmem:[%s1362 + $0x8] sm:$0xff]
    %v1365 = vld [vmem:[%s1362 + $0x10] sm:$0xff]
    %v1366 = vld [vmem:[%s1362 + $0x18] sm:$0xff]
    %v1367 = vld [vmem:[%s1362 + $0x20] sm:$0xff]
    %v1368 = vld [vmem:[%s1362 + $0x28] sm:$0xff]
    %v1369 = vld [vmem:[%s1362 + $0x30] sm:$0xff]
    %v1370 = vld [vmem:[%s1362 + $0x38] sm:$0xff]
    %v1371 = vld [vmem:[%s1362 + $0x40] sm:$0xff]
    %v1372 = vld [vmem:[%s1362 + $0x48] sm:$0xff]
    %v1373 = vld [vmem:[%s1362 + $0x50] sm:$0xff]
    %v1374 = vld [vmem:[%s1362 + $0x58] sm:$0xff]
    %v1375 = vld [vmem:[%s1362 + $0x60] sm:$0xff]
    %v1376 = vld [vmem:[%s1362 + $0x68] sm:$0xff]
    %v1377 = vld [vmem:[%s1362 + $0x70] sm:$0xff]
    %v1378 = vld [vmem:[%s1362 + $0x78] sm:$0xff]
    %v1379 = vld [vmem:[%s1362 + $0x80] sm:$0xff]
    %v1380 = vld [vmem:[%s1362 + $0x88] sm:$0xff]
    %v1381 = vld [vmem:[%s1362 + $0x90] sm:$0xff]
    %v1382 = vld [vmem:[%s1362 + $0x98] sm:$0xff]
    %v1383 = vld [vmem:[%s1362 + $0xa0] sm:$0xf]
    %v1384 = vld [vmem:[%s1362 + $0xa8] sm:$0xf]
    %v1385 = vrot.slane %v1135, 2
    %v1386 = vrot.slane %v1136, 2
    %v1387 = vsel %vm336, %v1385, %v1386
    %v1388 = vsel %vm1187, %v1387, 0
    %v1390 = vsel %vm1187, %v1386, 0
    %v1393 = vsel %vm612, %v1383, 0
    %v1396 = vsel %vm612, %v1384, 0
    %1398 = vmatprep.subr.mxu0 0.0
    %1399 = vmatpush1.msra.mxu0 0.0
    %1400 = vmatprep.subr.mxu0 0.0
    %1401 = vmatpush1.msra.mxu0 0.0
    %1402 = vmatprep.subr.mxu0 0.0
    %1403 = vmatpush1.msra.mxu0 0.0
    %1404 = vmatprep.subr.mxu0 0.0
    %1405 = vmatpush1.msra.mxu0 0.0
    %1406 = vmatprep.subr.mxu0 0.0
    %1407 = vmatpush1.msra.mxu0 0.0
    %1408 = vmatprep.subr.mxu0 %v1396
    %1409 = vmatpush1.msra.mxu0 %v1393
    %1410 = vmatprep.subr.mxu0 %v1382
    %1411 = vmatpush1.msra.mxu0 %v1381
    %1412 = vmatprep.subr.mxu0 %v1380
    %1413 = vmatpush1.msra.mxu0 %v1379
    %1414 = vmatprep.subr.mxu0 %v1378
    %1415 = vmatpush1.msra.mxu0 %v1377
    %1416 = vmatprep.subr.mxu0 %v1376
    %1417 = vmatpush1.msra.mxu0 %v1375
    %1418 = vmatprep.subr.mxu0 %v1374
    %1419 = vmatpush1.msra.mxu0 %v1373
    %1420 = vmatprep.subr.mxu0 %v1372
    %1421 = vmatpush1.msra.mxu0 %v1371
    %1422 = vmatprep.subr.mxu0 %v1370
    %1423 = vmatpush1.msra.mxu0 %v1369
    %1424 = vmatprep.subr.mxu0 %v1368
    %1425 = vmatpush1.msra.mxu0 %v1367
    %1426 = vmatprep.subr.mxu0 %v1366
    %1427 = vmatpush1.msra.mxu0 %v1365
    %1428 = vmatprep.subr.mxu0 %v1364
    %1429 = vmatpush1.msra.mxu0 %v1363
    %1430 = vmatprep.subr.mxu0 0.0
    %1431 = vmatpush2.msra.mxu0 0.0
    %1432 = vmatprep.subr.mxu0 0.0
    %1433 = vmatpush2.msra.mxu0 0.0
    %1434 = vmatprep.subr.mxu0 0.0
    %1435 = vmatpush2.msra.mxu0 0.0
    %1436 = vmatprep.subr.mxu0 0.0
    %1437 = vmatpush2.msra.mxu0 0.0
    %1438 = vmatprep.subr.mxu0 0.0
    %1439 = vmatpush2.msra.mxu0 0.0
    %1440 = vmatprep.subr.mxu0 0.0
    %1441 = vmatpush2.msra.mxu0 0.0
    %1442 = vmatprep.subr.mxu0 0.0
    %1443 = vmatpush2.msra.mxu0 0.0
    %1444 = vmatprep.subr.mxu0 0.0
    %1445 = vmatpush2.msra.mxu0 0.0
    %1446 = vmatprep.subr.mxu0 0.0
    %1447 = vmatpush2.msra.mxu0 0.0
    %1448 = vmatprep.subr.mxu0 0.0
    %1449 = vmatpush2.msra.mxu0 0.0
    %1450 = vmatprep.subr.mxu0 0.0
    %1451 = vmatpush2.msra.mxu0 0.0
    %1452 = vmatprep.subr.mxu0 0.0
    %1453 = vmatpush2.msra.mxu0 0.0
    %1454 = vmatprep.subr.mxu0 0.0
    %1455 = vmatpush2.msra.mxu0 0.0
    %1456 = vmatprep.subr.mxu0 0.0
    %1457 = vmatpush2.msra.mxu0 0.0
    %1458 = vmatprep.subr.mxu0 0.0
    %1459 = vmatpush2.msra.mxu0 0.0
    %1460 = vmatprep.subr.mxu0 0.0
    %1461 = vmatpush2.msra.mxu0 0.0
    %1462 = vmatprep.mubr.f32.mxu0 0.0
    %1463 = vmatmul.mubr.f32.gmra.mxu0 %v1388
    %v1464 = vpop.f32.mrf.mxu0
    %v1465 = vadd.f32 0.0, %v1464
    %v1466 = vpop.f32.mrf.mxu0
    %v1467 = vadd.f32 0.0, %v1466
    %1468 = vmatprep.mubr.f32.mxu0 0.0
    %1469 = vmatmul.mubr.f32.gmra.mxu0 %v1390
    %v1470 = vpop.f32.mrf.mxu0
    %v1471 = vadd.f32 0.0, %v1470
    %v1472 = vpop.f32.mrf.mxu0
    %v1473 = vadd.f32 0.0, %v1472
    %1474 = vdwg.mxu0
    %v1475 = vadd.f32 %v1352, %v1465
    %v1476 = vadd.f32 %v1354, %v1467
    %v1477 = vadd.f32 %v1358, %v1471
    %v1478 = vadd.f32 %v1360, %v1473
    %s1479 = scalar_lea.vmem %s5, 528
    %v1480 = vld [vmem:[%s1479] sm:$0xff]
    %v1481 = vld [vmem:[%s1479 + $0x8] sm:$0xff]
    %v1482 = vld [vmem:[%s1479 + $0x10] sm:$0xff]
    %v1483 = vld [vmem:[%s1479 + $0x18] sm:$0xff]
    %v1484 = vld [vmem:[%s1479 + $0x20] sm:$0xff]
    %v1485 = vld [vmem:[%s1479 + $0x28] sm:$0xff]
    %v1486 = vld [vmem:[%s1479 + $0x30] sm:$0xff]
    %v1487 = vld [vmem:[%s1479 + $0x38] sm:$0xff]
    %v1488 = vld [vmem:[%s1479 + $0x40] sm:$0xff]
    %v1489 = vld [vmem:[%s1479 + $0x48] sm:$0xff]
    %v1490 = vld [vmem:[%s1479 + $0x50] sm:$0xff]
    %v1491 = vld [vmem:[%s1479 + $0x58] sm:$0xff]
    %v1492 = vld [vmem:[%s1479 + $0x60] sm:$0xff]
    %v1493 = vld [vmem:[%s1479 + $0x68] sm:$0xff]
    %v1494 = vld [vmem:[%s1479 + $0x70] sm:$0xff]
    %v1495 = vld [vmem:[%s1479 + $0x78] sm:$0xff]
    %v1496 = vld [vmem:[%s1479 + $0x80] sm:$0xff]
    %v1497 = vld [vmem:[%s1479 + $0x88] sm:$0xff]
    %v1498 = vld [vmem:[%s1479 + $0x90] sm:$0xff]
    %v1499 = vld [vmem:[%s1479 + $0x98] sm:$0xff]
    %v1500 = vld [vmem:[%s1479 + $0xa0] sm:$0xf]
    %v1501 = vld [vmem:[%s1479 + $0xa8] sm:$0xf]
    %v1502 = vrot.slane %v1135, 3
    %v1503 = vrot.slane %v1136, 3
    %v1504 = vsel %vm474, %v1502, %v1503
    %v1505 = vsel %vm1187, %v1504, 0
    %v1507 = vsel %vm1187, %v1503, 0
    %v1510 = vsel %vm612, %v1500, 0
    %v1513 = vsel %vm612, %v1501, 0
    %1515 = vmatprep.subr.mxu0 0.0
    %1516 = vmatpush1.msra.mxu0 0.0
    %1517 = vmatprep.subr.mxu0 0.0
    %1518 = vmatpush1.msra.mxu0 0.0
    %1519 = vmatprep.subr.mxu0 0.0
    %1520 = vmatpush1.msra.mxu0 0.0
    %1521 = vmatprep.subr.mxu0 0.0
    %1522 = vmatpush1.msra.mxu0 0.0
    %1523 = vmatprep.subr.mxu0 0.0
    %1524 = vmatpush1.msra.mxu0 0.0
    %1525 = vmatprep.subr.mxu0 %v1513
    %1526 = vmatpush1.msra.mxu0 %v1510
    %1527 = vmatprep.subr.mxu0 %v1499
    %1528 = vmatpush1.msra.mxu0 %v1498
    %1529 = vmatprep.subr.mxu0 %v1497
    %1530 = vmatpush1.msra.mxu0 %v1496
    %1531 = vmatprep.subr.mxu0 %v1495
    %1532 = vmatpush1.msra.mxu0 %v1494
    %1533 = vmatprep.subr.mxu0 %v1493
    %1534 = vmatpush1.msra.mxu0 %v1492
    %1535 = vmatprep.subr.mxu0 %v1491
    %1536 = vmatpush1.msra.mxu0 %v1490
    %1537 = vmatprep.subr.mxu0 %v1489
    %1538 = vmatpush1.msra.mxu0 %v1488
    %1539 = vmatprep.subr.mxu0 %v1487
    %1540 = vmatpush1.msra.mxu0 %v1486
    %1541 = vmatprep.subr.mxu0 %v1485
    %1542 = vmatpush1.msra.mxu0 %v1484
    %1543 = vmatprep.subr.mxu0 %v1483
    %1544 = vmatpush1.msra.mxu0 %v1482
    %1545 = vmatprep.subr.mxu0 %v1481
    %1546 = vmatpush1.msra.mxu0 %v1480
    %1547 = vmatprep.subr.mxu0 0.0
    %1548 = vmatpush2.msra.mxu0 0.0
    %1549 = vmatprep.subr.mxu0 0.0
    %1550 = vmatpush2.msra.mxu0 0.0
    %1551 = vmatprep.subr.mxu0 0.0
    %1552 = vmatpush2.msra.mxu0 0.0
    %1553 = vmatprep.subr.mxu0 0.0
    %1554 = vmatpush2.msra.mxu0 0.0
    %1555 = vmatprep.subr.mxu0 0.0
    %1556 = vmatpush2.msra.mxu0 0.0
    %1557 = vmatprep.subr.mxu0 0.0
    %1558 = vmatpush2.msra.mxu0 0.0
    %1559 = vmatprep.subr.mxu0 0.0
    %1560 = vmatpush2.msra.mxu0 0.0
    %1561 = vmatprep.subr.mxu0 0.0
    %1562 = vmatpush2.msra.mxu0 0.0
    %1563 = vmatprep.subr.mxu0 0.0
    %1564 = vmatpush2.msra.mxu0 0.0
    %1565 = vmatprep.subr.mxu0 0.0
    %1566 = vmatpush2.msra.mxu0 0.0
    %1567 = vmatprep.subr.mxu0 0.0
    %1568 = vmatpush2.msra.mxu0 0.0
    %1569 = vmatprep.subr.mxu0 0.0
    %1570 = vmatpush2.msra.mxu0 0.0
    %1571 = vmatprep.subr.mxu0 0.0
    %1572 = vmatpush2.msra.mxu0 0.0
    %1573 = vmatprep.subr.mxu0 0.0
    %1574 = vmatpush2.msra.mxu0 0.0
    %1575 = vmatprep.subr.mxu0 0.0
    %1576 = vmatpush2.msra.mxu0 0.0
    %1577 = vmatprep.subr.mxu0 0.0
    %1578 = vmatpush2.msra.mxu0 0.0
    %1579 = vmatprep.mubr.f32.mxu0 0.0
    %1580 = vmatmul.mubr.f32.gmra.mxu0 %v1505
    %v1581 = vpop.f32.mrf.mxu0
    %v1582 = vadd.f32 0.0, %v1581
    %v1583 = vpop.f32.mrf.mxu0
    %v1584 = vadd.f32 0.0, %v1583
    %1585 = vmatprep.mubr.f32.mxu0 0.0
    %1586 = vmatmul.mubr.f32.gmra.mxu0 %v1507
    %v1587 = vpop.f32.mrf.mxu0
    %v1588 = vadd.f32 0.0, %v1587
    %v1589 = vpop.f32.mrf.mxu0
    %v1590 = vadd.f32 0.0, %v1589
    %1591 = vdwg.mxu0
    %v1592 = vadd.f32 %v1475, %v1582
    %v1593 = vadd.f32 %v1476, %v1584
    %v1594 = vadd.f32 %v1477, %v1588
    %v1595 = vadd.f32 %v1478, %v1590
    %s1596 = scalar_lea.vmem %s5, 704
    %v1597 = vld [vmem:[%s1596] sm:$0xff]
    %v1598 = vld [vmem:[%s1596 + $0x8] sm:$0xff]
    %v1599 = vld [vmem:[%s1596 + $0x10] sm:$0xff]
    %v1600 = vld [vmem:[%s1596 + $0x18] sm:$0xff]
    %v1601 = vld [vmem:[%s1596 + $0x20] sm:$0xff]
    %v1602 = vld [vmem:[%s1596 + $0x28] sm:$0xff]
    %v1603 = vld [vmem:[%s1596 + $0x30] sm:$0xff]
    %v1604 = vld [vmem:[%s1596 + $0x38] sm:$0xff]
    %v1605 = vld [vmem:[%s1596 + $0x40] sm:$0xff]
    %v1606 = vld [vmem:[%s1596 + $0x48] sm:$0xff]
    %v1607 = vld [vmem:[%s1596 + $0x50] sm:$0xff]
    %v1608 = vld [vmem:[%s1596 + $0x58] sm:$0xff]
    %v1609 = vld [vmem:[%s1596 + $0x60] sm:$0xff]
    %v1610 = vld [vmem:[%s1596 + $0x68] sm:$0xff]
    %v1611 = vld [vmem:[%s1596 + $0x70] sm:$0xff]
    %v1612 = vld [vmem:[%s1596 + $0x78] sm:$0xff]
    %v1613 = vld [vmem:[%s1596 + $0x80] sm:$0xff]
    %v1614 = vld [vmem:[%s1596 + $0x88] sm:$0xff]
    %v1615 = vld [vmem:[%s1596 + $0x90] sm:$0xff]
    %v1616 = vld [vmem:[%s1596 + $0x98] sm:$0xff]
    %v1617 = vld [vmem:[%s1596 + $0xa0] sm:$0xf]
    %v1618 = vld [vmem:[%s1596 + $0xa8] sm:$0xf]
    %v1619 = vrot.slane %v1135, 4
    %v1620 = vrot.slane %v1136, 4
    %v1621 = vsel %vm612, %v1619, %v1620
    %v1622 = vsel %vm1187, %v1621, 0
    %v1624 = vsel %vm1187, %v1620, 0
    %v1627 = vsel %vm612, %v1617, 0
    %v1630 = vsel %vm612, %v1618, 0
    %1632 = vmatprep.subr.mxu0 0.0
    %1633 = vmatpush1.msra.mxu0 0.0
    %1634 = vmatprep.subr.mxu0 0.0
    %1635 = vmatpush1.msra.mxu0 0.0
    %1636 = vmatprep.subr.mxu0 0.0
    %1637 = vmatpush1.msra.mxu0 0.0
    %1638 = vmatprep.subr.mxu0 0.0
    %1639 = vmatpush1.msra.mxu0 0.0
    %1640 = vmatprep.subr.mxu0 0.0
    %1641 = vmatpush1.msra.mxu0 0.0
    %1642 = vmatprep.subr.mxu0 %v1630
    %1643 = vmatpush1.msra.mxu0 %v1627
    %1644 = vmatprep.subr.mxu0 %v1616
    %1645 = vmatpush1.msra.mxu0 %v1615
    %1646 = vmatprep.subr.mxu0 %v1614
    %1647 = vmatpush1.msra.mxu0 %v1613
    %1648 = vmatprep.subr.mxu0 %v1612
    %1649 = vmatpush1.msra.mxu0 %v1611
    %1650 = vmatprep.subr.mxu0 %v1610
    %1651 = vmatpush1.msra.mxu0 %v1609
    %1652 = vmatprep.subr.mxu0 %v1608
    %1653 = vmatpush1.msra.mxu0 %v1607
    %1654 = vmatprep.subr.mxu0 %v1606
    %1655 = vmatpush1.msra.mxu0 %v1605
    %1656 = vmatprep.subr.mxu0 %v1604
    %1657 = vmatpush1.msra.mxu0 %v1603
    %1658 = vmatprep.subr.mxu0 %v1602
    %1659 = vmatpush1.msra.mxu0 %v1601
    %1660 = vmatprep.subr.mxu0 %v1600
    %1661 = vmatpush1.msra.mxu0 %v1599
    %1662 = vmatprep.subr.mxu0 %v1598
    %1663 = vmatpush1.msra.mxu0 %v1597
    %1664 = vmatprep.subr.mxu0 0.0
    %1665 = vmatpush2.msra.mxu0 0.0
    %1666 = vmatprep.subr.mxu0 0.0
    %1667 = vmatpush2.msra.mxu0 0.0
    %1668 = vmatprep.subr.mxu0 0.0
    %1669 = vmatpush2.msra.mxu0 0.0
    %1670 = vmatprep.subr.mxu0 0.0
    %1671 = vmatpush2.msra.mxu0 0.0
    %1672 = vmatprep.subr.mxu0 0.0
    %1673 = vmatpush2.msra.mxu0 0.0
    %1674 = vmatprep.subr.mxu0 0.0
    %1675 = vmatpush2.msra.mxu0 0.0
    %1676 = vmatprep.subr.mxu0 0.0
    %1677 = vmatpush2.msra.mxu0 0.0
    %1678 = vmatprep.subr.mxu0 0.0
    %1679 = vmatpush2.msra.mxu0 0.0
    %1680 = vmatprep.subr.mxu0 0.0
    %1681 = vmatpush2.msra.mxu0 0.0
    %1682 = vmatprep.subr.mxu0 0.0
    %1683 = vmatpush2.msra.mxu0 0.0
    %1684 = vmatprep.subr.mxu0 0.0
    %1685 = vmatpush2.msra.mxu0 0.0
    %1686 = vmatprep.subr.mxu0 0.0
    %1687 = vmatpush2.msra.mxu0 0.0
    %1688 = vmatprep.subr.mxu0 0.0
    %1689 = vmatpush2.msra.mxu0 0.0
    %1690 = vmatprep.subr.mxu0 0.0
    %1691 = vmatpush2.msra.mxu0 0.0
    %1692 = vmatprep.subr.mxu0 0.0
    %1693 = vmatpush2.msra.mxu0 0.0
    %1694 = vmatprep.subr.mxu0 0.0
    %1695 = vmatpush2.msra.mxu0 0.0
    %1696 = vmatprep.mubr.f32.mxu0 0.0
    %1697 = vmatmul.mubr.f32.gmra.mxu0 %v1622
    %v1698 = vpop.f32.mrf.mxu0
    %v1699 = vadd.f32 0.0, %v1698
    %v1700 = vpop.f32.mrf.mxu0
    %v1701 = vadd.f32 0.0, %v1700
    %1702 = vmatprep.mubr.f32.mxu0 0.0
    %1703 = vmatmul.mubr.f32.gmra.mxu0 %v1624
    %v1704 = vpop.f32.mrf.mxu0
    %v1705 = vadd.f32 0.0, %v1704
    %v1706 = vpop.f32.mrf.mxu0
    %v1707 = vadd.f32 0.0, %v1706
    %1708 = vdwg.mxu0
    %v1709 = vadd.f32 %v1592, %v1699
    %v1710 = vadd.f32 %v1593, %v1701
    %v1711 = vadd.f32 %v1594, %v1705
    %v1712 = vadd.f32 %v1595, %v1707
    %v1713 = vld [vmem:[%s6] sm:$0x3]
    %v1715 = vlaneseq
    %v1716 = vshrl.u32 %v1715, 7
    %v1717 = vsub.s32 0, %v1716
    %v1718 = vrot.slane %v1713, %v1717
    %v1719 = vlaneseq
    %v1720 = vshrl.u32 %v1719, 7
    %v1721 = vsub.s32 1, %v1720
    %v1722 = vrot.slane %v1713, %v1721
    %v1725 = vadd.f32 %v1709, %v1718
    %v1726 = vadd.f32 %v1710, %v1722
    %v1727 = vadd.f32 %v1711, %v1718
    %v1728 = vadd.f32 %v1712, %v1722
    %v1729 = vmax.f32 %v1725, 0.0
    %v1730 = vmax.f32 %v1726, 0.0
    %v1731 = vmax.f32 %v1727, 0.0
    %v1732 = vmax.f32 %v1728, 0.0
    %v1733 = vld [vmem:[%s7] sm:$0x1f]
    %vm1734 = vcmask 80896
    %v1736 = vsel %vm1734, %v1733, 0
    %vm1738 = vcmask 1041408
    %v1740 = vsel %vm1738, %v1731, 0
    %v1743 = vsel %vm1738, %v1732, 0
    %1745 = vmatprep.subr.mxu0 0.0
    %1746 = vmatpush1.msra.mxu0 0.0
    %1747 = vmatprep.subr.mxu0 0.0
    %1748 = vmatpush1.msra.mxu0 0.0
    %1749 = vmatprep.subr.mxu0 0.0
    %1750 = vmatpush1.msra.mxu0 0.0
    %1751 = vmatprep.subr.mxu0 0.0
    %1752 = vmatpush1.msra.mxu0 0.0
    %1753 = vmatprep.subr.mxu0 0.0
    %1754 = vmatpush1.msra.mxu0 0.0
    %1755 = vmatprep.subr.mxu0 0.0
    %1756 = vmatpush1.msra.mxu0 0.0
    %1757 = vmatprep.subr.mxu0 0.0
    %1758 = vmatpush1.msra.mxu0 0.0
    %1759 = vmatprep.subr.mxu0 0.0
    %1760 = vmatpush1.msra.mxu0 0.0
    %1761 = vmatprep.subr.mxu0 0.0
    %1762 = vmatpush1.msra.mxu0 0.0
    %1763 = vmatprep.subr.mxu0 0.0
    %1764 = vmatpush1.msra.mxu0 0.0
    %1765 = vmatprep.subr.mxu0 0.0
    %1766 = vmatpush1.msra.mxu0 0.0
    %1767 = vmatprep.subr.mxu0 0.0
    %1768 = vmatpush1.msra.mxu0 0.0
    %1769 = vmatprep.subr.mxu0 0.0
    %1770 = vmatpush1.msra.mxu0 0.0
    %1771 = vmatprep.subr.mxu0 0.0
    %1772 = vmatpush1.msra.mxu0 0.0
    %1773 = vmatprep.subr.mxu0 %v1743
    %1774 = vmatpush1.msra.mxu0 %v1740
    %1775 = vmatprep.subr.mxu0 %v1730
    %1776 = vmatpush1.msra.mxu0 %v1729
    %1777 = vmatprep.subr.mxu0 0.0
    %1778 = vmatpush2.msra.mxu0 0.0
    %1779 = vmatprep.subr.mxu0 0.0
    %1780 = vmatpush2.msra.mxu0 0.0
    %1781 = vmatprep.subr.mxu0 0.0
    %1782 = vmatpush2.msra.mxu0 0.0
    %1783 = vmatprep.subr.mxu0 0.0
    %1784 = vmatpush2.msra.mxu0 0.0
    %1785 = vmatprep.subr.mxu0 0.0
    %1786 = vmatpush2.msra.mxu0 0.0
    %1787 = vmatprep.subr.mxu0 0.0
    %1788 = vmatpush2.msra.mxu0 0.0
    %1789 = vmatprep.subr.mxu0 0.0
    %1790 = vmatpush2.msra.mxu0 0.0
    %1791 = vmatprep.subr.mxu0 0.0
    %1792 = vmatpush2.msra.mxu0 0.0
    %1793 = vmatprep.subr.mxu0 0.0
    %1794 = vmatpush2.msra.mxu0 0.0
    %1795 = vmatprep.subr.mxu0 0.0
    %1796 = vmatpush2.msra.mxu0 0.0
    %1797 = vmatprep.subr.mxu0 0.0
    %1798 = vmatpush2.msra.mxu0 0.0
    %1799 = vmatprep.subr.mxu0 0.0
    %1800 = vmatpush2.msra.mxu0 0.0
    %1801 = vmatprep.subr.mxu0 0.0
    %1802 = vmatpush2.msra.mxu0 0.0
    %1803 = vmatprep.subr.mxu0 0.0
    %1804 = vmatpush2.msra.mxu0 0.0
    %1805 = vmatprep.subr.mxu0 0.0
    %1806 = vmatpush2.msra.mxu0 0.0
    %1807 = vmatprep.subr.mxu0 0.0
    %1808 = vmatpush2.msra.mxu0 0.0
    %1809 = vmatprep.mubr.f32.mxu0 0.0
    %1810 = vmatmul.mubr.f32.gmra.mxu0 %v1736
    %v1811 = vpop.f32.mrf.mxu0
    %v1812 = vadd.f32 0.0, %v1811
    %v1813 = vpop.f32.mrf.mxu0
    %v1814 = vadd.f32 0.0, %v1813
    %1815 = vdwg.mxu0
    %s1816 = scalar_lea.vmem %s7, 8
    %v1817 = vld [vmem:[%s1816] sm:$0x1f]
    %v1819 = vsel %vm1734, %v1817, 0
    %1821 = vmatprep.subr.mxu0 0.0
    %1822 = vmatpush1.msra.mxu0 0.0
    %1823 = vmatprep.subr.mxu0 0.0
    %1824 = vmatpush1.msra.mxu0 0.0
    %1825 = vmatprep.subr.mxu0 0.0
    %1826 = vmatpush1.msra.mxu0 0.0
    %1827 = vmatprep.subr.mxu0 0.0
    %1828 = vmatpush1.msra.mxu0 0.0
    %1829 = vmatprep.subr.mxu0 0.0
    %1830 = vmatpush1.msra.mxu0 0.0
    %1831 = vmatprep.subr.mxu0 0.0
    %1832 = vmatpush1.msra.mxu0 0.0
    %1833 = vmatprep.subr.mxu0 0.0
    %1834 = vmatpush1.msra.mxu0 0.0
    %1835 = vmatprep.subr.mxu0 0.0
    %1836 = vmatpush1.msra.mxu0 0.0
    %1837 = vmatprep.subr.mxu0 0.0
    %1838 = vmatpush1.msra.mxu0 0.0
    %1839 = vmatprep.subr.mxu0 0.0
    %1840 = vmatpush1.msra.mxu0 0.0
    %1841 = vmatprep.subr.mxu0 0.0
    %1842 = vmatpush1.msra.mxu0 0.0
    %1843 = vmatprep.subr.mxu0 0.0
    %1844 = vmatpush1.msra.mxu0 0.0
    %1845 = vmatprep.subr.mxu0 0.0
    %1846 = vmatpush1.msra.mxu0 0.0
    %1847 = vmatprep.subr.mxu0 0.0
    %1848 = vmatpush1.msra.mxu0 0.0
    %1849 = vmatprep.subr.mxu0 %v1743
    %1850 = vmatpush1.msra.mxu0 %v1740
    %1851 = vmatprep.subr.mxu0 %v1730
    %1852 = vmatpush1.msra.mxu0 %v1729
    %1853 = vmatprep.subr.mxu0 0.0
    %1854 = vmatpush2.msra.mxu0 0.0
    %1855 = vmatprep.subr.mxu0 0.0
    %1856 = vmatpush2.msra.mxu0 0.0
    %1857 = vmatprep.subr.mxu0 0.0
    %1858 = vmatpush2.msra.mxu0 0.0
    %1859 = vmatprep.subr.mxu0 0.0
    %1860 = vmatpush2.msra.mxu0 0.0
    %1861 = vmatprep.subr.mxu0 0.0
    %1862 = vmatpush2.msra.mxu0 0.0
    %1863 = vmatprep.subr.mxu0 0.0
    %1864 = vmatpush2.msra.mxu0 0.0
    %1865 = vmatprep.subr.mxu0 0.0
    %1866 = vmatpush2.msra.mxu0 0.0
    %1867 = vmatprep.subr.mxu0 0.0
    %1868 = vmatpush2.msra.mxu0 0.0
    %1869 = vmatprep.subr.mxu0 0.0
    %1870 = vmatpush2.msra.mxu0 0.0
    %1871 = vmatprep.subr.mxu0 0.0
    %1872 = vmatpush2.msra.mxu0 0.0
    %1873 = vmatprep.subr.mxu0 0.0
    %1874 = vmatpush2.msra.mxu0 0.0
    %1875 = vmatprep.subr.mxu0 0.0
    %1876 = vmatpush2.msra.mxu0 0.0
    %1877 = vmatprep.subr.mxu0 0.0
    %1878 = vmatpush2.msra.mxu0 0.0
    %1879 = vmatprep.subr.mxu0 0.0
    %1880 = vmatpush2.msra.mxu0 0.0
    %1881 = vmatprep.subr.mxu0 0.0
    %1882 = vmatpush2.msra.mxu0 0.0
    %1883 = vmatprep.subr.mxu0 0.0
    %1884 = vmatpush2.msra.mxu0 0.0
    %1885 = vmatprep.mubr.f32.mxu0 0.0
    %1886 = vmatmul.mubr.f32.gmra.mxu0 %v1819
    %v1887 = vpop.f32.mrf.mxu0
    %v1888 = vadd.f32 0.0, %v1887
    %v1889 = vpop.f32.mrf.mxu0
    %v1890 = vadd.f32 0.0, %v1889
    %1891 = vdwg.mxu0
    %v1892 = vmax.f32 %v1812, %v1888
    %v1893 = vmax.f32 %v1814, %v1890
    %v1894 = vld [vmem:[%s8] sm:$0xff]
    %v1895 = vld [vmem:[%s8 + $0x8] sm:$0xff]
    %v1896 = vld [vmem:[%s8 + $0x10] sm:$0xff]
    %v1897 = vld [vmem:[%s8 + $0x18] sm:$0xff]
    %v1898 = vld [vmem:[%s8 + $0x20] sm:$0xff]
    %v1899 = vld [vmem:[%s8 + $0x28] sm:$0xff]
    %v1900 = vld [vmem:[%s8 + $0x30] sm:$0xff]
    %v1901 = vld [vmem:[%s8 + $0x38] sm:$0xff]
    %v1902 = vld [vmem:[%s8 + $0x40] sm:$0xff]
    %v1903 = vld [vmem:[%s8 + $0x48] sm:$0xff]
    %v1904 = vld [vmem:[%s8 + $0x50] sm:$0xff]
    %v1905 = vld [vmem:[%s8 + $0x58] sm:$0xff]
    %v1906 = vld [vmem:[%s8 + $0x60] sm:$0xff]
    %v1907 = vld [vmem:[%s8 + $0x68] sm:$0xff]
    %v1908 = vld [vmem:[%s8 + $0x70] sm:$0xff]
    %v1909 = vld [vmem:[%s8 + $0x78] sm:$0xff]
    %v1910 = vld [vmem:[%s8 + $0x80] sm:$0xff]
    %v1911 = vld [vmem:[%s8 + $0x88] sm:$0xff]
    %v1912 = vld [vmem:[%s8 + $0x90] sm:$0xff]
    %v1913 = vld [vmem:[%s8 + $0x98] sm:$0xff]
    %vm1914 = vcmask 261120
    %v1916 = vsel %vm1914, %v1893, 0
    %1918 = vmatprep.subr.mxu0 0.0
    %1919 = vmatpush1.msra.mxu0 %v1909
    %1920 = vmatprep.subr.mxu0 0.0
    %1921 = vmatpush1.msra.mxu0 %v1908
    %1922 = vmatprep.subr.mxu0 0.0
    %1923 = vmatpush1.msra.mxu0 %v1907
    %1924 = vmatprep.subr.mxu0 0.0
    %1925 = vmatpush1.msra.mxu0 %v1906
    %1926 = vmatprep.subr.mxu0 0.0
    %1927 = vmatpush1.msra.mxu0 %v1905
    %1928 = vmatprep.subr.mxu0 0.0
    %1929 = vmatpush1.msra.mxu0 %v1904
    %1930 = vmatprep.subr.mxu0 0.0
    %1931 = vmatpush1.msra.mxu0 %v1903
    %1932 = vmatprep.subr.mxu0 0.0
    %1933 = vmatpush1.msra.mxu0 %v1902
    %1934 = vmatprep.subr.mxu0 0.0
    %1935 = vmatpush1.msra.mxu0 %v1901
    %1936 = vmatprep.subr.mxu0 0.0
    %1937 = vmatpush1.msra.mxu0 %v1900
    %1938 = vmatprep.subr.mxu0 0.0
    %1939 = vmatpush1.msra.mxu0 %v1899
    %1940 = vmatprep.subr.mxu0 0.0
    %1941 = vmatpush1.msra.mxu0 %v1898
    %1942 = vmatprep.subr.mxu0 0.0
    %1943 = vmatpush1.msra.mxu0 %v1897
    %1944 = vmatprep.subr.mxu0 0.0
    %1945 = vmatpush1.msra.mxu0 %v1896
    %1946 = vmatprep.subr.mxu0 0.0
    %1947 = vmatpush1.msra.mxu0 %v1895
    %1948 = vmatprep.subr.mxu0 0.0
    %1949 = vmatpush1.msra.mxu0 %v1894
    %1950 = vmatprep.subr.mxu0 0.0
    %1951 = vmatpush2.msra.mxu0 0.0
    %1952 = vmatprep.subr.mxu0 0.0
    %1953 = vmatpush2.msra.mxu0 0.0
    %1954 = vmatprep.subr.mxu0 0.0
    %1955 = vmatpush2.msra.mxu0 0.0
    %1956 = vmatprep.subr.mxu0 0.0
    %1957 = vmatpush2.msra.mxu0 0.0
    %1958 = vmatprep.subr.mxu0 0.0
    %1959 = vmatpush2.msra.mxu0 0.0
    %1960 = vmatprep.subr.mxu0 0.0
    %1961 = vmatpush2.msra.mxu0 0.0
    %1962 = vmatprep.subr.mxu0 0.0
    %1963 = vmatpush2.msra.mxu0 0.0
    %1964 = vmatprep.subr.mxu0 0.0
    %1965 = vmatpush2.msra.mxu0 0.0
    %1966 = vmatprep.subr.mxu0 0.0
    %1967 = vmatpush2.msra.mxu0 0.0
    %1968 = vmatprep.subr.mxu0 0.0
    %1969 = vmatpush2.msra.mxu0 0.0
    %1970 = vmatprep.subr.mxu0 0.0
    %1971 = vmatpush2.msra.mxu0 0.0
    %1972 = vmatprep.subr.mxu0 0.0
    %1973 = vmatpush2.msra.mxu0 0.0
    %1974 = vmatprep.subr.mxu0 0.0
    %1975 = vmatpush2.msra.mxu0 %v1913
    %1976 = vmatprep.subr.mxu0 0.0
    %1977 = vmatpush2.msra.mxu0 %v1912
    %1978 = vmatprep.subr.mxu0 0.0
    %1979 = vmatpush2.msra.mxu0 %v1911
    %1980 = vmatprep.subr.mxu0 0.0
    %1981 = vmatpush2.msra.mxu0 %v1910
    %1982 = vmatprep.mubr.f32.mxu0 %v1916
    %1983 = vmatmul.mubr.f32.gmra.mxu0 %v1892
    %v1984 = vpop.f32.mrf.mxu0
    %v1985 = vadd.f32 0.0, %v1984
    %v1986 = vpop.f32.mrf.mxu0
    %1987 = vdwg.mxu0
    %s1988 = scalar_lea.vmem %s8, 160
    %v1989 = vld [vmem:[%s1988] sm:$0xff]
    %v1990 = vld [vmem:[%s1988 + $0x8] sm:$0xff]
    %v1991 = vld [vmem:[%s1988 + $0x10] sm:$0xff]
    %v1992 = vld [vmem:[%s1988 + $0x18] sm:$0xff]
    %v1993 = vld [vmem:[%s1988 + $0x20] sm:$0xff]
    %v1994 = vld [vmem:[%s1988 + $0x28] sm:$0xff]
    %v1995 = vld [vmem:[%s1988 + $0x30] sm:$0xff]
    %v1996 = vld [vmem:[%s1988 + $0x38] sm:$0xff]
    %v1997 = vld [vmem:[%s1988 + $0x40] sm:$0xff]
    %v1998 = vld [vmem:[%s1988 + $0x48] sm:$0xff]
    %v1999 = vld [vmem:[%s1988 + $0x50] sm:$0xff]
    %v2000 = vld [vmem:[%s1988 + $0x58] sm:$0xff]
    %v2001 = vld [vmem:[%s1988 + $0x60] sm:$0xff]
    %v2002 = vld [vmem:[%s1988 + $0x68] sm:$0xff]
    %v2003 = vld [vmem:[%s1988 + $0x70] sm:$0xff]
    %v2004 = vld [vmem:[%s1988 + $0x78] sm:$0xff]
    %v2005 = vld [vmem:[%s1988 + $0x80] sm:$0xff]
    %v2006 = vld [vmem:[%s1988 + $0x88] sm:$0xff]
    %v2007 = vld [vmem:[%s1988 + $0x90] sm:$0xff]
    %v2008 = vld [vmem:[%s1988 + $0x98] sm:$0xff]
    %2009 = vmatprep.subr.mxu0 0.0
    %2010 = vmatpush1.msra.mxu0 %v2004
    %2011 = vmatprep.subr.mxu0 0.0
    %2012 = vmatpush1.msra.mxu0 %v2003
    %2013 = vmatprep.subr.mxu0 0.0
    %2014 = vmatpush1.msra.mxu0 %v2002
    %2015 = vmatprep.subr.mxu0 0.0
    %2016 = vmatpush1.msra.mxu0 %v2001
    %2017 = vmatprep.subr.mxu0 0.0
    %2018 = vmatpush1.msra.mxu0 %v2000
    %2019 = vmatprep.subr.mxu0 0.0
    %2020 = vmatpush1.msra.mxu0 %v1999
    %2021 = vmatprep.subr.mxu0 0.0
    %2022 = vmatpush1.msra.mxu0 %v1998
    %2023 = vmatprep.subr.mxu0 0.0
    %2024 = vmatpush1.msra.mxu0 %v1997
    %2025 = vmatprep.subr.mxu0 0.0
    %2026 = vmatpush1.msra.mxu0 %v1996
    %2027 = vmatprep.subr.mxu0 0.0
    %2028 = vmatpush1.msra.mxu0 %v1995
    %2029 = vmatprep.subr.mxu0 0.0
    %2030 = vmatpush1.msra.mxu0 %v1994
    %2031 = vmatprep.subr.mxu0 0.0
    %2032 = vmatpush1.msra.mxu0 %v1993
    %2033 = vmatprep.subr.mxu0 0.0
    %2034 = vmatpush1.msra.mxu0 %v1992
    %2035 = vmatprep.subr.mxu0 0.0
    %2036 = vmatpush1.msra.mxu0 %v1991
    %2037 = vmatprep.subr.mxu0 0.0
    %2038 = vmatpush1.msra.mxu0 %v1990
    %2039 = vmatprep.subr.mxu0 0.0
    %2040 = vmatpush1.msra.mxu0 %v1989
    %2041 = vmatprep.subr.mxu0 0.0
    %2042 = vmatpush2.msra.mxu0 0.0
    %2043 = vmatprep.subr.mxu0 0.0
    %2044 = vmatpush2.msra.mxu0 0.0
    %2045 = vmatprep.subr.mxu0 0.0
    %2046 = vmatpush2.msra.mxu0 0.0
    %2047 = vmatprep.subr.mxu0 0.0
    %2048 = vmatpush2.msra.mxu0 0.0
    %2049 = vmatprep.subr.mxu0 0.0
    %2050 = vmatpush2.msra.mxu0 0.0
    %2051 = vmatprep.subr.mxu0 0.0
    %2052 = vmatpush2.msra.mxu0 0.0
    %2053 = vmatprep.subr.mxu0 0.0
    %2054 = vmatpush2.msra.mxu0 0.0
    %2055 = vmatprep.subr.mxu0 0.0
    %2056 = vmatpush2.msra.mxu0 0.0
    %2057 = vmatprep.subr.mxu0 0.0
    %2058 = vmatpush2.msra.mxu0 0.0
    %2059 = vmatprep.subr.mxu0 0.0
    %2060 = vmatpush2.msra.mxu0 0.0
    %2061 = vmatprep.subr.mxu0 0.0
    %2062 = vmatpush2.msra.mxu0 0.0
    %2063 = vmatprep.subr.mxu0 0.0
    %2064 = vmatpush2.msra.mxu0 0.0
    %2065 = vmatprep.subr.mxu0 0.0
    %2066 = vmatpush2.msra.mxu0 %v2008
    %2067 = vmatprep.subr.mxu0 0.0
    %2068 = vmatpush2.msra.mxu0 %v2007
    %2069 = vmatprep.subr.mxu0 0.0
    %2070 = vmatpush2.msra.mxu0 %v2006
    %2071 = vmatprep.subr.mxu0 0.0
    %2072 = vmatpush2.msra.mxu0 %v2005
    %2073 = vmatprep.mubr.f32.mxu0 %v1916
    %2074 = vmatmul.mubr.f32.gmra.mxu0 %v1892
    %v2075 = vpop.f32.mrf.mxu0
    %v2076 = vadd.f32 0.0, %v2075
    %v2077 = vpop.f32.mrf.mxu0
    %2078 = vdwg.mxu0
    %v2079 = vmax.f32 %v1985, %v2076
    %v2080 = vld [vmem:[%s9] sm:$0xff]
    %v2081 = vld [vmem:[%s9 + $0x8] sm:$0xff]
    %v2082 = vld [vmem:[%s9 + $0x10] sm:$0xff]
    %v2083 = vld [vmem:[%s9 + $0x18] sm:$0xff]
    %v2084 = vld [vmem:[%s9 + $0x20] sm:$0xff]
    %v2085 = vld [vmem:[%s9 + $0x28] sm:$0xff]
    %v2086 = vld [vmem:[%s9 + $0x30] sm:$0xff]
    %v2087 = vld [vmem:[%s9 + $0x38] sm:$0xff]
    %v2088 = vld [vmem:[%s9 + $0x40] sm:$0xff]
    %v2089 = vld [vmem:[%s9 + $0x48] sm:$0xff]
    %s2090 = scalar_lea.vmem %s9, 80
    %v2091 = vld [vmem:[%s2090] sm:$0xff]
    %v2092 = vld [vmem:[%s2090 + $0x8] sm:$0xff]
    %v2093 = vld [vmem:[%s2090 + $0x10] sm:$0xff]
    %v2094 = vld [vmem:[%s2090 + $0x18] sm:$0xff]
    %v2095 = vld [vmem:[%s2090 + $0x20] sm:$0xff]
    %v2096 = vld [vmem:[%s2090 + $0x28] sm:$0xff]
    %v2097 = vld [vmem:[%s2090 + $0x30] sm:$0xff]
    %v2098 = vld [vmem:[%s2090 + $0x38] sm:$0xff]
    %v2099 = vld [vmem:[%s2090 + $0x40] sm:$0xff]
    %v2100 = vld [vmem:[%s2090 + $0x48] sm:$0xff]
    %v2102 = vrot.slane %v2079, 1
    %vm2103 = vcmask 654336
    %v2104 = vsel %vm2103, %v2102, 0
    %2106 = vmatprep.subr.mxu0 0.0
    %2107 = vmatpush1.msra.mxu0 0.0
    %2108 = vmatprep.subr.mxu0 0.0
    %2109 = vmatpush1.msra.mxu0 0.0
    %2110 = vmatprep.subr.mxu0 0.0
    %2111 = vmatpush1.msra.mxu0 0.0
    %2112 = vmatprep.subr.mxu0 0.0
    %2113 = vmatpush1.msra.mxu0 0.0
    %2114 = vmatprep.subr.mxu0 0.0
    %2115 = vmatpush1.msra.mxu0 0.0
    %2116 = vmatprep.subr.mxu0 0.0
    %2117 = vmatpush1.msra.mxu0 0.0
    %2118 = vmatprep.subr.mxu0 0.0
    %2119 = vmatpush1.msra.mxu0 %v2100
    %2120 = vmatprep.subr.mxu0 0.0
    %2121 = vmatpush1.msra.mxu0 %v2099
    %2122 = vmatprep.subr.mxu0 0.0
    %2123 = vmatpush1.msra.mxu0 %v2098
    %2124 = vmatprep.subr.mxu0 0.0
    %2125 = vmatpush1.msra.mxu0 %v2097
    %2126 = vmatprep.subr.mxu0 0.0
    %2127 = vmatpush1.msra.mxu0 %v2096
    %2128 = vmatprep.subr.mxu0 0.0
    %2129 = vmatpush1.msra.mxu0 %v2095
    %2130 = vmatprep.subr.mxu0 0.0
    %2131 = vmatpush1.msra.mxu0 %v2094
    %2132 = vmatprep.subr.mxu0 0.0
    %2133 = vmatpush1.msra.mxu0 %v2093
    %2134 = vmatprep.subr.mxu0 0.0
    %2135 = vmatpush1.msra.mxu0 %v2092
    %2136 = vmatprep.subr.mxu0 0.0
    %2137 = vmatpush1.msra.mxu0 %v2091
    %2138 = vmatprep.subr.mxu0 0.0
    %2139 = vmatpush2.msra.mxu0 0.0
    %2140 = vmatprep.subr.mxu0 0.0
    %2141 = vmatpush2.msra.mxu0 0.0
    %2142 = vmatprep.subr.mxu0 0.0
    %2143 = vmatpush2.msra.mxu0 0.0
    %2144 = vmatprep.subr.mxu0 0.0
    %2145 = vmatpush2.msra.mxu0 0.0
    %2146 = vmatprep.subr.mxu0 0.0
    %2147 = vmatpush2.msra.mxu0 0.0
    %2148 = vmatprep.subr.mxu0 0.0
    %2149 = vmatpush2.msra.mxu0 0.0
    %2150 = vmatprep.subr.mxu0 0.0
    %2151 = vmatpush2.msra.mxu0 0.0
    %2152 = vmatprep.subr.mxu0 0.0
    %2153 = vmatpush2.msra.mxu0 0.0
    %2154 = vmatprep.subr.mxu0 0.0
    %2155 = vmatpush2.msra.mxu0 0.0
    %2156 = vmatprep.subr.mxu0 0.0
    %2157 = vmatpush2.msra.mxu0 0.0
    %2158 = vmatprep.subr.mxu0 0.0
    %2159 = vmatpush2.msra.mxu0 0.0
    %2160 = vmatprep.subr.mxu0 0.0
    %2161 = vmatpush2.msra.mxu0 0.0
    %2162 = vmatprep.subr.mxu0 0.0
    %2163 = vmatpush2.msra.mxu0 0.0
    %2164 = vmatprep.subr.mxu0 0.0
    %2165 = vmatpush2.msra.mxu0 0.0
    %2166 = vmatprep.subr.mxu0 0.0
    %2167 = vmatpush2.msra.mxu0 0.0
    %2168 = vmatprep.subr.mxu0 0.0
    %2169 = vmatpush2.msra.mxu0 0.0
    %2170 = vmatprep.mubr.f32.mxu0 0.0
    %2171 = vmatmul.mubr.f32.gmra.mxu0 %v2104
    %v2172 = vpop.f32.mrf.mxu0
    %v2173 = vadd.f32 0.0, %v2172
    %v2174 = vpop.f32.mrf.mxu0
    %2175 = vdwg.mxu0
    %v2176 = vsel %vm2103, %v2079, 0
    %2178 = vmatprep.subr.mxu0 0.0
    %2179 = vmatpush1.msra.mxu0 0.0
    %2180 = vmatprep.subr.mxu0 0.0
    %2181 = vmatpush1.msra.mxu0 0.0
    %2182 = vmatprep.subr.mxu0 0.0
    %2183 = vmatpush1.msra.mxu0 0.0
    %2184 = vmatprep.subr.mxu0 0.0
    %2185 = vmatpush1.msra.mxu0 0.0
    %2186 = vmatprep.subr.mxu0 0.0
    %2187 = vmatpush1.msra.mxu0 0.0
    %2188 = vmatprep.subr.mxu0 0.0
    %2189 = vmatpush1.msra.mxu0 0.0
    %2190 = vmatprep.subr.mxu0 0.0
    %2191 = vmatpush1.msra.mxu0 %v2089
    %2192 = vmatprep.subr.mxu0 0.0
    %2193 = vmatpush1.msra.mxu0 %v2088
    %2194 = vmatprep.subr.mxu0 0.0
    %2195 = vmatpush1.msra.mxu0 %v2087
    %2196 = vmatprep.subr.mxu0 0.0
    %2197 = vmatpush1.msra.mxu0 %v2086
    %2198 = vmatprep.subr.mxu0 0.0
    %2199 = vmatpush1.msra.mxu0 %v2085
    %2200 = vmatprep.subr.mxu0 0.0
    %2201 = vmatpush1.msra.mxu0 %v2084
    %2202 = vmatprep.subr.mxu0 0.0
    %2203 = vmatpush1.msra.mxu0 %v2083
    %2204 = vmatprep.subr.mxu0 0.0
    %2205 = vmatpush1.msra.mxu0 %v2082
    %2206 = vmatprep.subr.mxu0 0.0
    %2207 = vmatpush1.msra.mxu0 %v2081
    %2208 = vmatprep.subr.mxu0 0.0
    %2209 = vmatpush1.msra.mxu0 %v2080
    %2210 = vmatprep.subr.mxu0 0.0
    %2211 = vmatpush2.msra.mxu0 0.0
    %2212 = vmatprep.subr.mxu0 0.0
    %2213 = vmatpush2.msra.mxu0 0.0
    %2214 = vmatprep.subr.mxu0 0.0
    %2215 = vmatpush2.msra.mxu0 0.0
    %2216 = vmatprep.subr.mxu0 0.0
    %2217 = vmatpush2.msra.mxu0 0.0
    %2218 = vmatprep.subr.mxu0 0.0
    %2219 = vmatpush2.msra.mxu0 0.0
    %2220 = vmatprep.subr.mxu0 0.0
    %2221 = vmatpush2.msra.mxu0 0.0
    %2222 = vmatprep.subr.mxu0 0.0
    %2223 = vmatpush2.msra.mxu0 0.0
    %2224 = vmatprep.subr.mxu0 0.0
    %2225 = vmatpush2.msra.mxu0 0.0
    %2226 = vmatprep.subr.mxu0 0.0
    %2227 = vmatpush2.msra.mxu0 0.0
    %2228 = vmatprep.subr.mxu0 0.0
    %2229 = vmatpush2.msra.mxu0 0.0
    %2230 = vmatprep.subr.mxu0 0.0
    %2231 = vmatpush2.msra.mxu0 0.0
    %2232 = vmatprep.subr.mxu0 0.0
    %2233 = vmatpush2.msra.mxu0 0.0
    %2234 = vmatprep.subr.mxu0 0.0
    %2235 = vmatpush2.msra.mxu0 0.0
    %2236 = vmatprep.subr.mxu0 0.0
    %2237 = vmatpush2.msra.mxu0 0.0
    %2238 = vmatprep.subr.mxu0 0.0
    %2239 = vmatpush2.msra.mxu0 0.0
    %2240 = vmatprep.subr.mxu0 0.0
    %2241 = vmatpush2.msra.mxu0 0.0
    %2242 = vmatprep.mubr.f32.mxu0 0.0
    %2243 = vmatmul.mubr.f32.gmra.mxu0 %v2176
    %v2244 = vpop.f32.mrf.mxu0
    %v2245 = vadd.f32 %v2173, %v2244
    %v2246 = vpop.f32.mrf.mxu0
    %2247 = vdwg.mxu0
    %s2248 = scalar_lea.vmem %s9, 160
    %v2249 = vld [vmem:[%s2248] sm:$0xff]
    %v2250 = vld [vmem:[%s2248 + $0x8] sm:$0xff]
    %v2251 = vld [vmem:[%s2248 + $0x10] sm:$0xff]
    %v2252 = vld [vmem:[%s2248 + $0x18] sm:$0xff]
    %v2253 = vld [vmem:[%s2248 + $0x20] sm:$0xff]
    %v2254 = vld [vmem:[%s2248 + $0x28] sm:$0xff]
    %v2255 = vld [vmem:[%s2248 + $0x30] sm:$0xff]
    %v2256 = vld [vmem:[%s2248 + $0x38] sm:$0xff]
    %v2257 = vld [vmem:[%s2248 + $0x40] sm:$0xff]
    %v2258 = vld [vmem:[%s2248 + $0x48] sm:$0xff]
    %v2259 = vrot.slane %v2079, 2
    %v2260 = vsel %vm2103, %v2259, 0
    %2262 = vmatprep.subr.mxu0 0.0
    %2263 = vmatpush1.msra.mxu0 0.0
    %2264 = vmatprep.subr.mxu0 0.0
    %2265 = vmatpush1.msra.mxu0 0.0
    %2266 = vmatprep.subr.mxu0 0.0
    %2267 = vmatpush1.msra.mxu0 0.0
    %2268 = vmatprep.subr.mxu0 0.0
    %2269 = vmatpush1.msra.mxu0 0.0
    %2270 = vmatprep.subr.mxu0 0.0
    %2271 = vmatpush1.msra.mxu0 0.0
    %2272 = vmatprep.subr.mxu0 0.0
    %2273 = vmatpush1.msra.mxu0 0.0
    %2274 = vmatprep.subr.mxu0 0.0
    %2275 = vmatpush1.msra.mxu0 %v2258
    %2276 = vmatprep.subr.mxu0 0.0
    %2277 = vmatpush1.msra.mxu0 %v2257
    %2278 = vmatprep.subr.mxu0 0.0
    %2279 = vmatpush1.msra.mxu0 %v2256
    %2280 = vmatprep.subr.mxu0 0.0
    %2281 = vmatpush1.msra.mxu0 %v2255
    %2282 = vmatprep.subr.mxu0 0.0
    %2283 = vmatpush1.msra.mxu0 %v2254
    %2284 = vmatprep.subr.mxu0 0.0
    %2285 = vmatpush1.msra.mxu0 %v2253
    %2286 = vmatprep.subr.mxu0 0.0
    %2287 = vmatpush1.msra.mxu0 %v2252
    %2288 = vmatprep.subr.mxu0 0.0
    %2289 = vmatpush1.msra.mxu0 %v2251
    %2290 = vmatprep.subr.mxu0 0.0
    %2291 = vmatpush1.msra.mxu0 %v2250
    %2292 = vmatprep.subr.mxu0 0.0
    %2293 = vmatpush1.msra.mxu0 %v2249
    %2294 = vmatprep.subr.mxu0 0.0
    %2295 = vmatpush2.msra.mxu0 0.0
    %2296 = vmatprep.subr.mxu0 0.0
    %2297 = vmatpush2.msra.mxu0 0.0
    %2298 = vmatprep.subr.mxu0 0.0
    %2299 = vmatpush2.msra.mxu0 0.0
    %2300 = vmatprep.subr.mxu0 0.0
    %2301 = vmatpush2.msra.mxu0 0.0
    %2302 = vmatprep.subr.mxu0 0.0
    %2303 = vmatpush2.msra.mxu0 0.0
    %2304 = vmatprep.subr.mxu0 0.0
    %2305 = vmatpush2.msra.mxu0 0.0
    %2306 = vmatprep.subr.mxu0 0.0
    %2307 = vmatpush2.msra.mxu0 0.0
    %2308 = vmatprep.subr.mxu0 0.0
    %2309 = vmatpush2.msra.mxu0 0.0
    %2310 = vmatprep.subr.mxu0 0.0
    %2311 = vmatpush2.msra.mxu0 0.0
    %2312 = vmatprep.subr.mxu0 0.0
    %2313 = vmatpush2.msra.mxu0 0.0
    %2314 = vmatprep.subr.mxu0 0.0
    %2315 = vmatpush2.msra.mxu0 0.0
    %2316 = vmatprep.subr.mxu0 0.0
    %2317 = vmatpush2.msra.mxu0 0.0
    %2318 = vmatprep.subr.mxu0 0.0
    %2319 = vmatpush2.msra.mxu0 0.0
    %2320 = vmatprep.subr.mxu0 0.0
    %2321 = vmatpush2.msra.mxu0 0.0
    %2322 = vmatprep.subr.mxu0 0.0
    %2323 = vmatpush2.msra.mxu0 0.0
    %2324 = vmatprep.subr.mxu0 0.0
    %2325 = vmatpush2.msra.mxu0 0.0
    %2326 = vmatprep.mubr.f32.mxu0 0.0
    %2327 = vmatmul.mubr.f32.gmra.mxu0 %v2260
    %v2328 = vpop.f32.mrf.mxu0
    %v2329 = vadd.f32 0.0, %v2328
    %v2330 = vpop.f32.mrf.mxu0
    %2331 = vdwg.mxu0
    %v2332 = vadd.f32 %v2245, %v2329
    %s2333 = scalar_lea.vmem %s9, 240
    %v2334 = vld [vmem:[%s2333] sm:$0xff]
    %v2335 = vld [vmem:[%s2333 + $0x8] sm:$0xff]
    %v2336 = vld [vmem:[%s2333 + $0x10] sm:$0xff]
    %v2337 = vld [vmem:[%s2333 + $0x18] sm:$0xff]
    %v2338 = vld [vmem:[%s2333 + $0x20] sm:$0xff]
    %v2339 = vld [vmem:[%s2333 + $0x28] sm:$0xff]
    %v2340 = vld [vmem:[%s2333 + $0x30] sm:$0xff]
    %v2341 = vld [vmem:[%s2333 + $0x38] sm:$0xff]
    %v2342 = vld [vmem:[%s2333 + $0x40] sm:$0xff]
    %v2343 = vld [vmem:[%s2333 + $0x48] sm:$0xff]
    %v2344 = vrot.slane %v2079, 3
    %v2345 = vsel %vm2103, %v2344, 0
    %2347 = vmatprep.subr.mxu0 0.0
    %2348 = vmatpush1.msra.mxu0 0.0
    %2349 = vmatprep.subr.mxu0 0.0
    %2350 = vmatpush1.msra.mxu0 0.0
    %2351 = vmatprep.subr.mxu0 0.0
    %2352 = vmatpush1.msra.mxu0 0.0
    %2353 = vmatprep.subr.mxu0 0.0
    %2354 = vmatpush1.msra.mxu0 0.0
    %2355 = vmatprep.subr.mxu0 0.0
    %2356 = vmatpush1.msra.mxu0 0.0
    %2357 = vmatprep.subr.mxu0 0.0
    %2358 = vmatpush1.msra.mxu0 0.0
    %2359 = vmatprep.subr.mxu0 0.0
    %2360 = vmatpush1.msra.mxu0 %v2343
    %2361 = vmatprep.subr.mxu0 0.0
    %2362 = vmatpush1.msra.mxu0 %v2342
    %2363 = vmatprep.subr.mxu0 0.0
    %2364 = vmatpush1.msra.mxu0 %v2341
    %2365 = vmatprep.subr.mxu0 0.0
    %2366 = vmatpush1.msra.mxu0 %v2340
    %2367 = vmatprep.subr.mxu0 0.0
    %2368 = vmatpush1.msra.mxu0 %v2339
    %2369 = vmatprep.subr.mxu0 0.0
    %2370 = vmatpush1.msra.mxu0 %v2338
    %2371 = vmatprep.subr.mxu0 0.0
    %2372 = vmatpush1.msra.mxu0 %v2337
    %2373 = vmatprep.subr.mxu0 0.0
    %2374 = vmatpush1.msra.mxu0 %v2336
    %2375 = vmatprep.subr.mxu0 0.0
    %2376 = vmatpush1.msra.mxu0 %v2335
    %2377 = vmatprep.subr.mxu0 0.0
    %2378 = vmatpush1.msra.mxu0 %v2334
    %2379 = vmatprep.subr.mxu0 0.0
    %2380 = vmatpush2.msra.mxu0 0.0
    %2381 = vmatprep.subr.mxu0 0.0
    %2382 = vmatpush2.msra.mxu0 0.0
    %2383 = vmatprep.subr.mxu0 0.0
    %2384 = vmatpush2.msra.mxu0 0.0
    %2385 = vmatprep.subr.mxu0 0.0
    %2386 = vmatpush2.msra.mxu0 0.0
    %2387 = vmatprep.subr.mxu0 0.0
    %2388 = vmatpush2.msra.mxu0 0.0
    %2389 = vmatprep.subr.mxu0 0.0
    %2390 = vmatpush2.msra.mxu0 0.0
    %2391 = vmatprep.subr.mxu0 0.0
    %2392 = vmatpush2.msra.mxu0 0.0
    %2393 = vmatprep.subr.mxu0 0.0
    %2394 = vmatpush2.msra.mxu0 0.0
    %2395 = vmatprep.subr.mxu0 0.0
    %2396 = vmatpush2.msra.mxu0 0.0
    %2397 = vmatprep.subr.mxu0 0.0
    %2398 = vmatpush2.msra.mxu0 0.0
    %2399 = vmatprep.subr.mxu0 0.0
    %2400 = vmatpush2.msra.mxu0 0.0
    %2401 = vmatprep.subr.mxu0 0.0
    %2402 = vmatpush2.msra.mxu0 0.0
    %2403 = vmatprep.subr.mxu0 0.0
    %2404 = vmatpush2.msra.mxu0 0.0
    %2405 = vmatprep.subr.mxu0 0.0
    %2406 = vmatpush2.msra.mxu0 0.0
    %2407 = vmatprep.subr.mxu0 0.0
    %2408 = vmatpush2.msra.mxu0 0.0
    %2409 = vmatprep.subr.mxu0 0.0
    %2410 = vmatpush2.msra.mxu0 0.0
    %2411 = vmatprep.mubr.f32.mxu0 0.0
    %2412 = vmatmul.mubr.f32.gmra.mxu0 %v2345
    %v2413 = vpop.f32.mrf.mxu0
    %v2414 = vadd.f32 0.0, %v2413
    %v2415 = vpop.f32.mrf.mxu0
    %2416 = vdwg.mxu0
    %v2417 = vadd.f32 %v2332, %v2414
    %s2418 = scalar_lea.vmem %s9, 320
    %v2419 = vld [vmem:[%s2418] sm:$0xff]
    %v2420 = vld [vmem:[%s2418 + $0x8] sm:$0xff]
    %v2421 = vld [vmem:[%s2418 + $0x10] sm:$0xff]
    %v2422 = vld [vmem:[%s2418 + $0x18] sm:$0xff]
    %v2423 = vld [vmem:[%s2418 + $0x20] sm:$0xff]
    %v2424 = vld [vmem:[%s2418 + $0x28] sm:$0xff]
    %v2425 = vld [vmem:[%s2418 + $0x30] sm:$0xff]
    %v2426 = vld [vmem:[%s2418 + $0x38] sm:$0xff]
    %v2427 = vld [vmem:[%s2418 + $0x40] sm:$0xff]
    %v2428 = vld [vmem:[%s2418 + $0x48] sm:$0xff]
    %v2429 = vrot.slane %v2079, 4
    %v2430 = vsel %vm2103, %v2429, 0
    %2432 = vmatprep.subr.mxu0 0.0
    %2433 = vmatpush1.msra.mxu0 0.0
    %2434 = vmatprep.subr.mxu0 0.0
    %2435 = vmatpush1.msra.mxu0 0.0
    %2436 = vmatprep.subr.mxu0 0.0
    %2437 = vmatpush1.msra.mxu0 0.0
    %2438 = vmatprep.subr.mxu0 0.0
    %2439 = vmatpush1.msra.mxu0 0.0
    %2440 = vmatprep.subr.mxu0 0.0
    %2441 = vmatpush1.msra.mxu0 0.0
    %2442 = vmatprep.subr.mxu0 0.0
    %2443 = vmatpush1.msra.mxu0 0.0
    %2444 = vmatprep.subr.mxu0 0.0
    %2445 = vmatpush1.msra.mxu0 %v2428
    %2446 = vmatprep.subr.mxu0 0.0
    %2447 = vmatpush1.msra.mxu0 %v2427
    %2448 = vmatprep.subr.mxu0 0.0
    %2449 = vmatpush1.msra.mxu0 %v2426
    %2450 = vmatprep.subr.mxu0 0.0
    %2451 = vmatpush1.msra.mxu0 %v2425
    %2452 = vmatprep.subr.mxu0 0.0
    %2453 = vmatpush1.msra.mxu0 %v2424
    %2454 = vmatprep.subr.mxu0 0.0
    %2455 = vmatpush1.msra.mxu0 %v2423
    %2456 = vmatprep.subr.mxu0 0.0
    %2457 = vmatpush1.msra.mxu0 %v2422
    %2458 = vmatprep.subr.mxu0 0.0
    %2459 = vmatpush1.msra.mxu0 %v2421
    %2460 = vmatprep.subr.mxu0 0.0
    %2461 = vmatpush1.msra.mxu0 %v2420
    %2462 = vmatprep.subr.mxu0 0.0
    %2463 = vmatpush1.msra.mxu0 %v2419
    %2464 = vmatprep.subr.mxu0 0.0
    %2465 = vmatpush2.msra.mxu0 0.0
    %2466 = vmatprep.subr.mxu0 0.0
    %2467 = vmatpush2.msra.mxu0 0.0
    %2468 = vmatprep.subr.mxu0 0.0
    %2469 = vmatpush2.msra.mxu0 0.0
    %2470 = vmatprep.subr.mxu0 0.0
    %2471 = vmatpush2.msra.mxu0 0.0
    %2472 = vmatprep.subr.mxu0 0.0
    %2473 = vmatpush2.msra.mxu0 0.0
    %2474 = vmatprep.subr.mxu0 0.0
    %2475 = vmatpush2.msra.mxu0 0.0
    %2476 = vmatprep.subr.mxu0 0.0
    %2477 = vmatpush2.msra.mxu0 0.0
    %2478 = vmatprep.subr.mxu0 0.0
    %2479 = vmatpush2.msra.mxu0 0.0
    %2480 = vmatprep.subr.mxu0 0.0
    %2481 = vmatpush2.msra.mxu0 0.0
    %2482 = vmatprep.subr.mxu0 0.0
    %2483 = vmatpush2.msra.mxu0 0.0
    %2484 = vmatprep.subr.mxu0 0.0
    %2485 = vmatpush2.msra.mxu0 0.0
    %2486 = vmatprep.subr.mxu0 0.0
    %2487 = vmatpush2.msra.mxu0 0.0
    %2488 = vmatprep.subr.mxu0 0.0
    %2489 = vmatpush2.msra.mxu0 0.0
    %2490 = vmatprep.subr.mxu0 0.0
    %2491 = vmatpush2.msra.mxu0 0.0
    %2492 = vmatprep.subr.mxu0 0.0
    %2493 = vmatpush2.msra.mxu0 0.0
    %2494 = vmatprep.subr.mxu0 0.0
    %2495 = vmatpush2.msra.mxu0 0.0
    %2496 = vmatprep.mubr.f32.mxu0 0.0
    %2497 = vmatmul.mubr.f32.gmra.mxu0 %v2430
    %v2498 = vpop.f32.mrf.mxu0
    %v2499 = vadd.f32 0.0, %v2498
    %v2500 = vpop.f32.mrf.mxu0
    %2501 = vdwg.mxu0
    %v2502 = vadd.f32 %v2417, %v2499
    %v2503 = vld [vmem:[%s10] sm:$0x1]
    %v2504 = vadd.f32 %v2502, %v2503
    %v2505 = vmax.f32 %v2504, 0.0
    %s2506 = scalar_lea.vmem %s0, 32
    %v2507 = vld [vmem:[%s2506] sm:$0xff]
    %v2508 = vld [vmem:[%s2506 + $0x8] sm:$0xff]
    %v2509 = vld [vmem:[%s2506 + $0x10] sm:$0xff]
    %v2510 = vld [vmem:[%s2506 + $0x18] sm:$0xff]
    %v2515 = vrot.slane %v2507, 1
    %v2516 = vrot.slane %v2508, 1
    %v2517 = vsel %vm108, %v2515, %v2516
    %v2518 = vrot.slane %v2509, 1
    %v2519 = vsel %vm108, %v2516, %v2518
    %v2520 = vrot.slane %v2510, 1
    %v2521 = vsel %vm108, %v2518, %v2520
    %v2522 = vsel %vm116, %v2517, 0
    %v2524 = vsel %vm116, %v2519, 0
    %v2526 = vsel %vm116, %v2521, 0
    %v2528 = vsel %vm116, %v2520, 0
    %2530 = vmatprep.subr.mxu0 0.0
    %2531 = vmatpush1.msra.mxu0 0.0
    %2532 = vmatprep.subr.mxu0 0.0
    %2533 = vmatpush1.msra.mxu0 0.0
    %2534 = vmatprep.subr.mxu0 0.0
    %2535 = vmatpush1.msra.mxu0 0.0
    %2536 = vmatprep.subr.mxu0 0.0
    %2537 = vmatpush1.msra.mxu0 0.0
    %2538 = vmatprep.subr.mxu0 %v103
    %2539 = vmatpush1.msra.mxu0 %v102
    %2540 = vmatprep.subr.mxu0 %v101
    %2541 = vmatpush1.msra.mxu0 %v100
    %2542 = vmatprep.subr.mxu0 %v99
    %2543 = vmatpush1.msra.mxu0 %v98
    %2544 = vmatprep.subr.mxu0 %v97
    %2545 = vmatpush1.msra.mxu0 %v96
    %2546 = vmatprep.subr.mxu0 %v95
    %2547 = vmatpush1.msra.mxu0 %v94
    %2548 = vmatprep.subr.mxu0 %v93
    %2549 = vmatpush1.msra.mxu0 %v92
    %2550 = vmatprep.subr.mxu0 %v91
    %2551 = vmatpush1.msra.mxu0 %v90
    %2552 = vmatprep.subr.mxu0 %v89
    %2553 = vmatpush1.msra.mxu0 %v88
    %2554 = vmatprep.subr.mxu0 %v87
    %2555 = vmatpush1.msra.mxu0 %v86
    %2556 = vmatprep.subr.mxu0 %v85
    %2557 = vmatpush1.msra.mxu0 %v84
    %2558 = vmatprep.subr.mxu0 %v83
    %2559 = vmatpush1.msra.mxu0 %v82
    %2560 = vmatprep.subr.mxu0 %v81
    %2561 = vmatpush1.msra.mxu0 %v80
    %2562 = vmatprep.subr.mxu0 0.0
    %2563 = vmatpush2.msra.mxu0 0.0
    %2564 = vmatprep.subr.mxu0 0.0
    %2565 = vmatpush2.msra.mxu0 0.0
    %2566 = vmatprep.subr.mxu0 0.0
    %2567 = vmatpush2.msra.mxu0 0.0
    %2568 = vmatprep.subr.mxu0 0.0
    %2569 = vmatpush2.msra.mxu0 0.0
    %2570 = vmatprep.subr.mxu0 0.0
    %2571 = vmatpush2.msra.mxu0 0.0
    %2572 = vmatprep.subr.mxu0 0.0
    %2573 = vmatpush2.msra.mxu0 0.0
    %2574 = vmatprep.subr.mxu0 0.0
    %2575 = vmatpush2.msra.mxu0 0.0
    %2576 = vmatprep.subr.mxu0 0.0
    %2577 = vmatpush2.msra.mxu0 0.0
    %2578 = vmatprep.subr.mxu0 0.0
    %2579 = vmatpush2.msra.mxu0 0.0
    %2580 = vmatprep.subr.mxu0 0.0
    %2581 = vmatpush2.msra.mxu0 0.0
    %2582 = vmatprep.subr.mxu0 0.0
    %2583 = vmatpush2.msra.mxu0 0.0
    %2584 = vmatprep.subr.mxu0 0.0
    %2585 = vmatpush2.msra.mxu0 0.0
    %2586 = vmatprep.subr.mxu0 0.0
    %2587 = vmatpush2.msra.mxu0 0.0
    %2588 = vmatprep.subr.mxu0 0.0
    %2589 = vmatpush2.msra.mxu0 0.0
    %2590 = vmatprep.subr.mxu0 0.0
    %2591 = vmatpush2.msra.mxu0 0.0
    %2592 = vmatprep.subr.mxu0 0.0
    %2593 = vmatpush2.msra.mxu0 0.0
    %2594 = vmatprep.mubr.f32.mxu0 0.0
    %2595 = vmatmul.mubr.f32.gmra.mxu0 %v2522
    %v2596 = vpop.f32.mrf.mxu0
    %v2597 = vadd.f32 0.0, %v2596
    %v2598 = vpop.f32.mrf.mxu0
    %v2599 = vadd.f32 0.0, %v2598
    %2600 = vmatprep.mubr.f32.mxu0 0.0
    %2601 = vmatmul.mubr.f32.gmra.mxu0 %v2524
    %v2602 = vpop.f32.mrf.mxu0
    %v2603 = vadd.f32 0.0, %v2602
    %v2604 = vpop.f32.mrf.mxu0
    %v2605 = vadd.f32 0.0, %v2604
    %2606 = vmatprep.mubr.f32.mxu0 0.0
    %2607 = vmatmul.mubr.f32.gmra.mxu0 %v2526
    %v2608 = vpop.f32.mrf.mxu0
    %v2609 = vadd.f32 0.0, %v2608
    %v2610 = vpop.f32.mrf.mxu0
    %v2611 = vadd.f32 0.0, %v2610
    %2612 = vmatprep.mubr.f32.mxu0 0.0
    %2613 = vmatmul.mubr.f32.gmra.mxu0 %v2528
    %v2614 = vpop.f32.mrf.mxu0
    %v2615 = vadd.f32 0.0, %v2614
    %v2616 = vpop.f32.mrf.mxu0
    %v2617 = vadd.f32 0.0, %v2616
    %2618 = vdwg.mxu0
    %v2619 = vsel %vm116, %v2507, 0
    %v2621 = vsel %vm116, %v2508, 0
    %v2623 = vsel %vm116, %v2509, 0
    %v2625 = vsel %vm116, %v2510, 0
    %2627 = vmatprep.subr.mxu0 0.0
    %2628 = vmatpush1.msra.mxu0 0.0
    %2629 = vmatprep.subr.mxu0 0.0
    %2630 = vmatpush1.msra.mxu0 0.0
    %2631 = vmatprep.subr.mxu0 0.0
    %2632 = vmatpush1.msra.mxu0 0.0
    %2633 = vmatprep.subr.mxu0 0.0
    %2634 = vmatpush1.msra.mxu0 0.0
    %2635 = vmatprep.subr.mxu0 %v78
    %2636 = vmatpush1.msra.mxu0 %v77
    %2637 = vmatprep.subr.mxu0 %v76
    %2638 = vmatpush1.msra.mxu0 %v75
    %2639 = vmatprep.subr.mxu0 %v74
    %2640 = vmatpush1.msra.mxu0 %v73
    %2641 = vmatprep.subr.mxu0 %v72
    %2642 = vmatpush1.msra.mxu0 %v71
    %2643 = vmatprep.subr.mxu0 %v70
    %2644 = vmatpush1.msra.mxu0 %v69
    %2645 = vmatprep.subr.mxu0 %v68
    %2646 = vmatpush1.msra.mxu0 %v67
    %2647 = vmatprep.subr.mxu0 %v66
    %2648 = vmatpush1.msra.mxu0 %v65
    %2649 = vmatprep.subr.mxu0 %v64
    %2650 = vmatpush1.msra.mxu0 %v63
    %2651 = vmatprep.subr.mxu0 %v62
    %2652 = vmatpush1.msra.mxu0 %v61
    %2653 = vmatprep.subr.mxu0 %v60
    %2654 = vmatpush1.msra.mxu0 %v59
    %2655 = vmatprep.subr.mxu0 %v58
    %2656 = vmatpush1.msra.mxu0 %v57
    %2657 = vmatprep.subr.mxu0 %v56
    %2658 = vmatpush1.msra.mxu0 %v55
    %2659 = vmatprep.subr.mxu0 0.0
    %2660 = vmatpush2.msra.mxu0 0.0
    %2661 = vmatprep.subr.mxu0 0.0
    %2662 = vmatpush2.msra.mxu0 0.0
    %2663 = vmatprep.subr.mxu0 0.0
    %2664 = vmatpush2.msra.mxu0 0.0
    %2665 = vmatprep.subr.mxu0 0.0
    %2666 = vmatpush2.msra.mxu0 0.0
    %2667 = vmatprep.subr.mxu0 0.0
    %2668 = vmatpush2.msra.mxu0 0.0
    %2669 = vmatprep.subr.mxu0 0.0
    %2670 = vmatpush2.msra.mxu0 0.0
    %2671 = vmatprep.subr.mxu0 0.0
    %2672 = vmatpush2.msra.mxu0 0.0
    %2673 = vmatprep.subr.mxu0 0.0
    %2674 = vmatpush2.msra.mxu0 0.0
    %2675 = vmatprep.subr.mxu0 0.0
    %2676 = vmatpush2.msra.mxu0 0.0
    %2677 = vmatprep.subr.mxu0 0.0
    %2678 = vmatpush2.msra.mxu0 0.0
    %2679 = vmatprep.subr.mxu0 0.0
    %2680 = vmatpush2.msra.mxu0 0.0
    %2681 = vmatprep.subr.mxu0 0.0
    %2682 = vmatpush2.msra.mxu0 0.0
    %2683 = vmatprep.subr.mxu0 0.0
    %2684 = vmatpush2.msra.mxu0 0.0
    %2685 = vmatprep.subr.mxu0 0.0
    %2686 = vmatpush2.msra.mxu0 0.0
    %2687 = vmatprep.subr.mxu0 0.0
    %2688 = vmatpush2.msra.mxu0 0.0
    %2689 = vmatprep.subr.mxu0 0.0
    %2690 = vmatpush2.msra.mxu0 0.0
    %2691 = vmatprep.mubr.f32.mxu0 0.0
    %2692 = vmatmul.mubr.f32.gmra.mxu0 %v2619
    %v2693 = vpop.f32.mrf.mxu0
    %v2694 = vadd.f32 %v2597, %v2693
    %v2695 = vpop.f32.mrf.mxu0
    %v2696 = vadd.f32 %v2599, %v2695
    %2697 = vmatprep.mubr.f32.mxu0 0.0
    %2698 = vmatmul.mubr.f32.gmra.mxu0 %v2621
    %v2699 = vpop.f32.mrf.mxu0
    %v2700 = vadd.f32 %v2603, %v2699
    %v2701 = vpop.f32.mrf.mxu0
    %v2702 = vadd.f32 %v2605, %v2701
    %2703 = vmatprep.mubr.f32.mxu0 0.0
    %2704 = vmatmul.mubr.f32.gmra.mxu0 %v2623
    %v2705 = vpop.f32.mrf.mxu0
    %v2706 = vadd.f32 %v2609, %v2705
    %v2707 = vpop.f32.mrf.mxu0
    %v2708 = vadd.f32 %v2611, %v2707
    %2709 = vmatprep.mubr.f32.mxu0 0.0
    %2710 = vmatmul.mubr.f32.gmra.mxu0 %v2625
    %v2711 = vpop.f32.mrf.mxu0
    %v2712 = vadd.f32 %v2615, %v2711
    %v2713 = vpop.f32.mrf.mxu0
    %v2714 = vadd.f32 %v2617, %v2713
    %2715 = vdwg.mxu0
    %v2716 = vrot.slane %v2507, 2
    %v2717 = vrot.slane %v2508, 2
    %v2718 = vsel %vm336, %v2716, %v2717
    %v2719 = vrot.slane %v2509, 2
    %v2720 = vsel %vm336, %v2717, %v2719
    %v2721 = vrot.slane %v2510, 2
    %v2722 = vsel %vm336, %v2719, %v2721
    %v2723 = vsel %vm116, %v2718, 0
    %v2725 = vsel %vm116, %v2720, 0
    %v2727 = vsel %vm116, %v2722, 0
    %v2729 = vsel %vm116, %v2721, 0
    %2731 = vmatprep.subr.mxu0 0.0
    %2732 = vmatpush1.msra.mxu0 0.0
    %2733 = vmatprep.subr.mxu0 0.0
    %2734 = vmatpush1.msra.mxu0 0.0
    %2735 = vmatprep.subr.mxu0 0.0
    %2736 = vmatpush1.msra.mxu0 0.0
    %2737 = vmatprep.subr.mxu0 0.0
    %2738 = vmatpush1.msra.mxu0 0.0
    %2739 = vmatprep.subr.mxu0 %v335
    %2740 = vmatpush1.msra.mxu0 %v334
    %2741 = vmatprep.subr.mxu0 %v333
    %2742 = vmatpush1.msra.mxu0 %v332
    %2743 = vmatprep.subr.mxu0 %v331
    %2744 = vmatpush1.msra.mxu0 %v330
    %2745 = vmatprep.subr.mxu0 %v329
    %2746 = vmatpush1.msra.mxu0 %v328
    %2747 = vmatprep.subr.mxu0 %v327
    %2748 = vmatpush1.msra.mxu0 %v326
    %2749 = vmatprep.subr.mxu0 %v325
    %2750 = vmatpush1.msra.mxu0 %v324
    %2751 = vmatprep.subr.mxu0 %v323
    %2752 = vmatpush1.msra.mxu0 %v322
    %2753 = vmatprep.subr.mxu0 %v321
    %2754 = vmatpush1.msra.mxu0 %v320
    %2755 = vmatprep.subr.mxu0 %v319
    %2756 = vmatpush1.msra.mxu0 %v318
    %2757 = vmatprep.subr.mxu0 %v317
    %2758 = vmatpush1.msra.mxu0 %v316
    %2759 = vmatprep.subr.mxu0 %v315
    %2760 = vmatpush1.msra.mxu0 %v314
    %2761 = vmatprep.subr.mxu0 %v313
    %2762 = vmatpush1.msra.mxu0 %v312
    %2763 = vmatprep.subr.mxu0 0.0
    %2764 = vmatpush2.msra.mxu0 0.0
    %2765 = vmatprep.subr.mxu0 0.0
    %2766 = vmatpush2.msra.mxu0 0.0
    %2767 = vmatprep.subr.mxu0 0.0
    %2768 = vmatpush2.msra.mxu0 0.0
    %2769 = vmatprep.subr.mxu0 0.0
    %2770 = vmatpush2.msra.mxu0 0.0
    %2771 = vmatprep.subr.mxu0 0.0
    %2772 = vmatpush2.msra.mxu0 0.0
    %2773 = vmatprep.subr.mxu0 0.0
    %2774 = vmatpush2.msra.mxu0 0.0
    %2775 = vmatprep.subr.mxu0 0.0
    %2776 = vmatpush2.msra.mxu0 0.0
    %2777 = vmatprep.subr.mxu0 0.0
    %2778 = vmatpush2.msra.mxu0 0.0
    %2779 = vmatprep.subr.mxu0 0.0
    %2780 = vmatpush2.msra.mxu0 0.0
    %2781 = vmatprep.subr.mxu0 0.0
    %2782 = vmatpush2.msra.mxu0 0.0
    %2783 = vmatprep.subr.mxu0 0.0
    %2784 = vmatpush2.msra.mxu0 0.0
    %2785 = vmatprep.subr.mxu0 0.0
    %2786 = vmatpush2.msra.mxu0 0.0
    %2787 = vmatprep.subr.mxu0 0.0
    %2788 = vmatpush2.msra.mxu0 0.0
    %2789 = vmatprep.subr.mxu0 0.0
    %2790 = vmatpush2.msra.mxu0 0.0
    %2791 = vmatprep.subr.mxu0 0.0
    %2792 = vmatpush2.msra.mxu0 0.0
    %2793 = vmatprep.subr.mxu0 0.0
    %2794 = vmatpush2.msra.mxu0 0.0
    %2795 = vmatprep.mubr.f32.mxu0 0.0
    %2796 = vmatmul.mubr.f32.gmra.mxu0 %v2723
    %v2797 = vpop.f32.mrf.mxu0
    %v2798 = vadd.f32 0.0, %v2797
    %v2799 = vpop.f32.mrf.mxu0
    %v2800 = vadd.f32 0.0, %v2799
    %2801 = vmatprep.mubr.f32.mxu0 0.0
    %2802 = vmatmul.mubr.f32.gmra.mxu0 %v2725
    %v2803 = vpop.f32.mrf.mxu0
    %v2804 = vadd.f32 0.0, %v2803
    %v2805 = vpop.f32.mrf.mxu0
    %v2806 = vadd.f32 0.0, %v2805
    %2807 = vmatprep.mubr.f32.mxu0 0.0
    %2808 = vmatmul.mubr.f32.gmra.mxu0 %v2727
    %v2809 = vpop.f32.mrf.mxu0
    %v2810 = vadd.f32 0.0, %v2809
    %v2811 = vpop.f32.mrf.mxu0
    %v2812 = vadd.f32 0.0, %v2811
    %2813 = vmatprep.mubr.f32.mxu0 0.0
    %2814 = vmatmul.mubr.f32.gmra.mxu0 %v2729
    %v2815 = vpop.f32.mrf.mxu0
    %v2816 = vadd.f32 0.0, %v2815
    %v2817 = vpop.f32.mrf.mxu0
    %v2818 = vadd.f32 0.0, %v2817
    %2819 = vdwg.mxu0
    %v2820 = vadd.f32 %v2694, %v2798
    %v2821 = vadd.f32 %v2696, %v2800
    %v2822 = vadd.f32 %v2700, %v2804
    %v2823 = vadd.f32 %v2702, %v2806
    %v2824 = vadd.f32 %v2706, %v2810
    %v2825 = vadd.f32 %v2708, %v2812
    %v2826 = vadd.f32 %v2712, %v2816
    %v2827 = vadd.f32 %v2714, %v2818
    %v2828 = vrot.slane %v2507, 3
    %v2829 = vrot.slane %v2508, 3
    %v2830 = vsel %vm474, %v2828, %v2829
    %v2831 = vrot.slane %v2509, 3
    %v2832 = vsel %vm474, %v2829, %v2831
    %v2833 = vrot.slane %v2510, 3
    %v2834 = vsel %vm474, %v2831, %v2833
    %v2835 = vsel %vm116, %v2830, 0
    %v2837 = vsel %vm116, %v2832, 0
    %v2839 = vsel %vm116, %v2834, 0
    %v2841 = vsel %vm116, %v2833, 0
    %2843 = vmatprep.subr.mxu0 0.0
    %2844 = vmatpush1.msra.mxu0 0.0
    %2845 = vmatprep.subr.mxu0 0.0
    %2846 = vmatpush1.msra.mxu0 0.0
    %2847 = vmatprep.subr.mxu0 0.0
    %2848 = vmatpush1.msra.mxu0 0.0
    %2849 = vmatprep.subr.mxu0 0.0
    %2850 = vmatpush1.msra.mxu0 0.0
    %2851 = vmatprep.subr.mxu0 %v473
    %2852 = vmatpush1.msra.mxu0 %v472
    %2853 = vmatprep.subr.mxu0 %v471
    %2854 = vmatpush1.msra.mxu0 %v470
    %2855 = vmatprep.subr.mxu0 %v469
    %2856 = vmatpush1.msra.mxu0 %v468
    %2857 = vmatprep.subr.mxu0 %v467
    %2858 = vmatpush1.msra.mxu0 %v466
    %2859 = vmatprep.subr.mxu0 %v465
    %2860 = vmatpush1.msra.mxu0 %v464
    %2861 = vmatprep.subr.mxu0 %v463
    %2862 = vmatpush1.msra.mxu0 %v462
    %2863 = vmatprep.subr.mxu0 %v461
    %2864 = vmatpush1.msra.mxu0 %v460
    %2865 = vmatprep.subr.mxu0 %v459
    %2866 = vmatpush1.msra.mxu0 %v458
    %2867 = vmatprep.subr.mxu0 %v457
    %2868 = vmatpush1.msra.mxu0 %v456
    %2869 = vmatprep.subr.mxu0 %v455
    %2870 = vmatpush1.msra.mxu0 %v454
    %2871 = vmatprep.subr.mxu0 %v453
    %2872 = vmatpush1.msra.mxu0 %v452
    %2873 = vmatprep.subr.mxu0 %v451
    %2874 = vmatpush1.msra.mxu0 %v450
    %2875 = vmatprep.subr.mxu0 0.0
    %2876 = vmatpush2.msra.mxu0 0.0
    %2877 = vmatprep.subr.mxu0 0.0
    %2878 = vmatpush2.msra.mxu0 0.0
    %2879 = vmatprep.subr.mxu0 0.0
    %2880 = vmatpush2.msra.mxu0 0.0
    %2881 = vmatprep.subr.mxu0 0.0
    %2882 = vmatpush2.msra.mxu0 0.0
    %2883 = vmatprep.subr.mxu0 0.0
    %2884 = vmatpush2.msra.mxu0 0.0
    %2885 = vmatprep.subr.mxu0 0.0
    %2886 = vmatpush2.msra.mxu0 0.0
    %2887 = vmatprep.subr.mxu0 0.0
    %2888 = vmatpush2.msra.mxu0 0.0
    %2889 = vmatprep.subr.mxu0 0.0
    %2890 = vmatpush2.msra.mxu0 0.0
    %2891 = vmatprep.subr.mxu0 0.0
    %2892 = vmatpush2.msra.mxu0 0.0
    %2893 = vmatprep.subr.mxu0 0.0
    %2894 = vmatpush2.msra.mxu0 0.0
    %2895 = vmatprep.subr.mxu0 0.0
    %2896 = vmatpush2.msra.mxu0 0.0
    %2897 = vmatprep.subr.mxu0 0.0
    %2898 = vmatpush2.msra.mxu0 0.0
    %2899 = vmatprep.subr.mxu0 0.0
    %2900 = vmatpush2.msra.mxu0 0.0
    %2901 = vmatprep.subr.mxu0 0.0
    %2902 = vmatpush2.msra.mxu0 0.0
    %2903 = vmatprep.subr.mxu0 0.0
    %2904 = vmatpush2.msra.mxu0 0.0
    %2905 = vmatprep.subr.mxu0 0.0
    %2906 = vmatpush2.msra.mxu0 0.0
    %2907 = vmatprep.mubr.f32.mxu0 0.0
    %2908 = vmatmul.mubr.f32.gmra.mxu0 %v2835
    %v2909 = vpop.f32.mrf.mxu0
    %v2910 = vadd.f32 0.0, %v2909
    %v2911 = vpop.f32.mrf.mxu0
    %v2912 = vadd.f32 0.0, %v2911
    %2913 = vmatprep.mubr.f32.mxu0 0.0
    %2914 = vmatmul.mubr.f32.gmra.mxu0 %v2837
    %v2915 = vpop.f32.mrf.mxu0
    %v2916 = vadd.f32 0.0, %v2915
    %v2917 = vpop.f32.mrf.mxu0
    %v2918 = vadd.f32 0.0, %v2917
    %2919 = vmatprep.mubr.f32.mxu0 0.0
    %2920 = vmatmul.mubr.f32.gmra.mxu0 %v2839
    %v2921 = vpop.f32.mrf.mxu0
    %v2922 = vadd.f32 0.0, %v2921
    %v2923 = vpop.f32.mrf.mxu0
    %v2924 = vadd.f32 0.0, %v2923
    %2925 = vmatprep.mubr.f32.mxu0 0.0
    %2926 = vmatmul.mubr.f32.gmra.mxu0 %v2841
    %v2927 = vpop.f32.mrf.mxu0
    %v2928 = vadd.f32 0.0, %v2927
    %v2929 = vpop.f32.mrf.mxu0
    %v2930 = vadd.f32 0.0, %v2929
    %2931 = vdwg.mxu0
    %v2932 = vadd.f32 %v2820, %v2910
    %v2933 = vadd.f32 %v2821, %v2912
    %v2934 = vadd.f32 %v2822, %v2916
    %v2935 = vadd.f32 %v2823, %v2918
    %v2936 = vadd.f32 %v2824, %v2922
    %v2937 = vadd.f32 %v2825, %v2924
    %v2938 = vadd.f32 %v2826, %v2928
    %v2939 = vadd.f32 %v2827, %v2930
    %v2940 = vrot.slane %v2507, 4
    %v2941 = vrot.slane %v2508, 4
    %v2942 = vsel %vm612, %v2940, %v2941
    %v2943 = vrot.slane %v2509, 4
    %v2944 = vsel %vm612, %v2941, %v2943
    %v2945 = vrot.slane %v2510, 4
    %v2946 = vsel %vm612, %v2943, %v2945
    %v2947 = vsel %vm116, %v2942, 0
    %v2949 = vsel %vm116, %v2944, 0
    %v2951 = vsel %vm116, %v2946, 0
    %v2953 = vsel %vm116, %v2945, 0
    %2955 = vmatprep.subr.mxu0 0.0
    %2956 = vmatpush1.msra.mxu0 0.0
    %2957 = vmatprep.subr.mxu0 0.0
    %2958 = vmatpush1.msra.mxu0 0.0
    %2959 = vmatprep.subr.mxu0 0.0
    %2960 = vmatpush1.msra.mxu0 0.0
    %2961 = vmatprep.subr.mxu0 0.0
    %2962 = vmatpush1.msra.mxu0 0.0
    %2963 = vmatprep.subr.mxu0 %v611
    %2964 = vmatpush1.msra.mxu0 %v610
    %2965 = vmatprep.subr.mxu0 %v609
    %2966 = vmatpush1.msra.mxu0 %v608
    %2967 = vmatprep.subr.mxu0 %v607
    %2968 = vmatpush1.msra.mxu0 %v606
    %2969 = vmatprep.subr.mxu0 %v605
    %2970 = vmatpush1.msra.mxu0 %v604
    %2971 = vmatprep.subr.mxu0 %v603
    %2972 = vmatpush1.msra.mxu0 %v602
    %2973 = vmatprep.subr.mxu0 %v601
    %2974 = vmatpush1.msra.mxu0 %v600
    %2975 = vmatprep.subr.mxu0 %v599
    %2976 = vmatpush1.msra.mxu0 %v598
    %2977 = vmatprep.subr.mxu0 %v597
    %2978 = vmatpush1.msra.mxu0 %v596
    %2979 = vmatprep.subr.mxu0 %v595
    %2980 = vmatpush1.msra.mxu0 %v594
    %2981 = vmatprep.subr.mxu0 %v593
    %2982 = vmatpush1.msra.mxu0 %v592
    %2983 = vmatprep.subr.mxu0 %v591
    %2984 = vmatpush1.msra.mxu0 %v590
    %2985 = vmatprep.subr.mxu0 %v589
    %2986 = vmatpush1.msra.mxu0 %v588
    %2987 = vmatprep.subr.mxu0 0.0
    %2988 = vmatpush2.msra.mxu0 0.0
    %2989 = vmatprep.subr.mxu0 0.0
    %2990 = vmatpush2.msra.mxu0 0.0
    %2991 = vmatprep.subr.mxu0 0.0
    %2992 = vmatpush2.msra.mxu0 0.0
    %2993 = vmatprep.subr.mxu0 0.0
    %2994 = vmatpush2.msra.mxu0 0.0
    %2995 = vmatprep.subr.mxu0 0.0
    %2996 = vmatpush2.msra.mxu0 0.0
    %2997 = vmatprep.subr.mxu0 0.0
    %2998 = vmatpush2.msra.mxu0 0.0
    %2999 = vmatprep.subr.mxu0 0.0
    %3000 = vmatpush2.msra.mxu0 0.0
    %3001 = vmatprep.subr.mxu0 0.0
    %3002 = vmatpush2.msra.mxu0 0.0
    %3003 = vmatprep.subr.mxu0 0.0
    %3004 = vmatpush2.msra.mxu0 0.0
    %3005 = vmatprep.subr.mxu0 0.0
    %3006 = vmatpush2.msra.mxu0 0.0
    %3007 = vmatprep.subr.mxu0 0.0
    %3008 = vmatpush2.msra.mxu0 0.0
    %3009 = vmatprep.subr.mxu0 0.0
    %3010 = vmatpush2.msra.mxu0 0.0
    %3011 = vmatprep.subr.mxu0 0.0
    %3012 = vmatpush2.msra.mxu0 0.0
    %3013 = vmatprep.subr.mxu0 0.0
    %3014 = vmatpush2.msra.mxu0 0.0
    %3015 = vmatprep.subr.mxu0 0.0
    %3016 = vmatpush2.msra.mxu0 0.0
    %3017 = vmatprep.subr.mxu0 0.0
    %3018 = vmatpush2.msra.mxu0 0.0
    %3019 = vmatprep.mubr.f32.mxu0 0.0
    %3020 = vmatmul.mubr.f32.gmra.mxu0 %v2947
    %v3021 = vpop.f32.mrf.mxu0
    %v3022 = vadd.f32 0.0, %v3021
    %v3023 = vpop.f32.mrf.mxu0
    %v3024 = vadd.f32 0.0, %v3023
    %3025 = vmatprep.mubr.f32.mxu0 0.0
    %3026 = vmatmul.mubr.f32.gmra.mxu0 %v2949
    %v3027 = vpop.f32.mrf.mxu0
    %v3028 = vadd.f32 0.0, %v3027
    %v3029 = vpop.f32.mrf.mxu0
    %v3030 = vadd.f32 0.0, %v3029
    %3031 = vmatprep.mubr.f32.mxu0 0.0
    %3032 = vmatmul.mubr.f32.gmra.mxu0 %v2951
    %v3033 = vpop.f32.mrf.mxu0
    %v3034 = vadd.f32 0.0, %v3033
    %v3035 = vpop.f32.mrf.mxu0
    %v3036 = vadd.f32 0.0, %v3035
    %3037 = vmatprep.mubr.f32.mxu0 0.0
    %3038 = vmatmul.mubr.f32.gmra.mxu0 %v2953
    %v3039 = vpop.f32.mrf.mxu0
    %v3040 = vadd.f32 0.0, %v3039
    %v3041 = vpop.f32.mrf.mxu0
    %v3042 = vadd.f32 0.0, %v3041
    %3043 = vdwg.mxu0
    %v3044 = vadd.f32 %v2932, %v3022
    %v3045 = vadd.f32 %v2933, %v3024
    %v3046 = vadd.f32 %v2934, %v3028
    %v3047 = vadd.f32 %v2935, %v3030
    %v3048 = vadd.f32 %v2936, %v3034
    %v3049 = vadd.f32 %v2937, %v3036
    %v3050 = vadd.f32 %v2938, %v3040
    %v3051 = vadd.f32 %v2939, %v3042
    %v3052 = vadd.f32 %v3044, %v730
    %v3053 = vadd.f32 %v3045, %v734
    %v3054 = vadd.f32 %v3046, %v730
    %v3055 = vadd.f32 %v3047, %v734
    %v3056 = vadd.f32 %v3048, %v730
    %v3057 = vadd.f32 %v3049, %v734
    %v3058 = vadd.f32 %v3050, %v730
    %v3059 = vadd.f32 %v3051, %v734
    %v3060 = vmax.f32 %v3052, 0.0
    %v3061 = vmax.f32 %v3053, 0.0
    %v3062 = vmax.f32 %v3054, 0.0
    %v3063 = vmax.f32 %v3055, 0.0
    %v3064 = vmax.f32 %v3056, 0.0
    %v3065 = vmax.f32 %v3057, 0.0
    %v3066 = vmax.f32 %v3058, 0.0
    %v3067 = vmax.f32 %v3059, 0.0
    %v3069 = vsel %vm612, %v3066, 0
    %v3072 = vsel %vm612, %v3067, 0
    %3074 = vmatprep.subr.mxu0 0.0
    %3075 = vmatpush1.msra.mxu0 0.0
    %3076 = vmatprep.subr.mxu0 0.0
    %3077 = vmatpush1.msra.mxu0 0.0
    %3078 = vmatprep.subr.mxu0 0.0
    %3079 = vmatpush1.msra.mxu0 0.0
    %3080 = vmatprep.subr.mxu0 0.0
    %3081 = vmatpush1.msra.mxu0 0.0
    %3082 = vmatprep.subr.mxu0 0.0
    %3083 = vmatpush1.msra.mxu0 0.0
    %3084 = vmatprep.subr.mxu0 0.0
    %3085 = vmatpush1.msra.mxu0 0.0
    %3086 = vmatprep.subr.mxu0 0.0
    %3087 = vmatpush1.msra.mxu0 0.0
    %3088 = vmatprep.subr.mxu0 0.0
    %3089 = vmatpush1.msra.mxu0 0.0
    %3090 = vmatprep.subr.mxu0 0.0
    %3091 = vmatpush1.msra.mxu0 0.0
    %3092 = vmatprep.subr.mxu0 0.0
    %3093 = vmatpush1.msra.mxu0 0.0
    %3094 = vmatprep.subr.mxu0 0.0
    %3095 = vmatpush1.msra.mxu0 0.0
    %3096 = vmatprep.subr.mxu0 0.0
    %3097 = vmatpush1.msra.mxu0 0.0
    %3098 = vmatprep.subr.mxu0 %v3072
    %3099 = vmatpush1.msra.mxu0 %v3069
    %3100 = vmatprep.subr.mxu0 %v3065
    %3101 = vmatpush1.msra.mxu0 %v3064
    %3102 = vmatprep.subr.mxu0 %v3063
    %3103 = vmatpush1.msra.mxu0 %v3062
    %3104 = vmatprep.subr.mxu0 %v3061
    %3105 = vmatpush1.msra.mxu0 %v3060
    %3106 = vmatprep.subr.mxu0 0.0
    %3107 = vmatpush2.msra.mxu0 0.0
    %3108 = vmatprep.subr.mxu0 0.0
    %3109 = vmatpush2.msra.mxu0 0.0
    %3110 = vmatprep.subr.mxu0 0.0
    %3111 = vmatpush2.msra.mxu0 0.0
    %3112 = vmatprep.subr.mxu0 0.0
    %3113 = vmatpush2.msra.mxu0 0.0
    %3114 = vmatprep.subr.mxu0 0.0
    %3115 = vmatpush2.msra.mxu0 0.0
    %3116 = vmatprep.subr.mxu0 0.0
    %3117 = vmatpush2.msra.mxu0 0.0
    %3118 = vmatprep.subr.mxu0 0.0
    %3119 = vmatpush2.msra.mxu0 0.0
    %3120 = vmatprep.subr.mxu0 0.0
    %3121 = vmatpush2.msra.mxu0 0.0
    %3122 = vmatprep.subr.mxu0 0.0
    %3123 = vmatpush2.msra.mxu0 0.0
    %3124 = vmatprep.subr.mxu0 0.0
    %3125 = vmatpush2.msra.mxu0 0.0
    %3126 = vmatprep.subr.mxu0 0.0
    %3127 = vmatpush2.msra.mxu0 0.0
    %3128 = vmatprep.subr.mxu0 0.0
    %3129 = vmatpush2.msra.mxu0 0.0
    %3130 = vmatprep.subr.mxu0 0.0
    %3131 = vmatpush2.msra.mxu0 0.0
    %3132 = vmatprep.subr.mxu0 0.0
    %3133 = vmatpush2.msra.mxu0 0.0
    %3134 = vmatprep.subr.mxu0 0.0
    %3135 = vmatpush2.msra.mxu0 0.0
    %3136 = vmatprep.subr.mxu0 0.0
    %3137 = vmatpush2.msra.mxu0 0.0
    %3138 = vmatprep.mubr.f32.mxu0 0.0
    %3139 = vmatmul.mubr.f32.gmra.mxu0 %v757
    %v3140 = vpop.f32.mrf.mxu0
    %v3141 = vadd.f32 0.0, %v3140
    %v3142 = vpop.f32.mrf.mxu0
    %v3143 = vadd.f32 0.0, %v3142
    %3144 = vmatprep.mubr.f32.mxu0 0.0
    %3145 = vmatmul.mubr.f32.gmra.mxu0 %v760
    %v3146 = vpop.f32.mrf.mxu0
    %v3147 = vadd.f32 0.0, %v3146
    %v3148 = vpop.f32.mrf.mxu0
    %v3149 = vadd.f32 0.0, %v3148
    %3150 = vdwg.mxu0
    %3151 = vmatprep.subr.mxu0 0.0
    %3152 = vmatpush1.msra.mxu0 0.0
    %3153 = vmatprep.subr.mxu0 0.0
    %3154 = vmatpush1.msra.mxu0 0.0
    %3155 = vmatprep.subr.mxu0 0.0
    %3156 = vmatpush1.msra.mxu0 0.0
    %3157 = vmatprep.subr.mxu0 0.0
    %3158 = vmatpush1.msra.mxu0 0.0
    %3159 = vmatprep.subr.mxu0 0.0
    %3160 = vmatpush1.msra.mxu0 0.0
    %3161 = vmatprep.subr.mxu0 0.0
    %3162 = vmatpush1.msra.mxu0 0.0
    %3163 = vmatprep.subr.mxu0 0.0
    %3164 = vmatpush1.msra.mxu0 0.0
    %3165 = vmatprep.subr.mxu0 0.0
    %3166 = vmatpush1.msra.mxu0 0.0
    %3167 = vmatprep.subr.mxu0 0.0
    %3168 = vmatpush1.msra.mxu0 0.0
    %3169 = vmatprep.subr.mxu0 0.0
    %3170 = vmatpush1.msra.mxu0 0.0
    %3171 = vmatprep.subr.mxu0 0.0
    %3172 = vmatpush1.msra.mxu0 0.0
    %3173 = vmatprep.subr.mxu0 0.0
    %3174 = vmatpush1.msra.mxu0 0.0
    %3175 = vmatprep.subr.mxu0 %v3072
    %3176 = vmatpush1.msra.mxu0 %v3069
    %3177 = vmatprep.subr.mxu0 %v3065
    %3178 = vmatpush1.msra.mxu0 %v3064
    %3179 = vmatprep.subr.mxu0 %v3063
    %3180 = vmatpush1.msra.mxu0 %v3062
    %3181 = vmatprep.subr.mxu0 %v3061
    %3182 = vmatpush1.msra.mxu0 %v3060
    %3183 = vmatprep.subr.mxu0 0.0
    %3184 = vmatpush2.msra.mxu0 0.0
    %3185 = vmatprep.subr.mxu0 0.0
    %3186 = vmatpush2.msra.mxu0 0.0
    %3187 = vmatprep.subr.mxu0 0.0
    %3188 = vmatpush2.msra.mxu0 0.0
    %3189 = vmatprep.subr.mxu0 0.0
    %3190 = vmatpush2.msra.mxu0 0.0
    %3191 = vmatprep.subr.mxu0 0.0
    %3192 = vmatpush2.msra.mxu0 0.0
    %3193 = vmatprep.subr.mxu0 0.0
    %3194 = vmatpush2.msra.mxu0 0.0
    %3195 = vmatprep.subr.mxu0 0.0
    %3196 = vmatpush2.msra.mxu0 0.0
    %3197 = vmatprep.subr.mxu0 0.0
    %3198 = vmatpush2.msra.mxu0 0.0
    %3199 = vmatprep.subr.mxu0 0.0
    %3200 = vmatpush2.msra.mxu0 0.0
    %3201 = vmatprep.subr.mxu0 0.0
    %3202 = vmatpush2.msra.mxu0 0.0
    %3203 = vmatprep.subr.mxu0 0.0
    %3204 = vmatpush2.msra.mxu0 0.0
    %3205 = vmatprep.subr.mxu0 0.0
    %3206 = vmatpush2.msra.mxu0 0.0
    %3207 = vmatprep.subr.mxu0 0.0
    %3208 = vmatpush2.msra.mxu0 0.0
    %3209 = vmatprep.subr.mxu0 0.0
    %3210 = vmatpush2.msra.mxu0 0.0
    %3211 = vmatprep.subr.mxu0 0.0
    %3212 = vmatpush2.msra.mxu0 0.0
    %3213 = vmatprep.subr.mxu0 0.0
    %3214 = vmatpush2.msra.mxu0 0.0
    %3215 = vmatprep.mubr.f32.mxu0 0.0
    %3216 = vmatmul.mubr.f32.gmra.mxu0 %v849
    %v3217 = vpop.f32.mrf.mxu0
    %v3218 = vadd.f32 0.0, %v3217
    %v3219 = vpop.f32.mrf.mxu0
    %v3220 = vadd.f32 0.0, %v3219
    %3221 = vmatprep.mubr.f32.mxu0 0.0
    %3222 = vmatmul.mubr.f32.gmra.mxu0 %v852
    %v3223 = vpop.f32.mrf.mxu0
    %v3224 = vadd.f32 0.0, %v3223
    %v3225 = vpop.f32.mrf.mxu0
    %v3226 = vadd.f32 0.0, %v3225
    %3227 = vdwg.mxu0
    %v3228 = vmax.f32 %v3141, %v3218
    %v3229 = vmax.f32 %v3143, %v3220
    %v3230 = vmax.f32 %v3147, %v3224
    %v3231 = vmax.f32 %v3149, %v3226
    %v3233 = vsel %vm956, %v3229, 0
    %v3236 = vsel %vm956, %v3231, 0
    %3238 = vmatprep.subr.mxu0 0.0
    %3239 = vmatpush1.msra.mxu0 %v950
    %3240 = vmatprep.subr.mxu0 0.0
    %3241 = vmatpush1.msra.mxu0 %v949
    %3242 = vmatprep.subr.mxu0 0.0
    %3243 = vmatpush1.msra.mxu0 %v948
    %3244 = vmatprep.subr.mxu0 0.0
    %3245 = vmatpush1.msra.mxu0 %v947
    %3246 = vmatprep.subr.mxu0 0.0
    %3247 = vmatpush1.msra.mxu0 %v946
    %3248 = vmatprep.subr.mxu0 0.0
    %3249 = vmatpush1.msra.mxu0 %v945
    %3250 = vmatprep.subr.mxu0 0.0
    %3251 = vmatpush1.msra.mxu0 %v944
    %3252 = vmatprep.subr.mxu0 0.0
    %3253 = vmatpush1.msra.mxu0 %v943
    %3254 = vmatprep.subr.mxu0 0.0
    %3255 = vmatpush1.msra.mxu0 %v942
    %3256 = vmatprep.subr.mxu0 0.0
    %3257 = vmatpush1.msra.mxu0 %v941
    %3258 = vmatprep.subr.mxu0 0.0
    %3259 = vmatpush1.msra.mxu0 %v940
    %3260 = vmatprep.subr.mxu0 0.0
    %3261 = vmatpush1.msra.mxu0 %v939
    %3262 = vmatprep.subr.mxu0 0.0
    %3263 = vmatpush1.msra.mxu0 %v938
    %3264 = vmatprep.subr.mxu0 0.0
    %3265 = vmatpush1.msra.mxu0 %v937
    %3266 = vmatprep.subr.mxu0 0.0
    %3267 = vmatpush1.msra.mxu0 %v936
    %3268 = vmatprep.subr.mxu0 0.0
    %3269 = vmatpush1.msra.mxu0 %v935
    %3270 = vmatprep.subr.mxu0 0.0
    %3271 = vmatpush2.msra.mxu0 0.0
    %3272 = vmatprep.subr.mxu0 0.0
    %3273 = vmatpush2.msra.mxu0 0.0
    %3274 = vmatprep.subr.mxu0 0.0
    %3275 = vmatpush2.msra.mxu0 0.0
    %3276 = vmatprep.subr.mxu0 0.0
    %3277 = vmatpush2.msra.mxu0 0.0
    %3278 = vmatprep.subr.mxu0 0.0
    %3279 = vmatpush2.msra.mxu0 0.0
    %3280 = vmatprep.subr.mxu0 0.0
    %3281 = vmatpush2.msra.mxu0 0.0
    %3282 = vmatprep.subr.mxu0 0.0
    %3283 = vmatpush2.msra.mxu0 0.0
    %3284 = vmatprep.subr.mxu0 0.0
    %3285 = vmatpush2.msra.mxu0 0.0
    %3286 = vmatprep.subr.mxu0 0.0
    %3287 = vmatpush2.msra.mxu0 0.0
    %3288 = vmatprep.subr.mxu0 0.0
    %3289 = vmatpush2.msra.mxu0 0.0
    %3290 = vmatprep.subr.mxu0 0.0
    %3291 = vmatpush2.msra.mxu0 0.0
    %3292 = vmatprep.subr.mxu0 0.0
    %3293 = vmatpush2.msra.mxu0 %v955
    %3294 = vmatprep.subr.mxu0 0.0
    %3295 = vmatpush2.msra.mxu0 %v954
    %3296 = vmatprep.subr.mxu0 0.0
    %3297 = vmatpush2.msra.mxu0 %v953
    %3298 = vmatprep.subr.mxu0 0.0
    %3299 = vmatpush2.msra.mxu0 %v952
    %3300 = vmatprep.subr.mxu0 0.0
    %3301 = vmatpush2.msra.mxu0 %v951
    %3302 = vmatprep.mubr.f32.mxu0 %v3233
    %3303 = vmatmul.mubr.f32.gmra.mxu0 %v3228
    %v3304 = vpop.f32.mrf.mxu0
    %v3305 = vadd.f32 0.0, %v3304
    %v3306 = vpop.f32.mrf.mxu0
    %3307 = vmatprep.mubr.f32.mxu0 %v3236
    %3308 = vmatmul.mubr.f32.gmra.mxu0 %v3230
    %v3309 = vpop.f32.mrf.mxu0
    %v3310 = vadd.f32 0.0, %v3309
    %v3311 = vpop.f32.mrf.mxu0
    %3312 = vdwg.mxu0
    %3313 = vmatprep.subr.mxu0 0.0
    %3314 = vmatpush1.msra.mxu0 %v1054
    %3315 = vmatprep.subr.mxu0 0.0
    %3316 = vmatpush1.msra.mxu0 %v1053
    %3317 = vmatprep.subr.mxu0 0.0
    %3318 = vmatpush1.msra.mxu0 %v1052
    %3319 = vmatprep.subr.mxu0 0.0
    %3320 = vmatpush1.msra.mxu0 %v1051
    %3321 = vmatprep.subr.mxu0 0.0
    %3322 = vmatpush1.msra.mxu0 %v1050
    %3323 = vmatprep.subr.mxu0 0.0
    %3324 = vmatpush1.msra.mxu0 %v1049
    %3325 = vmatprep.subr.mxu0 0.0
    %3326 = vmatpush1.msra.mxu0 %v1048
    %3327 = vmatprep.subr.mxu0 0.0
    %3328 = vmatpush1.msra.mxu0 %v1047
    %3329 = vmatprep.subr.mxu0 0.0
    %3330 = vmatpush1.msra.mxu0 %v1046
    %3331 = vmatprep.subr.mxu0 0.0
    %3332 = vmatpush1.msra.mxu0 %v1045
    %3333 = vmatprep.subr.mxu0 0.0
    %3334 = vmatpush1.msra.mxu0 %v1044
    %3335 = vmatprep.subr.mxu0 0.0
    %3336 = vmatpush1.msra.mxu0 %v1043
    %3337 = vmatprep.subr.mxu0 0.0
    %3338 = vmatpush1.msra.mxu0 %v1042
    %3339 = vmatprep.subr.mxu0 0.0
    %3340 = vmatpush1.msra.mxu0 %v1041
    %3341 = vmatprep.subr.mxu0 0.0
    %3342 = vmatpush1.msra.mxu0 %v1040
    %3343 = vmatprep.subr.mxu0 0.0
    %3344 = vmatpush1.msra.mxu0 %v1039
    %3345 = vmatprep.subr.mxu0 0.0
    %3346 = vmatpush2.msra.mxu0 0.0
    %3347 = vmatprep.subr.mxu0 0.0
    %3348 = vmatpush2.msra.mxu0 0.0
    %3349 = vmatprep.subr.mxu0 0.0
    %3350 = vmatpush2.msra.mxu0 0.0
    %3351 = vmatprep.subr.mxu0 0.0
    %3352 = vmatpush2.msra.mxu0 0.0
    %3353 = vmatprep.subr.mxu0 0.0
    %3354 = vmatpush2.msra.mxu0 0.0
    %3355 = vmatprep.subr.mxu0 0.0
    %3356 = vmatpush2.msra.mxu0 0.0
    %3357 = vmatprep.subr.mxu0 0.0
    %3358 = vmatpush2.msra.mxu0 0.0
    %3359 = vmatprep.subr.mxu0 0.0
    %3360 = vmatpush2.msra.mxu0 0.0
    %3361 = vmatprep.subr.mxu0 0.0
    %3362 = vmatpush2.msra.mxu0 0.0
    %3363 = vmatprep.subr.mxu0 0.0
    %3364 = vmatpush2.msra.mxu0 0.0
    %3365 = vmatprep.subr.mxu0 0.0
    %3366 = vmatpush2.msra.mxu0 0.0
    %3367 = vmatprep.subr.mxu0 0.0
    %3368 = vmatpush2.msra.mxu0 %v1059
    %3369 = vmatprep.subr.mxu0 0.0
    %3370 = vmatpush2.msra.mxu0 %v1058
    %3371 = vmatprep.subr.mxu0 0.0
    %3372 = vmatpush2.msra.mxu0 %v1057
    %3373 = vmatprep.subr.mxu0 0.0
    %3374 = vmatpush2.msra.mxu0 %v1056
    %3375 = vmatprep.subr.mxu0 0.0
    %3376 = vmatpush2.msra.mxu0 %v1055
    %3377 = vmatprep.mubr.f32.mxu0 %v3233
    %3378 = vmatmul.mubr.f32.gmra.mxu0 %v3228
    %v3379 = vpop.f32.mrf.mxu0
    %v3380 = vadd.f32 0.0, %v3379
    %v3381 = vpop.f32.mrf.mxu0
    %3382 = vmatprep.mubr.f32.mxu0 %v3236
    %3383 = vmatmul.mubr.f32.gmra.mxu0 %v3230
    %v3384 = vpop.f32.mrf.mxu0
    %v3385 = vadd.f32 0.0, %v3384
    %v3386 = vpop.f32.mrf.mxu0
    %3387 = vdwg.mxu0
    %v3388 = vmax.f32 %v3305, %v3380
    %v3389 = vmax.f32 %v3310, %v3385
    %v3392 = vrot.slane %v3388, 1
    %v3393 = vrot.slane %v3389, 1
    %v3394 = vsel %vm108, %v3392, %v3393
    %v3395 = vsel %vm1187, %v3394, 0
    %v3397 = vsel %vm1187, %v3393, 0
    %3399 = vmatprep.subr.mxu0 0.0
    %3400 = vmatpush1.msra.mxu0 0.0
    %3401 = vmatprep.subr.mxu0 0.0
    %3402 = vmatpush1.msra.mxu0 0.0
    %3403 = vmatprep.subr.mxu0 0.0
    %3404 = vmatpush1.msra.mxu0 0.0
    %3405 = vmatprep.subr.mxu0 0.0
    %3406 = vmatpush1.msra.mxu0 0.0
    %3407 = vmatprep.subr.mxu0 0.0
    %3408 = vmatpush1.msra.mxu0 0.0
    %3409 = vmatprep.subr.mxu0 %v1196
    %3410 = vmatpush1.msra.mxu0 %v1193
    %3411 = vmatprep.subr.mxu0 %v1179
    %3412 = vmatpush1.msra.mxu0 %v1178
    %3413 = vmatprep.subr.mxu0 %v1177
    %3414 = vmatpush1.msra.mxu0 %v1176
    %3415 = vmatprep.subr.mxu0 %v1175
    %3416 = vmatpush1.msra.mxu0 %v1174
    %3417 = vmatprep.subr.mxu0 %v1173
    %3418 = vmatpush1.msra.mxu0 %v1172
    %3419 = vmatprep.subr.mxu0 %v1171
    %3420 = vmatpush1.msra.mxu0 %v1170
    %3421 = vmatprep.subr.mxu0 %v1169
    %3422 = vmatpush1.msra.mxu0 %v1168
    %3423 = vmatprep.subr.mxu0 %v1167
    %3424 = vmatpush1.msra.mxu0 %v1166
    %3425 = vmatprep.subr.mxu0 %v1165
    %3426 = vmatpush1.msra.mxu0 %v1164
    %3427 = vmatprep.subr.mxu0 %v1163
    %3428 = vmatpush1.msra.mxu0 %v1162
    %3429 = vmatprep.subr.mxu0 %v1161
    %3430 = vmatpush1.msra.mxu0 %v1160
    %3431 = vmatprep.subr.mxu0 0.0
    %3432 = vmatpush2.msra.mxu0 0.0
    %3433 = vmatprep.subr.mxu0 0.0
    %3434 = vmatpush2.msra.mxu0 0.0
    %3435 = vmatprep.subr.mxu0 0.0
    %3436 = vmatpush2.msra.mxu0 0.0
    %3437 = vmatprep.subr.mxu0 0.0
    %3438 = vmatpush2.msra.mxu0 0.0
    %3439 = vmatprep.subr.mxu0 0.0
    %3440 = vmatpush2.msra.mxu0 0.0
    %3441 = vmatprep.subr.mxu0 0.0
    %3442 = vmatpush2.msra.mxu0 0.0
    %3443 = vmatprep.subr.mxu0 0.0
    %3444 = vmatpush2.msra.mxu0 0.0
    %3445 = vmatprep.subr.mxu0 0.0
    %3446 = vmatpush2.msra.mxu0 0.0
    %3447 = vmatprep.subr.mxu0 0.0
    %3448 = vmatpush2.msra.mxu0 0.0
    %3449 = vmatprep.subr.mxu0 0.0
    %3450 = vmatpush2.msra.mxu0 0.0
    %3451 = vmatprep.subr.mxu0 0.0
    %3452 = vmatpush2.msra.mxu0 0.0
    %3453 = vmatprep.subr.mxu0 0.0
    %3454 = vmatpush2.msra.mxu0 0.0
    %3455 = vmatprep.subr.mxu0 0.0
    %3456 = vmatpush2.msra.mxu0 0.0
    %3457 = vmatprep.subr.mxu0 0.0
    %3458 = vmatpush2.msra.mxu0 0.0
    %3459 = vmatprep.subr.mxu0 0.0
    %3460 = vmatpush2.msra.mxu0 0.0
    %3461 = vmatprep.subr.mxu0 0.0
    %3462 = vmatpush2.msra.mxu0 0.0
    %3463 = vmatprep.mubr.f32.mxu0 0.0
    %3464 = vmatmul.mubr.f32.gmra.mxu0 %v3395
    %v3465 = vpop.f32.mrf.mxu0
    %v3466 = vadd.f32 0.0, %v3465
    %v3467 = vpop.f32.mrf.mxu0
    %v3468 = vadd.f32 0.0, %v3467
    %3469 = vmatprep.mubr.f32.mxu0 0.0
    %3470 = vmatmul.mubr.f32.gmra.mxu0 %v3397
    %v3471 = vpop.f32.mrf.mxu0
    %v3472 = vadd.f32 0.0, %v3471
    %v3473 = vpop.f32.mrf.mxu0
    %v3474 = vadd.f32 0.0, %v3473
    %3475 = vdwg.mxu0
    %v3476 = vsel %vm1187, %v3388, 0
    %v3478 = vsel %vm1187, %v3389, 0
    %3480 = vmatprep.subr.mxu0 0.0
    %3481 = vmatpush1.msra.mxu0 0.0
    %3482 = vmatprep.subr.mxu0 0.0
    %3483 = vmatpush1.msra.mxu0 0.0
    %3484 = vmatprep.subr.mxu0 0.0
    %3485 = vmatpush1.msra.mxu0 0.0
    %3486 = vmatprep.subr.mxu0 0.0
    %3487 = vmatpush1.msra.mxu0 0.0
    %3488 = vmatprep.subr.mxu0 0.0
    %3489 = vmatpush1.msra.mxu0 0.0
    %3490 = vmatprep.subr.mxu0 %v1283
    %3491 = vmatpush1.msra.mxu0 %v1280
    %3492 = vmatprep.subr.mxu0 %v1156
    %3493 = vmatpush1.msra.mxu0 %v1155
    %3494 = vmatprep.subr.mxu0 %v1154
    %3495 = vmatpush1.msra.mxu0 %v1153
    %3496 = vmatprep.subr.mxu0 %v1152
    %3497 = vmatpush1.msra.mxu0 %v1151
    %3498 = vmatprep.subr.mxu0 %v1150
    %3499 = vmatpush1.msra.mxu0 %v1149
    %3500 = vmatprep.subr.mxu0 %v1148
    %3501 = vmatpush1.msra.mxu0 %v1147
    %3502 = vmatprep.subr.mxu0 %v1146
    %3503 = vmatpush1.msra.mxu0 %v1145
    %3504 = vmatprep.subr.mxu0 %v1144
    %3505 = vmatpush1.msra.mxu0 %v1143
    %3506 = vmatprep.subr.mxu0 %v1142
    %3507 = vmatpush1.msra.mxu0 %v1141
    %3508 = vmatprep.subr.mxu0 %v1140
    %3509 = vmatpush1.msra.mxu0 %v1139
    %3510 = vmatprep.subr.mxu0 %v1138
    %3511 = vmatpush1.msra.mxu0 %v1137
    %3512 = vmatprep.subr.mxu0 0.0
    %3513 = vmatpush2.msra.mxu0 0.0
    %3514 = vmatprep.subr.mxu0 0.0
    %3515 = vmatpush2.msra.mxu0 0.0
    %3516 = vmatprep.subr.mxu0 0.0
    %3517 = vmatpush2.msra.mxu0 0.0
    %3518 = vmatprep.subr.mxu0 0.0
    %3519 = vmatpush2.msra.mxu0 0.0
    %3520 = vmatprep.subr.mxu0 0.0
    %3521 = vmatpush2.msra.mxu0 0.0
    %3522 = vmatprep.subr.mxu0 0.0
    %3523 = vmatpush2.msra.mxu0 0.0
    %3524 = vmatprep.subr.mxu0 0.0
    %3525 = vmatpush2.msra.mxu0 0.0
    %3526 = vmatprep.subr.mxu0 0.0
    %3527 = vmatpush2.msra.mxu0 0.0
    %3528 = vmatprep.subr.mxu0 0.0
    %3529 = vmatpush2.msra.mxu0 0.0
    %3530 = vmatprep.subr.mxu0 0.0
    %3531 = vmatpush2.msra.mxu0 0.0
    %3532 = vmatprep.subr.mxu0 0.0
    %3533 = vmatpush2.msra.mxu0 0.0
    %3534 = vmatprep.subr.mxu0 0.0
    %3535 = vmatpush2.msra.mxu0 0.0
    %3536 = vmatprep.subr.mxu0 0.0
    %3537 = vmatpush2.msra.mxu0 0.0
    %3538 = vmatprep.subr.mxu0 0.0
    %3539 = vmatpush2.msra.mxu0 0.0
    %3540 = vmatprep.subr.mxu0 0.0
    %3541 = vmatpush2.msra.mxu0 0.0
    %3542 = vmatprep.subr.mxu0 0.0
    %3543 = vmatpush2.msra.mxu0 0.0
    %3544 = vmatprep.mubr.f32.mxu0 0.0
    %3545 = vmatmul.mubr.f32.gmra.mxu0 %v3476
    %v3546 = vpop.f32.mrf.mxu0
    %v3547 = vadd.f32 %v3466, %v3546
    %v3548 = vpop.f32.mrf.mxu0
    %v3549 = vadd.f32 %v3468, %v3548
    %3550 = vmatprep.mubr.f32.mxu0 0.0
    %3551 = vmatmul.mubr.f32.gmra.mxu0 %v3478
    %v3552 = vpop.f32.mrf.mxu0
    %v3553 = vadd.f32 %v3472, %v3552
    %v3554 = vpop.f32.mrf.mxu0
    %v3555 = vadd.f32 %v3474, %v3554
    %3556 = vdwg.mxu0
    %v3557 = vrot.slane %v3388, 2
    %v3558 = vrot.slane %v3389, 2
    %v3559 = vsel %vm336, %v3557, %v3558
    %v3560 = vsel %vm1187, %v3559, 0
    %v3562 = vsel %vm1187, %v3558, 0
    %3564 = vmatprep.subr.mxu0 0.0
    %3565 = vmatpush1.msra.mxu0 0.0
    %3566 = vmatprep.subr.mxu0 0.0
    %3567 = vmatpush1.msra.mxu0 0.0
    %3568 = vmatprep.subr.mxu0 0.0
    %3569 = vmatpush1.msra.mxu0 0.0
    %3570 = vmatprep.subr.mxu0 0.0
    %3571 = vmatpush1.msra.mxu0 0.0
    %3572 = vmatprep.subr.mxu0 0.0
    %3573 = vmatpush1.msra.mxu0 0.0
    %3574 = vmatprep.subr.mxu0 %v1396
    %3575 = vmatpush1.msra.mxu0 %v1393
    %3576 = vmatprep.subr.mxu0 %v1382
    %3577 = vmatpush1.msra.mxu0 %v1381
    %3578 = vmatprep.subr.mxu0 %v1380
    %3579 = vmatpush1.msra.mxu0 %v1379
    %3580 = vmatprep.subr.mxu0 %v1378
    %3581 = vmatpush1.msra.mxu0 %v1377
    %3582 = vmatprep.subr.mxu0 %v1376
    %3583 = vmatpush1.msra.mxu0 %v1375
    %3584 = vmatprep.subr.mxu0 %v1374
    %3585 = vmatpush1.msra.mxu0 %v1373
    %3586 = vmatprep.subr.mxu0 %v1372
    %3587 = vmatpush1.msra.mxu0 %v1371
    %3588 = vmatprep.subr.mxu0 %v1370
    %3589 = vmatpush1.msra.mxu0 %v1369
    %3590 = vmatprep.subr.mxu0 %v1368
    %3591 = vmatpush1.msra.mxu0 %v1367
    %3592 = vmatprep.subr.mxu0 %v1366
    %3593 = vmatpush1.msra.mxu0 %v1365
    %3594 = vmatprep.subr.mxu0 %v1364
    %3595 = vmatpush1.msra.mxu0 %v1363
    %3596 = vmatprep.subr.mxu0 0.0
    %3597 = vmatpush2.msra.mxu0 0.0
    %3598 = vmatprep.subr.mxu0 0.0
    %3599 = vmatpush2.msra.mxu0 0.0
    %3600 = vmatprep.subr.mxu0 0.0
    %3601 = vmatpush2.msra.mxu0 0.0
    %3602 = vmatprep.subr.mxu0 0.0
    %3603 = vmatpush2.msra.mxu0 0.0
    %3604 = vmatprep.subr.mxu0 0.0
    %3605 = vmatpush2.msra.mxu0 0.0
    %3606 = vmatprep.subr.mxu0 0.0
    %3607 = vmatpush2.msra.mxu0 0.0
    %3608 = vmatprep.subr.mxu0 0.0
    %3609 = vmatpush2.msra.mxu0 0.0
    %3610 = vmatprep.subr.mxu0 0.0
    %3611 = vmatpush2.msra.mxu0 0.0
    %3612 = vmatprep.subr.mxu0 0.0
    %3613 = vmatpush2.msra.mxu0 0.0
    %3614 = vmatprep.subr.mxu0 0.0
    %3615 = vmatpush2.msra.mxu0 0.0
    %3616 = vmatprep.subr.mxu0 0.0
    %3617 = vmatpush2.msra.mxu0 0.0
    %3618 = vmatprep.subr.mxu0 0.0
    %3619 = vmatpush2.msra.mxu0 0.0
    %3620 = vmatprep.subr.mxu0 0.0
    %3621 = vmatpush2.msra.mxu0 0.0
    %3622 = vmatprep.subr.mxu0 0.0
    %3623 = vmatpush2.msra.mxu0 0.0
    %3624 = vmatprep.subr.mxu0 0.0
    %3625 = vmatpush2.msra.mxu0 0.0
    %3626 = vmatprep.subr.mxu0 0.0
    %3627 = vmatpush2.msra.mxu0 0.0
    %3628 = vmatprep.mubr.f32.mxu0 0.0
    %3629 = vmatmul.mubr.f32.gmra.mxu0 %v3560
    %v3630 = vpop.f32.mrf.mxu0
    %v3631 = vadd.f32 0.0, %v3630
    %v3632 = vpop.f32.mrf.mxu0
    %v3633 = vadd.f32 0.0, %v3632
    %3634 = vmatprep.mubr.f32.mxu0 0.0
    %3635 = vmatmul.mubr.f32.gmra.mxu0 %v3562
    %v3636 = vpop.f32.mrf.mxu0
    %v3637 = vadd.f32 0.0, %v3636
    %v3638 = vpop.f32.mrf.mxu0
    %v3639 = vadd.f32 0.0, %v3638
    %3640 = vdwg.mxu0
    %v3641 = vadd.f32 %v3547, %v3631
    %v3642 = vadd.f32 %v3549, %v3633
    %v3643 = vadd.f32 %v3553, %v3637
    %v3644 = vadd.f32 %v3555, %v3639
    %v3645 = vrot.slane %v3388, 3
    %v3646 = vrot.slane %v3389, 3
    %v3647 = vsel %vm474, %v3645, %v3646
    %v3648 = vsel %vm1187, %v3647, 0
    %v3650 = vsel %vm1187, %v3646, 0
    %3652 = vmatprep.subr.mxu0 0.0
    %3653 = vmatpush1.msra.mxu0 0.0
    %3654 = vmatprep.subr.mxu0 0.0
    %3655 = vmatpush1.msra.mxu0 0.0
    %3656 = vmatprep.subr.mxu0 0.0
    %3657 = vmatpush1.msra.mxu0 0.0
    %3658 = vmatprep.subr.mxu0 0.0
    %3659 = vmatpush1.msra.mxu0 0.0
    %3660 = vmatprep.subr.mxu0 0.0
    %3661 = vmatpush1.msra.mxu0 0.0
    %3662 = vmatprep.subr.mxu0 %v1513
    %3663 = vmatpush1.msra.mxu0 %v1510
    %3664 = vmatprep.subr.mxu0 %v1499
    %3665 = vmatpush1.msra.mxu0 %v1498
    %3666 = vmatprep.subr.mxu0 %v1497
    %3667 = vmatpush1.msra.mxu0 %v1496
    %3668 = vmatprep.subr.mxu0 %v1495
    %3669 = vmatpush1.msra.mxu0 %v1494
    %3670 = vmatprep.subr.mxu0 %v1493
    %3671 = vmatpush1.msra.mxu0 %v1492
    %3672 = vmatprep.subr.mxu0 %v1491
    %3673 = vmatpush1.msra.mxu0 %v1490
    %3674 = vmatprep.subr.mxu0 %v1489
    %3675 = vmatpush1.msra.mxu0 %v1488
    %3676 = vmatprep.subr.mxu0 %v1487
    %3677 = vmatpush1.msra.mxu0 %v1486
    %3678 = vmatprep.subr.mxu0 %v1485
    %3679 = vmatpush1.msra.mxu0 %v1484
    %3680 = vmatprep.subr.mxu0 %v1483
    %3681 = vmatpush1.msra.mxu0 %v1482
    %3682 = vmatprep.subr.mxu0 %v1481
    %3683 = vmatpush1.msra.mxu0 %v1480
    %3684 = vmatprep.subr.mxu0 0.0
    %3685 = vmatpush2.msra.mxu0 0.0
    %3686 = vmatprep.subr.mxu0 0.0
    %3687 = vmatpush2.msra.mxu0 0.0
    %3688 = vmatprep.subr.mxu0 0.0
    %3689 = vmatpush2.msra.mxu0 0.0
    %3690 = vmatprep.subr.mxu0 0.0
    %3691 = vmatpush2.msra.mxu0 0.0
    %3692 = vmatprep.subr.mxu0 0.0
    %3693 = vmatpush2.msra.mxu0 0.0
    %3694 = vmatprep.subr.mxu0 0.0
    %3695 = vmatpush2.msra.mxu0 0.0
    %3696 = vmatprep.subr.mxu0 0.0
    %3697 = vmatpush2.msra.mxu0 0.0
    %3698 = vmatprep.subr.mxu0 0.0
    %3699 = vmatpush2.msra.mxu0 0.0
    %3700 = vmatprep.subr.mxu0 0.0
    %3701 = vmatpush2.msra.mxu0 0.0
    %3702 = vmatprep.subr.mxu0 0.0
    %3703 = vmatpush2.msra.mxu0 0.0
    %3704 = vmatprep.subr.mxu0 0.0
    %3705 = vmatpush2.msra.mxu0 0.0
    %3706 = vmatprep.subr.mxu0 0.0
    %3707 = vmatpush2.msra.mxu0 0.0
    %3708 = vmatprep.subr.mxu0 0.0
    %3709 = vmatpush2.msra.mxu0 0.0
    %3710 = vmatprep.subr.mxu0 0.0
    %3711 = vmatpush2.msra.mxu0 0.0
    %3712 = vmatprep.subr.mxu0 0.0
    %3713 = vmatpush2.msra.mxu0 0.0
    %3714 = vmatprep.subr.mxu0 0.0
    %3715 = vmatpush2.msra.mxu0 0.0
    %3716 = vmatprep.mubr.f32.mxu0 0.0
    %3717 = vmatmul.mubr.f32.gmra.mxu0 %v3648
    %v3718 = vpop.f32.mrf.mxu0
    %v3719 = vadd.f32 0.0, %v3718
    %v3720 = vpop.f32.mrf.mxu0
    %v3721 = vadd.f32 0.0, %v3720
    %3722 = vmatprep.mubr.f32.mxu0 0.0
    %3723 = vmatmul.mubr.f32.gmra.mxu0 %v3650
    %v3724 = vpop.f32.mrf.mxu0
    %v3725 = vadd.f32 0.0, %v3724
    %v3726 = vpop.f32.mrf.mxu0
    %v3727 = vadd.f32 0.0, %v3726
    %3728 = vdwg.mxu0
    %v3729 = vadd.f32 %v3641, %v3719
    %v3730 = vadd.f32 %v3642, %v3721
    %v3731 = vadd.f32 %v3643, %v3725
    %v3732 = vadd.f32 %v3644, %v3727
    %v3733 = vrot.slane %v3388, 4
    %v3734 = vrot.slane %v3389, 4
    %v3735 = vsel %vm612, %v3733, %v3734
    %v3736 = vsel %vm1187, %v3735, 0
    %v3738 = vsel %vm1187, %v3734, 0
    %3740 = vmatprep.subr.mxu0 0.0
    %3741 = vmatpush1.msra.mxu0 0.0
    %3742 = vmatprep.subr.mxu0 0.0
    %3743 = vmatpush1.msra.mxu0 0.0
    %3744 = vmatprep.subr.mxu0 0.0
    %3745 = vmatpush1.msra.mxu0 0.0
    %3746 = vmatprep.subr.mxu0 0.0
    %3747 = vmatpush1.msra.mxu0 0.0
    %3748 = vmatprep.subr.mxu0 0.0
    %3749 = vmatpush1.msra.mxu0 0.0
    %3750 = vmatprep.subr.mxu0 %v1630
    %3751 = vmatpush1.msra.mxu0 %v1627
    %3752 = vmatprep.subr.mxu0 %v1616
    %3753 = vmatpush1.msra.mxu0 %v1615
    %3754 = vmatprep.subr.mxu0 %v1614
    %3755 = vmatpush1.msra.mxu0 %v1613
    %3756 = vmatprep.subr.mxu0 %v1612
    %3757 = vmatpush1.msra.mxu0 %v1611
    %3758 = vmatprep.subr.mxu0 %v1610
    %3759 = vmatpush1.msra.mxu0 %v1609
    %3760 = vmatprep.subr.mxu0 %v1608
    %3761 = vmatpush1.msra.mxu0 %v1607
    %3762 = vmatprep.subr.mxu0 %v1606
    %3763 = vmatpush1.msra.mxu0 %v1605
    %3764 = vmatprep.subr.mxu0 %v1604
    %3765 = vmatpush1.msra.mxu0 %v1603
    %3766 = vmatprep.subr.mxu0 %v1602
    %3767 = vmatpush1.msra.mxu0 %v1601
    %3768 = vmatprep.subr.mxu0 %v1600
    %3769 = vmatpush1.msra.mxu0 %v1599
    %3770 = vmatprep.subr.mxu0 %v1598
    %3771 = vmatpush1.msra.mxu0 %v1597
    %3772 = vmatprep.subr.mxu0 0.0
    %3773 = vmatpush2.msra.mxu0 0.0
    %3774 = vmatprep.subr.mxu0 0.0
    %3775 = vmatpush2.msra.mxu0 0.0
    %3776 = vmatprep.subr.mxu0 0.0
    %3777 = vmatpush2.msra.mxu0 0.0
    %3778 = vmatprep.subr.mxu0 0.0
    %3779 = vmatpush2.msra.mxu0 0.0
    %3780 = vmatprep.subr.mxu0 0.0
    %3781 = vmatpush2.msra.mxu0 0.0
    %3782 = vmatprep.subr.mxu0 0.0
    %3783 = vmatpush2.msra.mxu0 0.0
    %3784 = vmatprep.subr.mxu0 0.0
    %3785 = vmatpush2.msra.mxu0 0.0
    %3786 = vmatprep.subr.mxu0 0.0
    %3787 = vmatpush2.msra.mxu0 0.0
    %3788 = vmatprep.subr.mxu0 0.0
    %3789 = vmatpush2.msra.mxu0 0.0
    %3790 = vmatprep.subr.mxu0 0.0
    %3791 = vmatpush2.msra.mxu0 0.0
    %3792 = vmatprep.subr.mxu0 0.0
    %3793 = vmatpush2.msra.mxu0 0.0
    %3794 = vmatprep.subr.mxu0 0.0
    %3795 = vmatpush2.msra.mxu0 0.0
    %3796 = vmatprep.subr.mxu0 0.0
    %3797 = vmatpush2.msra.mxu0 0.0
    %3798 = vmatprep.subr.mxu0 0.0
    %3799 = vmatpush2.msra.mxu0 0.0
    %3800 = vmatprep.subr.mxu0 0.0
    %3801 = vmatpush2.msra.mxu0 0.0
    %3802 = vmatprep.subr.mxu0 0.0
    %3803 = vmatpush2.msra.mxu0 0.0
    %3804 = vmatprep.mubr.f32.mxu0 0.0
    %3805 = vmatmul.mubr.f32.gmra.mxu0 %v3736
    %v3806 = vpop.f32.mrf.mxu0
    %v3807 = vadd.f32 0.0, %v3806
    %v3808 = vpop.f32.mrf.mxu0
    %v3809 = vadd.f32 0.0, %v3808
    %3810 = vmatprep.mubr.f32.mxu0 0.0
    %3811 = vmatmul.mubr.f32.gmra.mxu0 %v3738
    %v3812 = vpop.f32.mrf.mxu0
    %v3813 = vadd.f32 0.0, %v3812
    %v3814 = vpop.f32.mrf.mxu0
    %v3815 = vadd.f32 0.0, %v3814
    %3816 = vdwg.mxu0
    %v3817 = vadd.f32 %v3729, %v3807
    %v3818 = vadd.f32 %v3730, %v3809
    %v3819 = vadd.f32 %v3731, %v3813
    %v3820 = vadd.f32 %v3732, %v3815
    %v3821 = vadd.f32 %v3817, %v1718
    %v3822 = vadd.f32 %v3818, %v1722
    %v3823 = vadd.f32 %v3819, %v1718
    %v3824 = vadd.f32 %v3820, %v1722
    %v3825 = vmax.f32 %v3821, 0.0
    %v3826 = vmax.f32 %v3822, 0.0
    %v3827 = vmax.f32 %v3823, 0.0
    %v3828 = vmax.f32 %v3824, 0.0
    %v3830 = vsel %vm1738, %v3827, 0
    %v3833 = vsel %vm1738, %v3828, 0
    %3835 = vmatprep.subr.mxu0 0.0
    %3836 = vmatpush1.msra.mxu0 0.0
    %3837 = vmatprep.subr.mxu0 0.0
    %3838 = vmatpush1.msra.mxu0 0.0
    %3839 = vmatprep.subr.mxu0 0.0
    %3840 = vmatpush1.msra.mxu0 0.0
    %3841 = vmatprep.subr.mxu0 0.0
    %3842 = vmatpush1.msra.mxu0 0.0
    %3843 = vmatprep.subr.mxu0 0.0
    %3844 = vmatpush1.msra.mxu0 0.0
    %3845 = vmatprep.subr.mxu0 0.0
    %3846 = vmatpush1.msra.mxu0 0.0
    %3847 = vmatprep.subr.mxu0 0.0
    %3848 = vmatpush1.msra.mxu0 0.0
    %3849 = vmatprep.subr.mxu0 0.0
    %3850 = vmatpush1.msra.mxu0 0.0
    %3851 = vmatprep.subr.mxu0 0.0
    %3852 = vmatpush1.msra.mxu0 0.0
    %3853 = vmatprep.subr.mxu0 0.0
    %3854 = vmatpush1.msra.mxu0 0.0
    %3855 = vmatprep.subr.mxu0 0.0
    %3856 = vmatpush1.msra.mxu0 0.0
    %3857 = vmatprep.subr.mxu0 0.0
    %3858 = vmatpush1.msra.mxu0 0.0
    %3859 = vmatprep.subr.mxu0 0.0
    %3860 = vmatpush1.msra.mxu0 0.0
    %3861 = vmatprep.subr.mxu0 0.0
    %3862 = vmatpush1.msra.mxu0 0.0
    %3863 = vmatprep.subr.mxu0 %v3833
    %3864 = vmatpush1.msra.mxu0 %v3830
    %3865 = vmatprep.subr.mxu0 %v3826
    %3866 = vmatpush1.msra.mxu0 %v3825
    %3867 = vmatprep.subr.mxu0 0.0
    %3868 = vmatpush2.msra.mxu0 0.0
    %3869 = vmatprep.subr.mxu0 0.0
    %3870 = vmatpush2.msra.mxu0 0.0
    %3871 = vmatprep.subr.mxu0 0.0
    %3872 = vmatpush2.msra.mxu0 0.0
    %3873 = vmatprep.subr.mxu0 0.0
    %3874 = vmatpush2.msra.mxu0 0.0
    %3875 = vmatprep.subr.mxu0 0.0
    %3876 = vmatpush2.msra.mxu0 0.0
    %3877 = vmatprep.subr.mxu0 0.0
    %3878 = vmatpush2.msra.mxu0 0.0
    %3879 = vmatprep.subr.mxu0 0.0
    %3880 = vmatpush2.msra.mxu0 0.0
    %3881 = vmatprep.subr.mxu0 0.0
    %3882 = vmatpush2.msra.mxu0 0.0
    %3883 = vmatprep.subr.mxu0 0.0
    %3884 = vmatpush2.msra.mxu0 0.0
    %3885 = vmatprep.subr.mxu0 0.0
    %3886 = vmatpush2.msra.mxu0 0.0
    %3887 = vmatprep.subr.mxu0 0.0
    %3888 = vmatpush2.msra.mxu0 0.0
    %3889 = vmatprep.subr.mxu0 0.0
    %3890 = vmatpush2.msra.mxu0 0.0
    %3891 = vmatprep.subr.mxu0 0.0
    %3892 = vmatpush2.msra.mxu0 0.0
    %3893 = vmatprep.subr.mxu0 0.0
    %3894 = vmatpush2.msra.mxu0 0.0
    %3895 = vmatprep.subr.mxu0 0.0
    %3896 = vmatpush2.msra.mxu0 0.0
    %3897 = vmatprep.subr.mxu0 0.0
    %3898 = vmatpush2.msra.mxu0 0.0
    %3899 = vmatprep.mubr.f32.mxu0 0.0
    %3900 = vmatmul.mubr.f32.gmra.mxu0 %v1736
    %v3901 = vpop.f32.mrf.mxu0
    %v3902 = vadd.f32 0.0, %v3901
    %v3903 = vpop.f32.mrf.mxu0
    %v3904 = vadd.f32 0.0, %v3903
    %3905 = vdwg.mxu0
    %3906 = vmatprep.subr.mxu0 0.0
    %3907 = vmatpush1.msra.mxu0 0.0
    %3908 = vmatprep.subr.mxu0 0.0
    %3909 = vmatpush1.msra.mxu0 0.0
    %3910 = vmatprep.subr.mxu0 0.0
    %3911 = vmatpush1.msra.mxu0 0.0
    %3912 = vmatprep.subr.mxu0 0.0
    %3913 = vmatpush1.msra.mxu0 0.0
    %3914 = vmatprep.subr.mxu0 0.0
    %3915 = vmatpush1.msra.mxu0 0.0
    %3916 = vmatprep.subr.mxu0 0.0
    %3917 = vmatpush1.msra.mxu0 0.0
    %3918 = vmatprep.subr.mxu0 0.0
    %3919 = vmatpush1.msra.mxu0 0.0
    %3920 = vmatprep.subr.mxu0 0.0
    %3921 = vmatpush1.msra.mxu0 0.0
    %3922 = vmatprep.subr.mxu0 0.0
    %3923 = vmatpush1.msra.mxu0 0.0
    %3924 = vmatprep.subr.mxu0 0.0
    %3925 = vmatpush1.msra.mxu0 0.0
    %3926 = vmatprep.subr.mxu0 0.0
    %3927 = vmatpush1.msra.mxu0 0.0
    %3928 = vmatprep.subr.mxu0 0.0
    %3929 = vmatpush1.msra.mxu0 0.0
    %3930 = vmatprep.subr.mxu0 0.0
    %3931 = vmatpush1.msra.mxu0 0.0
    %3932 = vmatprep.subr.mxu0 0.0
    %3933 = vmatpush1.msra.mxu0 0.0
    %3934 = vmatprep.subr.mxu0 %v3833
    %3935 = vmatpush1.msra.mxu0 %v3830
    %3936 = vmatprep.subr.mxu0 %v3826
    %3937 = vmatpush1.msra.mxu0 %v3825
    %3938 = vmatprep.subr.mxu0 0.0
    %3939 = vmatpush2.msra.mxu0 0.0
    %3940 = vmatprep.subr.mxu0 0.0
    %3941 = vmatpush2.msra.mxu0 0.0
    %3942 = vmatprep.subr.mxu0 0.0
    %3943 = vmatpush2.msra.mxu0 0.0
    %3944 = vmatprep.subr.mxu0 0.0
    %3945 = vmatpush2.msra.mxu0 0.0
    %3946 = vmatprep.subr.mxu0 0.0
    %3947 = vmatpush2.msra.mxu0 0.0
    %3948 = vmatprep.subr.mxu0 0.0
    %3949 = vmatpush2.msra.mxu0 0.0
    %3950 = vmatprep.subr.mxu0 0.0
    %3951 = vmatpush2.msra.mxu0 0.0
    %3952 = vmatprep.subr.mxu0 0.0
    %3953 = vmatpush2.msra.mxu0 0.0
    %3954 = vmatprep.subr.mxu0 0.0
    %3955 = vmatpush2.msra.mxu0 0.0
    %3956 = vmatprep.subr.mxu0 0.0
    %3957 = vmatpush2.msra.mxu0 0.0
    %3958 = vmatprep.subr.mxu0 0.0
    %3959 = vmatpush2.msra.mxu0 0.0
    %3960 = vmatprep.subr.mxu0 0.0
    %3961 = vmatpush2.msra.mxu0 0.0
    %3962 = vmatprep.subr.mxu0 0.0
    %3963 = vmatpush2.msra.mxu0 0.0
    %3964 = vmatprep.subr.mxu0 0.0
    %3965 = vmatpush2.msra.mxu0 0.0
    %3966 = vmatprep.subr.mxu0 0.0
    %3967 = vmatpush2.msra.mxu0 0.0
    %3968 = vmatprep.subr.mxu0 0.0
    %3969 = vmatpush2.msra.mxu0 0.0
    %3970 = vmatprep.mubr.f32.mxu0 0.0
    %3971 = vmatmul.mubr.f32.gmra.mxu0 %v1819
    %v3972 = vpop.f32.mrf.mxu0
    %v3973 = vadd.f32 0.0, %v3972
    %v3974 = vpop.f32.mrf.mxu0
    %v3975 = vadd.f32 0.0, %v3974
    %3976 = vdwg.mxu0
    %v3977 = vmax.f32 %v3902, %v3973
    %v3978 = vmax.f32 %v3904, %v3975
    %v3980 = vsel %vm1914, %v3978, 0
    %3982 = vmatprep.subr.mxu0 0.0
    %3983 = vmatpush1.msra.mxu0 %v1909
    %3984 = vmatprep.subr.mxu0 0.0
    %3985 = vmatpush1.msra.mxu0 %v1908
    %3986 = vmatprep.subr.mxu0 0.0
    %3987 = vmatpush1.msra.mxu0 %v1907
    %3988 = vmatprep.subr.mxu0 0.0
    %3989 = vmatpush1.msra.mxu0 %v1906
    %3990 = vmatprep.subr.mxu0 0.0
    %3991 = vmatpush1.msra.mxu0 %v1905
    %3992 = vmatprep.subr.mxu0 0.0
    %3993 = vmatpush1.msra.mxu0 %v1904
    %3994 = vmatprep.subr.mxu0 0.0
    %3995 = vmatpush1.msra.mxu0 %v1903
    %3996 = vmatprep.subr.mxu0 0.0
    %3997 = vmatpush1.msra.mxu0 %v1902
    %3998 = vmatprep.subr.mxu0 0.0
    %3999 = vmatpush1.msra.mxu0 %v1901
    %4000 = vmatprep.subr.mxu0 0.0
    %4001 = vmatpush1.msra.mxu0 %v1900
    %4002 = vmatprep.subr.mxu0 0.0
    %4003 = vmatpush1.msra.mxu0 %v1899
    %4004 = vmatprep.subr.mxu0 0.0
    %4005 = vmatpush1.msra.mxu0 %v1898
    %4006 = vmatprep.subr.mxu0 0.0
    %4007 = vmatpush1.msra.mxu0 %v1897
    %4008 = vmatprep.subr.mxu0 0.0
    %4009 = vmatpush1.msra.mxu0 %v1896
    %4010 = vmatprep.subr.mxu0 0.0
    %4011 = vmatpush1.msra.mxu0 %v1895
    %4012 = vmatprep.subr.mxu0 0.0
    %4013 = vmatpush1.msra.mxu0 %v1894
    %4014 = vmatprep.subr.mxu0 0.0
    %4015 = vmatpush2.msra.mxu0 0.0
    %4016 = vmatprep.subr.mxu0 0.0
    %4017 = vmatpush2.msra.mxu0 0.0
    %4018 = vmatprep.subr.mxu0 0.0
    %4019 = vmatpush2.msra.mxu0 0.0
    %4020 = vmatprep.subr.mxu0 0.0
    %4021 = vmatpush2.msra.mxu0 0.0
    %4022 = vmatprep.subr.mxu0 0.0
    %4023 = vmatpush2.msra.mxu0 0.0
    %4024 = vmatprep.subr.mxu0 0.0
    %4025 = vmatpush2.msra.mxu0 0.0
    %4026 = vmatprep.subr.mxu0 0.0
    %4027 = vmatpush2.msra.mxu0 0.0
    %4028 = vmatprep.subr.mxu0 0.0
    %4029 = vmatpush2.msra.mxu0 0.0
    %4030 = vmatprep.subr.mxu0 0.0
    %4031 = vmatpush2.msra.mxu0 0.0
    %4032 = vmatprep.subr.mxu0 0.0
    %4033 = vmatpush2.msra.mxu0 0.0
    %4034 = vmatprep.subr.mxu0 0.0
    %4035 = vmatpush2.msra.mxu0 0.0
    %4036 = vmatprep.subr.mxu0 0.0
    %4037 = vmatpush2.msra.mxu0 0.0
    %4038 = vmatprep.subr.mxu0 0.0
    %4039 = vmatpush2.msra.mxu0 %v1913
    %4040 = vmatprep.subr.mxu0 0.0
    %4041 = vmatpush2.msra.mxu0 %v1912
    %4042 = vmatprep.subr.mxu0 0.0
    %4043 = vmatpush2.msra.mxu0 %v1911
    %4044 = vmatprep.subr.mxu0 0.0
    %4045 = vmatpush2.msra.mxu0 %v1910
    %4046 = vmatprep.mubr.f32.mxu0 %v3980
    %4047 = vmatmul.mubr.f32.gmra.mxu0 %v3977
    %v4048 = vpop.f32.mrf.mxu0
    %v4049 = vadd.f32 0.0, %v4048
    %v4050 = vpop.f32.mrf.mxu0
    %4051 = vdwg.mxu0
    %4052 = vmatprep.subr.mxu0 0.0
    %4053 = vmatpush1.msra.mxu0 %v2004
    %4054 = vmatprep.subr.mxu0 0.0
    %4055 = vmatpush1.msra.mxu0 %v2003
    %4056 = vmatprep.subr.mxu0 0.0
    %4057 = vmatpush1.msra.mxu0 %v2002
    %4058 = vmatprep.subr.mxu0 0.0
    %4059 = vmatpush1.msra.mxu0 %v2001
    %4060 = vmatprep.subr.mxu0 0.0
    %4061 = vmatpush1.msra.mxu0 %v2000
    %4062 = vmatprep.subr.mxu0 0.0
    %4063 = vmatpush1.msra.mxu0 %v1999
    %4064 = vmatprep.subr.mxu0 0.0
    %4065 = vmatpush1.msra.mxu0 %v1998
    %4066 = vmatprep.subr.mxu0 0.0
    %4067 = vmatpush1.msra.mxu0 %v1997
    %4068 = vmatprep.subr.mxu0 0.0
    %4069 = vmatpush1.msra.mxu0 %v1996
    %4070 = vmatprep.subr.mxu0 0.0
    %4071 = vmatpush1.msra.mxu0 %v1995
    %4072 = vmatprep.subr.mxu0 0.0
    %4073 = vmatpush1.msra.mxu0 %v1994
    %4074 = vmatprep.subr.mxu0 0.0
    %4075 = vmatpush1.msra.mxu0 %v1993
    %4076 = vmatprep.subr.mxu0 0.0
    %4077 = vmatpush1.msra.mxu0 %v1992
    %4078 = vmatprep.subr.mxu0 0.0
    %4079 = vmatpush1.msra.mxu0 %v1991
    %4080 = vmatprep.subr.mxu0 0.0
    %4081 = vmatpush1.msra.mxu0 %v1990
    %4082 = vmatprep.subr.mxu0 0.0
    %4083 = vmatpush1.msra.mxu0 %v1989
    %4084 = vmatprep.subr.mxu0 0.0
    %4085 = vmatpush2.msra.mxu0 0.0
    %4086 = vmatprep.subr.mxu0 0.0
    %4087 = vmatpush2.msra.mxu0 0.0
    %4088 = vmatprep.subr.mxu0 0.0
    %4089 = vmatpush2.msra.mxu0 0.0
    %4090 = vmatprep.subr.mxu0 0.0
    %4091 = vmatpush2.msra.mxu0 0.0
    %4092 = vmatprep.subr.mxu0 0.0
    %4093 = vmatpush2.msra.mxu0 0.0
    %4094 = vmatprep.subr.mxu0 0.0
    %4095 = vmatpush2.msra.mxu0 0.0
    %4096 = vmatprep.subr.mxu0 0.0
    %4097 = vmatpush2.msra.mxu0 0.0
    %4098 = vmatprep.subr.mxu0 0.0
    %4099 = vmatpush2.msra.mxu0 0.0
    %4100 = vmatprep.subr.mxu0 0.0
    %4101 = vmatpush2.msra.mxu0 0.0
    %4102 = vmatprep.subr.mxu0 0.0
    %4103 = vmatpush2.msra.mxu0 0.0
    %4104 = vmatprep.subr.mxu0 0.0
    %4105 = vmatpush2.msra.mxu0 0.0
    %4106 = vmatprep.subr.mxu0 0.0
    %4107 = vmatpush2.msra.mxu0 0.0
    %4108 = vmatprep.subr.mxu0 0.0
    %4109 = vmatpush2.msra.mxu0 %v2008
    %4110 = vmatprep.subr.mxu0 0.0
    %4111 = vmatpush2.msra.mxu0 %v2007
    %4112 = vmatprep.subr.mxu0 0.0
    %4113 = vmatpush2.msra.mxu0 %v2006
    %4114 = vmatprep.subr.mxu0 0.0
    %4115 = vmatpush2.msra.mxu0 %v2005
    %4116 = vmatprep.mubr.f32.mxu0 %v3980
    %4117 = vmatmul.mubr.f32.gmra.mxu0 %v3977
    %v4118 = vpop.f32.mrf.mxu0
    %v4119 = vadd.f32 0.0, %v4118
    %v4120 = vpop.f32.mrf.mxu0
    %4121 = vdwg.mxu0
    %v4122 = vmax.f32 %v4049, %v4119
    %v4124 = vrot.slane %v4122, 1
    %v4125 = vsel %vm2103, %v4124, 0
    %4127 = vmatprep.subr.mxu0 0.0
    %4128 = vmatpush1.msra.mxu0 0.0
    %4129 = vmatprep.subr.mxu0 0.0
    %4130 = vmatpush1.msra.mxu0 0.0
    %4131 = vmatprep.subr.mxu0 0.0
    %4132 = vmatpush1.msra.mxu0 0.0
    %4133 = vmatprep.subr.mxu0 0.0
    %4134 = vmatpush1.msra.mxu0 0.0
    %4135 = vmatprep.subr.mxu0 0.0
    %4136 = vmatpush1.msra.mxu0 0.0
    %4137 = vmatprep.subr.mxu0 0.0
    %4138 = vmatpush1.msra.mxu0 0.0
    %4139 = vmatprep.subr.mxu0 0.0
    %4140 = vmatpush1.msra.mxu0 %v2100
    %4141 = vmatprep.subr.mxu0 0.0
    %4142 = vmatpush1.msra.mxu0 %v2099
    %4143 = vmatprep.subr.mxu0 0.0
    %4144 = vmatpush1.msra.mxu0 %v2098
    %4145 = vmatprep.subr.mxu0 0.0
    %4146 = vmatpush1.msra.mxu0 %v2097
    %4147 = vmatprep.subr.mxu0 0.0
    %4148 = vmatpush1.msra.mxu0 %v2096
    %4149 = vmatprep.subr.mxu0 0.0
    %4150 = vmatpush1.msra.mxu0 %v2095
    %4151 = vmatprep.subr.mxu0 0.0
    %4152 = vmatpush1.msra.mxu0 %v2094
    %4153 = vmatprep.subr.mxu0 0.0
    %4154 = vmatpush1.msra.mxu0 %v2093
    %4155 = vmatprep.subr.mxu0 0.0
    %4156 = vmatpush1.msra.mxu0 %v2092
    %4157 = vmatprep.subr.mxu0 0.0
    %4158 = vmatpush1.msra.mxu0 %v2091
    %4159 = vmatprep.subr.mxu0 0.0
    %4160 = vmatpush2.msra.mxu0 0.0
    %4161 = vmatprep.subr.mxu0 0.0
    %4162 = vmatpush2.msra.mxu0 0.0
    %4163 = vmatprep.subr.mxu0 0.0
    %4164 = vmatpush2.msra.mxu0 0.0
    %4165 = vmatprep.subr.mxu0 0.0
    %4166 = vmatpush2.msra.mxu0 0.0
    %4167 = vmatprep.subr.mxu0 0.0
    %4168 = vmatpush2.msra.mxu0 0.0
    %4169 = vmatprep.subr.mxu0 0.0
    %4170 = vmatpush2.msra.mxu0 0.0
    %4171 = vmatprep.subr.mxu0 0.0
    %4172 = vmatpush2.msra.mxu0 0.0
    %4173 = vmatprep.subr.mxu0 0.0
    %4174 = vmatpush2.msra.mxu0 0.0
    %4175 = vmatprep.subr.mxu0 0.0
    %4176 = vmatpush2.msra.mxu0 0.0
    %4177 = vmatprep.subr.mxu0 0.0
    %4178 = vmatpush2.msra.mxu0 0.0
    %4179 = vmatprep.subr.mxu0 0.0
    %4180 = vmatpush2.msra.mxu0 0.0
    %4181 = vmatprep.subr.mxu0 0.0
    %4182 = vmatpush2.msra.mxu0 0.0
    %4183 = vmatprep.subr.mxu0 0.0
    %4184 = vmatpush2.msra.mxu0 0.0
    %4185 = vmatprep.subr.mxu0 0.0
    %4186 = vmatpush2.msra.mxu0 0.0
    %4187 = vmatprep.subr.mxu0 0.0
    %4188 = vmatpush2.msra.mxu0 0.0
    %4189 = vmatprep.subr.mxu0 0.0
    %4190 = vmatpush2.msra.mxu0 0.0
    %4191 = vmatprep.mubr.f32.mxu0 0.0
    %4192 = vmatmul.mubr.f32.gmra.mxu0 %v4125
    %v4193 = vpop.f32.mrf.mxu0
    %v4194 = vadd.f32 0.0, %v4193
    %v4195 = vpop.f32.mrf.mxu0
    %4196 = vdwg.mxu0
    %v4197 = vsel %vm2103, %v4122, 0
    %4199 = vmatprep.subr.mxu0 0.0
    %4200 = vmatpush1.msra.mxu0 0.0
    %4201 = vmatprep.subr.mxu0 0.0
    %4202 = vmatpush1.msra.mxu0 0.0
    %4203 = vmatprep.subr.mxu0 0.0
    %4204 = vmatpush1.msra.mxu0 0.0
    %4205 = vmatprep.subr.mxu0 0.0
    %4206 = vmatpush1.msra.mxu0 0.0
    %4207 = vmatprep.subr.mxu0 0.0
    %4208 = vmatpush1.msra.mxu0 0.0
    %4209 = vmatprep.subr.mxu0 0.0
    %4210 = vmatpush1.msra.mxu0 0.0
    %4211 = vmatprep.subr.mxu0 0.0
    %4212 = vmatpush1.msra.mxu0 %v2089
    %4213 = vmatprep.subr.mxu0 0.0
    %4214 = vmatpush1.msra.mxu0 %v2088
    %4215 = vmatprep.subr.mxu0 0.0
    %4216 = vmatpush1.msra.mxu0 %v2087
    %4217 = vmatprep.subr.mxu0 0.0
    %4218 = vmatpush1.msra.mxu0 %v2086
    %4219 = vmatprep.subr.mxu0 0.0
    %4220 = vmatpush1.msra.mxu0 %v2085
    %4221 = vmatprep.subr.mxu0 0.0
    %4222 = vmatpush1.msra.mxu0 %v2084
    %4223 = vmatprep.subr.mxu0 0.0
    %4224 = vmatpush1.msra.mxu0 %v2083
    %4225 = vmatprep.subr.mxu0 0.0
    %4226 = vmatpush1.msra.mxu0 %v2082
    %4227 = vmatprep.subr.mxu0 0.0
    %4228 = vmatpush1.msra.mxu0 %v2081
    %4229 = vmatprep.subr.mxu0 0.0
    %4230 = vmatpush1.msra.mxu0 %v2080
    %4231 = vmatprep.subr.mxu0 0.0
    %4232 = vmatpush2.msra.mxu0 0.0
    %4233 = vmatprep.subr.mxu0 0.0
    %4234 = vmatpush2.msra.mxu0 0.0
    %4235 = vmatprep.subr.mxu0 0.0
    %4236 = vmatpush2.msra.mxu0 0.0
    %4237 = vmatprep.subr.mxu0 0.0
    %4238 = vmatpush2.msra.mxu0 0.0
    %4239 = vmatprep.subr.mxu0 0.0
    %4240 = vmatpush2.msra.mxu0 0.0
    %4241 = vmatprep.subr.mxu0 0.0
    %4242 = vmatpush2.msra.mxu0 0.0
    %4243 = vmatprep.subr.mxu0 0.0
    %4244 = vmatpush2.msra.mxu0 0.0
    %4245 = vmatprep.subr.mxu0 0.0
    %4246 = vmatpush2.msra.mxu0 0.0
    %4247 = vmatprep.subr.mxu0 0.0
    %4248 = vmatpush2.msra.mxu0 0.0
    %4249 = vmatprep.subr.mxu0 0.0
    %4250 = vmatpush2.msra.mxu0 0.0
    %4251 = vmatprep.subr.mxu0 0.0
    %4252 = vmatpush2.msra.mxu0 0.0
    %4253 = vmatprep.subr.mxu0 0.0
    %4254 = vmatpush2.msra.mxu0 0.0
    %4255 = vmatprep.subr.mxu0 0.0
    %4256 = vmatpush2.msra.mxu0 0.0
    %4257 = vmatprep.subr.mxu0 0.0
    %4258 = vmatpush2.msra.mxu0 0.0
    %4259 = vmatprep.subr.mxu0 0.0
    %4260 = vmatpush2.msra.mxu0 0.0
    %4261 = vmatprep.subr.mxu0 0.0
    %4262 = vmatpush2.msra.mxu0 0.0
    %4263 = vmatprep.mubr.f32.mxu0 0.0
    %4264 = vmatmul.mubr.f32.gmra.mxu0 %v4197
    %v4265 = vpop.f32.mrf.mxu0
    %v4266 = vadd.f32 %v4194, %v4265
    %v4267 = vpop.f32.mrf.mxu0
    %4268 = vdwg.mxu0
    %v4269 = vrot.slane %v4122, 2
    %v4270 = vsel %vm2103, %v4269, 0
    %4272 = vmatprep.subr.mxu0 0.0
    %4273 = vmatpush1.msra.mxu0 0.0
    %4274 = vmatprep.subr.mxu0 0.0
    %4275 = vmatpush1.msra.mxu0 0.0
    %4276 = vmatprep.subr.mxu0 0.0
    %4277 = vmatpush1.msra.mxu0 0.0
    %4278 = vmatprep.subr.mxu0 0.0
    %4279 = vmatpush1.msra.mxu0 0.0
    %4280 = vmatprep.subr.mxu0 0.0
    %4281 = vmatpush1.msra.mxu0 0.0
    %4282 = vmatprep.subr.mxu0 0.0
    %4283 = vmatpush1.msra.mxu0 0.0
    %4284 = vmatprep.subr.mxu0 0.0
    %4285 = vmatpush1.msra.mxu0 %v2258
    %4286 = vmatprep.subr.mxu0 0.0
    %4287 = vmatpush1.msra.mxu0 %v2257
    %4288 = vmatprep.subr.mxu0 0.0
    %4289 = vmatpush1.msra.mxu0 %v2256
    %4290 = vmatprep.subr.mxu0 0.0
    %4291 = vmatpush1.msra.mxu0 %v2255
    %4292 = vmatprep.subr.mxu0 0.0
    %4293 = vmatpush1.msra.mxu0 %v2254
    %4294 = vmatprep.subr.mxu0 0.0
    %4295 = vmatpush1.msra.mxu0 %v2253
    %4296 = vmatprep.subr.mxu0 0.0
    %4297 = vmatpush1.msra.mxu0 %v2252
    %4298 = vmatprep.subr.mxu0 0.0
    %4299 = vmatpush1.msra.mxu0 %v2251
    %4300 = vmatprep.subr.mxu0 0.0
    %4301 = vmatpush1.msra.mxu0 %v2250
    %4302 = vmatprep.subr.mxu0 0.0
    %4303 = vmatpush1.msra.mxu0 %v2249
    %4304 = vmatprep.subr.mxu0 0.0
    %4305 = vmatpush2.msra.mxu0 0.0
    %4306 = vmatprep.subr.mxu0 0.0
    %4307 = vmatpush2.msra.mxu0 0.0
    %4308 = vmatprep.subr.mxu0 0.0
    %4309 = vmatpush2.msra.mxu0 0.0
    %4310 = vmatprep.subr.mxu0 0.0
    %4311 = vmatpush2.msra.mxu0 0.0
    %4312 = vmatprep.subr.mxu0 0.0
    %4313 = vmatpush2.msra.mxu0 0.0
    %4314 = vmatprep.subr.mxu0 0.0
    %4315 = vmatpush2.msra.mxu0 0.0
    %4316 = vmatprep.subr.mxu0 0.0
    %4317 = vmatpush2.msra.mxu0 0.0
    %4318 = vmatprep.subr.mxu0 0.0
    %4319 = vmatpush2.msra.mxu0 0.0
    %4320 = vmatprep.subr.mxu0 0.0
    %4321 = vmatpush2.msra.mxu0 0.0
    %4322 = vmatprep.subr.mxu0 0.0
    %4323 = vmatpush2.msra.mxu0 0.0
    %4324 = vmatprep.subr.mxu0 0.0
    %4325 = vmatpush2.msra.mxu0 0.0
    %4326 = vmatprep.subr.mxu0 0.0
    %4327 = vmatpush2.msra.mxu0 0.0
    %4328 = vmatprep.subr.mxu0 0.0
    %4329 = vmatpush2.msra.mxu0 0.0
    %4330 = vmatprep.subr.mxu0 0.0
    %4331 = vmatpush2.msra.mxu0 0.0
    %4332 = vmatprep.subr.mxu0 0.0
    %4333 = vmatpush2.msra.mxu0 0.0
    %4334 = vmatprep.subr.mxu0 0.0
    %4335 = vmatpush2.msra.mxu0 0.0
    %4336 = vmatprep.mubr.f32.mxu0 0.0
    %4337 = vmatmul.mubr.f32.gmra.mxu0 %v4270
    %v4338 = vpop.f32.mrf.mxu0
    %v4339 = vadd.f32 0.0, %v4338
    %v4340 = vpop.f32.mrf.mxu0
    %4341 = vdwg.mxu0
    %v4342 = vadd.f32 %v4266, %v4339
    %v4343 = vrot.slane %v4122, 3
    %v4344 = vsel %vm2103, %v4343, 0
    %4346 = vmatprep.subr.mxu0 0.0
    %4347 = vmatpush1.msra.mxu0 0.0
    %4348 = vmatprep.subr.mxu0 0.0
    %4349 = vmatpush1.msra.mxu0 0.0
    %4350 = vmatprep.subr.mxu0 0.0
    %4351 = vmatpush1.msra.mxu0 0.0
    %4352 = vmatprep.subr.mxu0 0.0
    %4353 = vmatpush1.msra.mxu0 0.0
    %4354 = vmatprep.subr.mxu0 0.0
    %4355 = vmatpush1.msra.mxu0 0.0
    %4356 = vmatprep.subr.mxu0 0.0
    %4357 = vmatpush1.msra.mxu0 0.0
    %4358 = vmatprep.subr.mxu0 0.0
    %4359 = vmatpush1.msra.mxu0 %v2343
    %4360 = vmatprep.subr.mxu0 0.0
    %4361 = vmatpush1.msra.mxu0 %v2342
    %4362 = vmatprep.subr.mxu0 0.0
    %4363 = vmatpush1.msra.mxu0 %v2341
    %4364 = vmatprep.subr.mxu0 0.0
    %4365 = vmatpush1.msra.mxu0 %v2340
    %4366 = vmatprep.subr.mxu0 0.0
    %4367 = vmatpush1.msra.mxu0 %v2339
    %4368 = vmatprep.subr.mxu0 0.0
    %4369 = vmatpush1.msra.mxu0 %v2338
    %4370 = vmatprep.subr.mxu0 0.0
    %4371 = vmatpush1.msra.mxu0 %v2337
    %4372 = vmatprep.subr.mxu0 0.0
    %4373 = vmatpush1.msra.mxu0 %v2336
    %4374 = vmatprep.subr.mxu0 0.0
    %4375 = vmatpush1.msra.mxu0 %v2335
    %4376 = vmatprep.subr.mxu0 0.0
    %4377 = vmatpush1.msra.mxu0 %v2334
    %4378 = vmatprep.subr.mxu0 0.0
    %4379 = vmatpush2.msra.mxu0 0.0
    %4380 = vmatprep.subr.mxu0 0.0
    %4381 = vmatpush2.msra.mxu0 0.0
    %4382 = vmatprep.subr.mxu0 0.0
    %4383 = vmatpush2.msra.mxu0 0.0
    %4384 = vmatprep.subr.mxu0 0.0
    %4385 = vmatpush2.msra.mxu0 0.0
    %4386 = vmatprep.subr.mxu0 0.0
    %4387 = vmatpush2.msra.mxu0 0.0
    %4388 = vmatprep.subr.mxu0 0.0
    %4389 = vmatpush2.msra.mxu0 0.0
    %4390 = vmatprep.subr.mxu0 0.0
    %4391 = vmatpush2.msra.mxu0 0.0
    %4392 = vmatprep.subr.mxu0 0.0
    %4393 = vmatpush2.msra.mxu0 0.0
    %4394 = vmatprep.subr.mxu0 0.0
    %4395 = vmatpush2.msra.mxu0 0.0
    %4396 = vmatprep.subr.mxu0 0.0
    %4397 = vmatpush2.msra.mxu0 0.0
    %4398 = vmatprep.subr.mxu0 0.0
    %4399 = vmatpush2.msra.mxu0 0.0
    %4400 = vmatprep.subr.mxu0 0.0
    %4401 = vmatpush2.msra.mxu0 0.0
    %4402 = vmatprep.subr.mxu0 0.0
    %4403 = vmatpush2.msra.mxu0 0.0
    %4404 = vmatprep.subr.mxu0 0.0
    %4405 = vmatpush2.msra.mxu0 0.0
    %4406 = vmatprep.subr.mxu0 0.0
    %4407 = vmatpush2.msra.mxu0 0.0
    %4408 = vmatprep.subr.mxu0 0.0
    %4409 = vmatpush2.msra.mxu0 0.0
    %4410 = vmatprep.mubr.f32.mxu0 0.0
    %4411 = vmatmul.mubr.f32.gmra.mxu0 %v4344
    %v4412 = vpop.f32.mrf.mxu0
    %v4413 = vadd.f32 0.0, %v4412
    %v4414 = vpop.f32.mrf.mxu0
    %4415 = vdwg.mxu0
    %v4416 = vadd.f32 %v4342, %v4413
    %v4417 = vrot.slane %v4122, 4
    %v4418 = vsel %vm2103, %v4417, 0
    %4420 = vmatprep.subr.mxu0 0.0
    %4421 = vmatpush1.msra.mxu0 0.0
    %4422 = vmatprep.subr.mxu0 0.0
    %4423 = vmatpush1.msra.mxu0 0.0
    %4424 = vmatprep.subr.mxu0 0.0
    %4425 = vmatpush1.msra.mxu0 0.0
    %4426 = vmatprep.subr.mxu0 0.0
    %4427 = vmatpush1.msra.mxu0 0.0
    %4428 = vmatprep.subr.mxu0 0.0
    %4429 = vmatpush1.msra.mxu0 0.0
    %4430 = vmatprep.subr.mxu0 0.0
    %4431 = vmatpush1.msra.mxu0 0.0
    %4432 = vmatprep.subr.mxu0 0.0
    %4433 = vmatpush1.msra.mxu0 %v2428
    %4434 = vmatprep.subr.mxu0 0.0
    %4435 = vmatpush1.msra.mxu0 %v2427
    %4436 = vmatprep.subr.mxu0 0.0
    %4437 = vmatpush1.msra.mxu0 %v2426
    %4438 = vmatprep.subr.mxu0 0.0
    %4439 = vmatpush1.msra.mxu0 %v2425
    %4440 = vmatprep.subr.mxu0 0.0
    %4441 = vmatpush1.msra.mxu0 %v2424
    %4442 = vmatprep.subr.mxu0 0.0
    %4443 = vmatpush1.msra.mxu0 %v2423
    %4444 = vmatprep.subr.mxu0 0.0
    %4445 = vmatpush1.msra.mxu0 %v2422
    %4446 = vmatprep.subr.mxu0 0.0
    %4447 = vmatpush1.msra.mxu0 %v2421
    %4448 = vmatprep.subr.mxu0 0.0
    %4449 = vmatpush1.msra.mxu0 %v2420
    %4450 = vmatprep.subr.mxu0 0.0
    %4451 = vmatpush1.msra.mxu0 %v2419
    %4452 = vmatprep.subr.mxu0 0.0
    %4453 = vmatpush2.msra.mxu0 0.0
    %4454 = vmatprep.subr.mxu0 0.0
    %4455 = vmatpush2.msra.mxu0 0.0
    %4456 = vmatprep.subr.mxu0 0.0
    %4457 = vmatpush2.msra.mxu0 0.0
    %4458 = vmatprep.subr.mxu0 0.0
    %4459 = vmatpush2.msra.mxu0 0.0
    %4460 = vmatprep.subr.mxu0 0.0
    %4461 = vmatpush2.msra.mxu0 0.0
    %4462 = vmatprep.subr.mxu0 0.0
    %4463 = vmatpush2.msra.mxu0 0.0
    %4464 = vmatprep.subr.mxu0 0.0
    %4465 = vmatpush2.msra.mxu0 0.0
    %4466 = vmatprep.subr.mxu0 0.0
    %4467 = vmatpush2.msra.mxu0 0.0
    %4468 = vmatprep.subr.mxu0 0.0
    %4469 = vmatpush2.msra.mxu0 0.0
    %4470 = vmatprep.subr.mxu0 0.0
    %4471 = vmatpush2.msra.mxu0 0.0
    %4472 = vmatprep.subr.mxu0 0.0
    %4473 = vmatpush2.msra.mxu0 0.0
    %4474 = vmatprep.subr.mxu0 0.0
    %4475 = vmatpush2.msra.mxu0 0.0
    %4476 = vmatprep.subr.mxu0 0.0
    %4477 = vmatpush2.msra.mxu0 0.0
    %4478 = vmatprep.subr.mxu0 0.0
    %4479 = vmatpush2.msra.mxu0 0.0
    %4480 = vmatprep.subr.mxu0 0.0
    %4481 = vmatpush2.msra.mxu0 0.0
    %4482 = vmatprep.subr.mxu0 0.0
    %4483 = vmatpush2.msra.mxu0 0.0
    %4484 = vmatprep.mubr.f32.mxu0 0.0
    %4485 = vmatmul.mubr.f32.gmra.mxu0 %v4418
    %v4486 = vpop.f32.mrf.mxu0
    %v4487 = vadd.f32 0.0, %v4486
    %v4488 = vpop.f32.mrf.mxu0
    %4489 = vdwg.mxu0
    %v4490 = vadd.f32 %v4416, %v4487
    %v4491 = vadd.f32 %v4490, %v2503
    %v4492 = vmax.f32 %v4491, 0.0
    %v4494 = vrot.slane %v4492, 7
    %vm4496 = vcmask 1040384
    %v4497 = vsel %vm4496, %v2505, %v4494
    %v4498 = vld [vmem:[%s11] sm:$0xff]
    %v4499 = vld [vmem:[%s11 + $0x8] sm:$0xff]
    %v4500 = vld [vmem:[%s11 + $0x10] sm:$0xff]
    %v4501 = vld [vmem:[%s11 + $0x18] sm:$0xff]
    %v4502 = vld [vmem:[%s11 + $0x20] sm:$0xff]
    %v4503 = vld [vmem:[%s11 + $0x28] sm:$0xff]
    %v4504 = vld [vmem:[%s11 + $0x30] sm:$0xff]
    %v4505 = vld [vmem:[%s11 + $0x38] sm:$0xff]
    %v4506 = vld [vmem:[%s11 + $0x40] sm:$0xff]
    %v4507 = vld [vmem:[%s11 + $0x48] sm:$0xff]
    %v4508 = vld [vmem:[%s11 + $0x50] sm:$0xff]
    %v4509 = vld [vmem:[%s11 + $0x58] sm:$0xff]
    %v4510 = vld [vmem:[%s11 + $0x60] sm:$0xff]
    %v4511 = vld [vmem:[%s11 + $0x68] sm:$0xff]
    %v4512 = vld [vmem:[%s11 + $0x70] sm:$0xff]
    %v4513 = vld [vmem:[%s12] sm:$0x1]
    %v4515 = vlaneseq
    %v4516 = vshrl.u32 %v4515, 7
    %v4517 = vsub.s32 0, %v4516
    %v4518 = vrot.slane %v4513, %v4517
    %vm4520 = vcmask 982016
    %v4522 = vsel %vm4520, %v4497, 0
    %4524 = vmatprep.subr.mxu0 0.0
    %4525 = vmatpush1.msra.mxu0 0.0
    %4526 = vmatprep.subr.mxu0 0.0
    %4527 = vmatpush1.msra.mxu0 %v4512
    %4528 = vmatprep.subr.mxu0 0.0
    %4529 = vmatpush1.msra.mxu0 %v4511
    %4530 = vmatprep.subr.mxu0 0.0
    %4531 = vmatpush1.msra.mxu0 %v4510
    %4532 = vmatprep.subr.mxu0 0.0
    %4533 = vmatpush1.msra.mxu0 %v4509
    %4534 = vmatprep.subr.mxu0 0.0
    %4535 = vmatpush1.msra.mxu0 %v4508
    %4536 = vmatprep.subr.mxu0 0.0
    %4537 = vmatpush1.msra.mxu0 %v4507
    %4538 = vmatprep.subr.mxu0 0.0
    %4539 = vmatpush1.msra.mxu0 %v4506
    %4540 = vmatprep.subr.mxu0 0.0
    %4541 = vmatpush1.msra.mxu0 %v4505
    %4542 = vmatprep.subr.mxu0 0.0
    %4543 = vmatpush1.msra.mxu0 %v4504
    %4544 = vmatprep.subr.mxu0 0.0
    %4545 = vmatpush1.msra.mxu0 %v4503
    %4546 = vmatprep.subr.mxu0 0.0
    %4547 = vmatpush1.msra.mxu0 %v4502
    %4548 = vmatprep.subr.mxu0 0.0
    %4549 = vmatpush1.msra.mxu0 %v4501
    %4550 = vmatprep.subr.mxu0 0.0
    %4551 = vmatpush1.msra.mxu0 %v4500
    %4552 = vmatprep.subr.mxu0 0.0
    %4553 = vmatpush1.msra.mxu0 %v4499
    %4554 = vmatprep.subr.mxu0 0.0
    %4555 = vmatpush1.msra.mxu0 %v4498
    %4556 = vmatprep.subr.mxu0 0.0
    %4557 = vmatpush2.msra.mxu0 0.0
    %4558 = vmatprep.subr.mxu0 0.0
    %4559 = vmatpush2.msra.mxu0 0.0
    %4560 = vmatprep.subr.mxu0 0.0
    %4561 = vmatpush2.msra.mxu0 0.0
    %4562 = vmatprep.subr.mxu0 0.0
    %4563 = vmatpush2.msra.mxu0 0.0
    %4564 = vmatprep.subr.mxu0 0.0
    %4565 = vmatpush2.msra.mxu0 0.0
    %4566 = vmatprep.subr.mxu0 0.0
    %4567 = vmatpush2.msra.mxu0 0.0
    %4568 = vmatprep.subr.mxu0 0.0
    %4569 = vmatpush2.msra.mxu0 0.0
    %4570 = vmatprep.subr.mxu0 0.0
    %4571 = vmatpush2.msra.mxu0 0.0
    %4572 = vmatprep.subr.mxu0 0.0
    %4573 = vmatpush2.msra.mxu0 0.0
    %4574 = vmatprep.subr.mxu0 0.0
    %4575 = vmatpush2.msra.mxu0 0.0
    %4576 = vmatprep.subr.mxu0 0.0
    %4577 = vmatpush2.msra.mxu0 0.0
    %4578 = vmatprep.subr.mxu0 0.0
    %4579 = vmatpush2.msra.mxu0 0.0
    %4580 = vmatprep.subr.mxu0 0.0
    %4581 = vmatpush2.msra.mxu0 0.0
    %4582 = vmatprep.subr.mxu0 0.0
    %4583 = vmatpush2.msra.mxu0 0.0
    %4584 = vmatprep.subr.mxu0 0.0
    %4585 = vmatpush2.msra.mxu0 0.0
    %4586 = vmatprep.subr.mxu0 0.0
    %4587 = vmatpush2.msra.mxu0 0.0
    %4588 = vmatprep.mubr.f32.mxu0 0.0
    %4589 = vmatmul.mubr.f32.gmra.mxu0 %v4522
    %v4590 = vpop.f32.mrf.mxu0
    %v4591 = vadd.f32 %v4518, %v4590
    %v4592 = vpop.f32.mrf.mxu0
    %4593 = vdwg.mxu0
    %v4594 = vmax.f32 %v4591, 0.0
    %v4595 = vld [vmem:[%s13] sm:$0xff]
    %v4596 = vld [vmem:[%s13 + $0x8] sm:$0xff]
    %v4597 = vld [vmem:[%s13 + $0x10] sm:$0xff]
    %v4598 = vld [vmem:[%s13 + $0x18] sm:$0xff]
    %v4599 = vld [vmem:[%s13 + $0x20] sm:$0xff]
    %v4600 = vld [vmem:[%s13 + $0x28] sm:$0xff]
    %v4601 = vld [vmem:[%s13 + $0x30] sm:$0xff]
    %v4602 = vld [vmem:[%s13 + $0x38] sm:$0xff]
    %v4603 = vld [vmem:[%s13 + $0x40] sm:$0xff]
    %v4604 = vld [vmem:[%s13 + $0x48] sm:$0xff]
    %v4605 = vld [vmem:[%s13 + $0x50] sm:$0xf]
    %v4606 = vld [vmem:[%s14] sm:$0x1]
    %v4608 = vlaneseq
    %v4609 = vshrl.u32 %v4608, 7
    %v4610 = vsub.s32 0, %v4609
    %v4611 = vrot.slane %v4606, %v4610
    %v4614 = vsel %vm1187, %v4594, 0
    %v4617 = vsel %vm612, %v4605, 0
    %4619 = vmatprep.subr.mxu0 0.0
    %4620 = vmatpush1.msra.mxu0 0.0
    %4621 = vmatprep.subr.mxu0 0.0
    %4622 = vmatpush1.msra.mxu0 0.0
    %4623 = vmatprep.subr.mxu0 0.0
    %4624 = vmatpush1.msra.mxu0 0.0
    %4625 = vmatprep.subr.mxu0 0.0
    %4626 = vmatpush1.msra.mxu0 0.0
    %4627 = vmatprep.subr.mxu0 0.0
    %4628 = vmatpush1.msra.mxu0 0.0
    %4629 = vmatprep.subr.mxu0 0.0
    %4630 = vmatpush1.msra.mxu0 %v4617
    %4631 = vmatprep.subr.mxu0 0.0
    %4632 = vmatpush1.msra.mxu0 %v4604
    %4633 = vmatprep.subr.mxu0 0.0
    %4634 = vmatpush1.msra.mxu0 %v4603
    %4635 = vmatprep.subr.mxu0 0.0
    %4636 = vmatpush1.msra.mxu0 %v4602
    %4637 = vmatprep.subr.mxu0 0.0
    %4638 = vmatpush1.msra.mxu0 %v4601
    %4639 = vmatprep.subr.mxu0 0.0
    %4640 = vmatpush1.msra.mxu0 %v4600
    %4641 = vmatprep.subr.mxu0 0.0
    %4642 = vmatpush1.msra.mxu0 %v4599
    %4643 = vmatprep.subr.mxu0 0.0
    %4644 = vmatpush1.msra.mxu0 %v4598
    %4645 = vmatprep.subr.mxu0 0.0
    %4646 = vmatpush1.msra.mxu0 %v4597
    %4647 = vmatprep.subr.mxu0 0.0
    %4648 = vmatpush1.msra.mxu0 %v4596
    %4649 = vmatprep.subr.mxu0 0.0
    %4650 = vmatpush1.msra.mxu0 %v4595
    %4651 = vmatprep.subr.mxu0 0.0
    %4652 = vmatpush2.msra.mxu0 0.0
    %4653 = vmatprep.subr.mxu0 0.0
    %4654 = vmatpush2.msra.mxu0 0.0
    %4655 = vmatprep.subr.mxu0 0.0
    %4656 = vmatpush2.msra.mxu0 0.0
    %4657 = vmatprep.subr.mxu0 0.0
    %4658 = vmatpush2.msra.mxu0 0.0
    %4659 = vmatprep.subr.mxu0 0.0
    %4660 = vmatpush2.msra.mxu0 0.0
    %4661 = vmatprep.subr.mxu0 0.0
    %4662 = vmatpush2.msra.mxu0 0.0
    %4663 = vmatprep.subr.mxu0 0.0
    %4664 = vmatpush2.msra.mxu0 0.0
    %4665 = vmatprep.subr.mxu0 0.0
    %4666 = vmatpush2.msra.mxu0 0.0
    %4667 = vmatprep.subr.mxu0 0.0
    %4668 = vmatpush2.msra.mxu0 0.0
    %4669 = vmatprep.subr.mxu0 0.0
    %4670 = vmatpush2.msra.mxu0 0.0
    %4671 = vmatprep.subr.mxu0 0.0
    %4672 = vmatpush2.msra.mxu0 0.0
    %4673 = vmatprep.subr.mxu0 0.0
    %4674 = vmatpush2.msra.mxu0 0.0
    %4675 = vmatprep.subr.mxu0 0.0
    %4676 = vmatpush2.msra.mxu0 0.0
    %4677 = vmatprep.subr.mxu0 0.0
    %4678 = vmatpush2.msra.mxu0 0.0
    %4679 = vmatprep.subr.mxu0 0.0
    %4680 = vmatpush2.msra.mxu0 0.0
    %4681 = vmatprep.subr.mxu0 0.0
    %4682 = vmatpush2.msra.mxu0 0.0
    %4683 = vmatprep.mubr.f32.mxu0 0.0
    %4684 = vmatmul.mubr.f32.gmra.mxu0 %v4614
    %v4685 = vpop.f32.mrf.mxu0
    %v4686 = vadd.f32 %v4611, %v4685
    %v4687 = vpop.f32.mrf.mxu0
    %4688 = vdwg.mxu0
    %4689 = vst [vmem:[#allocation2] sm:$0x3] %v4686
    // Predicated region
    $region62: #{lenetq_forward.1} parent=1 // pred_check
      _
    $region63: #{lenetq_forward.1} parent=1 // pred_check_branch
      %4691 = sbr.rel (0) target = $region65
    $region64: #{lenetq_forward.1} parent=1 // pred_region
      %s4693 = ssub.s32 32, 32
      %4694 = vsyncadd [#allocation3], %s4693
      %s4696 = sshll.u32 [#allocation2], 4
      %s4697 = int_to_ptr.vmem [resolvable:$true] %s4696
      %4699 = dma.vmem_to_hbm [thread:$0]  %s4697, 32, %s15, [#allocation3]
    $region65: #{lenetq_forward.1} parent=1 // pred_fallthru
      _
    // Predicated region
    $region66: #{lenetq_forward.1} parent=1 // pred_check
      _
    $region67: #{lenetq_forward.1} parent=1 // pred_check_branch
      %4701 = sbr.rel (0) target = $region69
    $region68: #{lenetq_forward.1} parent=1 // pred_region
      %4702 = dma.done [#allocation3], 32
    $region69: #{lenetq_forward.1} parent=1 // pred_fallthru
      _
    %4703 = vsyncpa [#allocation3], 1

</llo_original>
